<compile_context>
chip_gen: v5e
topology: v5e:2x2
jax: 0.10.0
libtpu: 0.0.40
codegen_flags: <defaults>
</compile_context>

<pallas_src>
from functools import partial

import numpy as np
import jax
import jax.numpy as jnp
from jax.experimental import pallas as pl
from jax.experimental.pallas import tpu as pltpu

EPS_BN = 1e-5        # nn.BatchNorm default eps
EPS_NORM = 1e-12     # F.normalize default eps
LANE = 128           # pad feature dims to multiples of the TPU lane width


def _vmem_limit_bytes():
    # Generation-aware scoped-VMEM budget (v5e/v6e: 128 MiB, v7x: 64 MiB).
    try:
        return int(pltpu.get_tpu_info().vmem_capacity_bytes * 0.75)
    except Exception:
        return 48 * 1024 * 1024


VMEM_LIMIT = _vmem_limit_bytes()


def _round_up(n, m=LANE):
    return ((n + m - 1) // m) * m


def _pad_to(a, shape):
    pads = [(0, t - s) for s, t in zip(a.shape, shape)]
    return jnp.pad(a, pads) if any(p for _, p in pads) else a


# ----------------------------------------------------------------------------
# Encoder kernel: conv3x3 (single im2col MXU matmul per tile) + BatchNorm2d
# (batch stats, two-phase streaming) + ReLU + global average pool.
# Grid = (phase, batch, row-tile); one sample per batch step (tb = 1).
# ----------------------------------------------------------------------------
def _encoder_kernel(x_ref, w_ref, out_ref, xp_ref, pat_ref, sum_ref, sq_ref, *,
                    H, W, Cin, th, inv_count, inv_hw):
    """x_ref  : (1, H, W, Cin)      bf16  one image (NHWC)
       w_ref  : (9*Cin, Cout_pad)   bf16  conv3x3 weight, rows ordered (tap, ci)
       out_ref: (B, Cout_pad)       f32   pooled features (whole-array resident)
       xp_ref : (H+2, W+2, Cin)     bf16  zero-halo image scratch
       pat_ref: (th, W, 9*Cin)      bf16  im2col patch slab scratch
       sum/sq : (1, Cout_pad)       f32   BN batch-stat accumulators"""
    p = pl.program_id(0)        # 0: accumulate BN stats, 1: normalize + GAP
    b = pl.program_id(1)        # sample index
    s = pl.program_id(2)        # spatial row-tile index

    # One-time init: zero the halo scratch + BN accumulators.
    @pl.when((p == 0) & (b == 0) & (s == 0))
    def _():
        xp_ref[...] = jnp.zeros_like(xp_ref)
        sum_ref[...] = jnp.zeros_like(sum_ref)
        sq_ref[...] = jnp.zeros_like(sq_ref)

    # New image for this (phase, sample): refresh the padded-image interior
    # (halo cells are never overwritten so they stay zero — no HBM pad pass).
    @pl.when(s == 0)
    def _():
        xp_ref[1:H + 1, 1:W + 1, :] = x_ref[0]

    # conv3x3 tile as a single im2col MXU matmul with K = 9*Cin.
    row0 = s * th
    for kh in range(3):
        for kw in range(3):
            t = kh * 3 + kw
            pat_ref[:, :, t * Cin:(t + 1) * Cin] = (
                xp_ref[pl.ds(row0 + kh, th), kw:kw + W, :])
    patches = pat_ref[...].reshape(th * W, 9 * Cin)               # (M, K)
    conv = jnp.dot(patches, w_ref[...],
                   preferred_element_type=jnp.float32)            # (M, Cout)

    # Phase 0: stream per-channel BN sums (single pass over all tiles).
    @pl.when(p == 0)
    def _():
        sum_ref[...] += jnp.sum(conv, axis=0, keepdims=True)
        sq_ref[...] += jnp.sum(conv * conv, axis=0, keepdims=True)

    # Phase 1: BN with finalized batch stats + ReLU + incremental GAP.
    @pl.when(p == 1)
    def _():
        mean = sum_ref[...] * inv_count
        var = jnp.maximum(sq_ref[...] * inv_count - mean * mean, 0.0)
        hact = jnp.maximum((conv - mean) * jax.lax.rsqrt(var + EPS_BN), 0.0)
        part = jnp.sum(hact, axis=0, keepdims=True) * inv_hw      # (1, Cout)

        @pl.when(s == 0)
        def _():
            out_ref[pl.ds(b, 1), :] = part

        @pl.when(s != 0)
        def _():
            out_ref[pl.ds(b, 1), :] += part


def encoder_forward(x_nchw, w_enc, *, th):
    """Encoder on one SimCLR view.  BN stats are per view (per call), matching
    separate encoder(x1)/encoder(x2) calls in the reference module."""
    B, Cin, H, W = x_nchw.shape
    K9, Cout_pad = w_enc.shape
    assert K9 == 9 * Cin and H % th == 0
    ns = H // th

    # Single fused glue pass: NCHW f32 -> NHWC bf16 (halves the kernel DMA).
    # TODO(synk): an in-kernel NCHW->im2col relayout would remove this last
    # host HBM pass; kept in glue to stay on proven Mosaic lowering paths.
    xh = jnp.transpose(x_nchw, (0, 2, 3, 1)).astype(jnp.bfloat16)

    kernel = partial(_encoder_kernel, H=H, W=W, Cin=Cin, th=th,
                     inv_count=1.0 / (B * H * W), inv_hw=1.0 / (H * W))
    return pl.pallas_call(
        kernel,
        out_shape=jax.ShapeDtypeStruct((B, Cout_pad), jnp.float32),
        grid=(2, B, ns),
        in_specs=[
            pl.BlockSpec((1, H, W, Cin), lambda p, b, s: (b, 0, 0, 0)),
            # constant block index -> conv weight stays VMEM-resident
            pl.BlockSpec((K9, Cout_pad), lambda p, b, s: (0, 0)),
        ],
        # Whole (small) feature matrix stays resident; written once at the end.
        out_specs=pl.BlockSpec((B, Cout_pad), lambda p, b, s: (0, 0)),
        scratch_shapes=[
            pltpu.VMEM((H + 2, W + 2, Cin), jnp.bfloat16),   # halo image
            pltpu.VMEM((th, W, 9 * Cin), jnp.bfloat16),      # im2col slab
            pltpu.VMEM((1, Cout_pad), jnp.float32),          # BN sum
            pltpu.VMEM((1, Cout_pad), jnp.float32),          # BN sum of squares
        ],
        compiler_params=pltpu.CompilerParams(
            # Grid is sequential: the BN-stat scratch is carried across steps.
            dimension_semantics=("arbitrary", "arbitrary", "arbitrary"),
            vmem_limit_bytes=VMEM_LIMIT),
    )(xh, w_enc)


# ----------------------------------------------------------------------------
# Fused projector (Linear->BN->ReLU x2 -> Linear -> BN) + L2-normalize +
# similarity-matrix kernel.  bf16 MXU operands, f32 accumulation/BN.
# ----------------------------------------------------------------------------
def _proj_norm_sim_kernel(f_ref, w1_ref, w2_ref, w3_ref, sim_ref):
    def bn(h):  # BatchNorm1d, batch statistics, clamped single-pass variance
        mean = jnp.mean(h, axis=0, keepdims=True)
        var = jnp.maximum(jnp.mean(h * h, axis=0, keepdims=True) - mean * mean,
                          0.0)
        return (h - mean) * jax.lax.rsqrt(var + EPS_BN)

    x = f_ref[...].astype(jnp.bfloat16)
    h = jnp.maximum(bn(jnp.dot(x, w1_ref[...],
                               preferred_element_type=jnp.float32)), 0.0)
    h = jnp.maximum(bn(jnp.dot(h.astype(jnp.bfloat16), w2_ref[...],
                               preferred_element_type=jnp.float32)), 0.0)
    z = bn(jnp.dot(h.astype(jnp.bfloat16), w3_ref[...],
                   preferred_element_type=jnp.float32))

    # F.normalize(dim=1): z / max(||z||, eps) == z * rsqrt(max(||z||^2, eps^2))
    sumsq = jnp.sum(z * z, axis=1, keepdims=True)
    zn = (z * jax.lax.rsqrt(jnp.maximum(sumsq, EPS_NORM * EPS_NORM))
          ).astype(jnp.bfloat16)

    # zn @ zn.T without materializing a transpose: contract feature axes.
    sim_ref[...] = jax.lax.dot_general(
        zn, zn, dimension_numbers=(((1,), (1,)), ((), ())),
        preferred_element_type=jnp.float32)


def projector_norm_sim(feats, w1, w2, w3):
    # TODO(synk): for enc_dim >= 1024 stream w1/w2/w3 column slabs via a grid
    # (BN1d is per-feature, so column tiling is exact) to fit v7x VMEM.
    N = feats.shape[0]
    return pl.pallas_call(
        _proj_norm_sim_kernel,
        out_shape=jax.ShapeDtypeStruct((N, N), jnp.float32),
        in_specs=[pl.BlockSpec(memory_space=pltpu.MemorySpace.VMEM)] * 4,
        out_specs=pl.BlockSpec(memory_space=pltpu.MemorySpace.VMEM),
        compiler_params=pltpu.CompilerParams(vmem_limit_bytes=VMEM_LIMIT),
    )(feats, w1, w2, w3)


# ----------------------------------------------------------------------------
# NT-Xent logit extraction (matches the torch masked-select ordering).
# ----------------------------------------------------------------------------
def contrastive_logits(sim, bs, temperature):
    N = 2 * bs
    ar = np.arange(N)
    pos = (ar + bs) % N                                  # positive column per row
    cols = np.broadcast_to(ar, (N, N))
    keep = (cols != ar[:, None]) & (cols != pos[:, None])
    neg_idx = cols[keep].reshape(N, N - 2)               # negatives, column order
    idx = jnp.asarray(np.concatenate([pos[:, None], neg_idx], axis=1))
    # TODO(synk): row-wise gather kept in XLA glue (indices are trace-time
    # constants); an in-kernel roll/mask extraction only matters at large 2*bs.
    logits = jnp.take_along_axis(sim, idx, axis=1) / temperature
    labels = jnp.zeros((N,), dtype=jnp.int32)
    return logits, labels


# ----------------------------------------------------------------------------
# SimCLR.forward(x1, x2)
# ----------------------------------------------------------------------------
def simclr_forward(params, x1, x2, *, temperature=0.5, return_feats=False, th=8):
    B, Cin, H, W = x1.shape
    enc_dim = params["proj_w1"].shape[0]
    proj_dim = params["proj_w3"].shape[1]
    d_pad = _round_up(enc_dim)
    p_pad = _round_up(proj_dim)
    th = th if H % th == 0 else H

    # Zero-pad feature/lane dims to multiples of 128 -> full MXU tiles and
    # lane-dense stores; padded channels stay exactly zero through
    # conv/BN/ReLU/GAP/projector/normalize, so logits are unchanged.
    w_enc = _pad_to(params["enc_w"].reshape(9 * Cin, enc_dim),
                    (9 * Cin, d_pad)).astype(jnp.bfloat16)
    w1 = _pad_to(params["proj_w1"], (d_pad, d_pad)).astype(jnp.bfloat16)
    w2 = _pad_to(params["proj_w2"], (d_pad, d_pad)).astype(jnp.bfloat16)
    w3 = _pad_to(params["proj_w3"], (d_pad, p_pad)).astype(jnp.bfloat16)

    f1 = encoder_forward(x1, w_enc, th=th)               # (B, d_pad) f32
    f2 = encoder_forward(x2, w_enc, th=th)
    feats = jnp.concatenate([f1, f2], axis=0)            # == cat([f1, f2], dim=0)
    sim = projector_norm_sim(feats, w1, w2, w3)          # (2B, 2B)
    logits, labels = contrastive_logits(sim, B, temperature)
    if return_feats:
        return (logits, labels), (f1[:, :enc_dim], f2[:, :enc_dim])
    return logits, labels


def init_params(key, cin, enc_dim, proj_dim):
    k0, k1, k2, k3 = jax.random.split(key, 4)

    def lin(k, fi, fo):
        return jax.random.normal(k, (fi, fo), jnp.float32) / np.sqrt(fi)

    return {
        # conv3x3 weight stored tap-major: (9, Cin, Cout)
        "enc_w": jax.random.normal(k0, (9, cin, enc_dim), jnp.float32)
                 / np.sqrt(9 * cin),
        "proj_w1": lin(k1, enc_dim, enc_dim),
        "proj_w2": lin(k2, enc_dim, enc_dim),
        "proj_w3": lin(k3, enc_dim, proj_dim),
    }


# ----------------------------------------------------------------------------
# Pure-JAX reference (same dtypes / op structure) for a numerical sanity check.
# ----------------------------------------------------------------------------
def reference_forward(params, x1, x2, temperature):
    def bn(h, axes):
        mean = jnp.mean(h, axis=axes, keepdims=True)
        var = jnp.maximum(jnp.mean(h * h, axis=axes, keepdims=True) - mean * mean,
                          0.0)
        return (h - mean) * jax.lax.rsqrt(var + EPS_BN)

    def enc(x):
        B, Cin, H, W = x.shape
        xh = jnp.transpose(x, (0, 2, 3, 1)).astype(jnp.bfloat16)
        xp = jnp.pad(xh, ((0, 0), (1, 1), (1, 1), (0, 0)))
        taps = [xp[:, kh:kh + H, kw:kw + W, :]
                for kh in range(3) for kw in range(3)]
        pat = jnp.concatenate(taps, axis=-1).reshape(B, H * W, 9 * Cin)
        w = params["enc_w"].reshape(9 * Cin, -1).astype(jnp.bfloat16)
        conv = jax.lax.dot_general(pat, w, (((2,), (0,)), ((), ())),
                                   preferred_element_type=jnp.float32)
        h = jnp.maximum(bn(conv, (0, 1)), 0.0)
        return jnp.mean(h, axis=1)

    feats = jnp.concatenate([enc(x1), enc(x2)], axis=0)
    w1 = params["proj_w1"].astype(jnp.bfloat16)
    w2 = params["proj_w2"].astype(jnp.bfloat16)
    w3 = params["proj_w3"].astype(jnp.bfloat16)
    h = jnp.maximum(bn(jnp.dot(feats.astype(jnp.bfloat16), w1,
                               preferred_element_type=jnp.float32), 0), 0.0)
    h = jnp.maximum(bn(jnp.dot(h.astype(jnp.bfloat16), w2,
                               preferred_element_type=jnp.float32), 0), 0.0)
    z = bn(jnp.dot(h.astype(jnp.bfloat16), w3,
                   preferred_element_type=jnp.float32), 0)
    zn = (z * jax.lax.rsqrt(
        jnp.maximum(jnp.sum(z * z, axis=1, keepdims=True),
                    EPS_NORM * EPS_NORM))).astype(jnp.bfloat16)
    sim = jax.lax.dot_general(zn, zn, (((1,), (1,)), ((), ())),
                              preferred_element_type=jnp.float32)
    return contrastive_logits(sim, x1.shape[0], temperature)


if __name__ == "__main__":
    B, CIN, H, W = 2, 4, 16, 16
    ENC_DIM, PROJ_DIM = 32, 16
    TEMPERATURE = 0.5

    key = jax.random.PRNGKey(0)
    kp, k1, k2 = jax.random.split(key, 3)
    params = init_params(kp, CIN, ENC_DIM, PROJ_DIM)
    x1 = jax.random.normal(k1, (B, CIN, H, W), jnp.float32)
    x2 = jax.random.normal(k2, (B, CIN, H, W), jnp.float32)

    fwd = jax.jit(partial(simclr_forward, temperature=TEMPERATURE,
                          return_feats=True))
    (logits, labels), (f1, f2) = fwd(params, x1, x2)
    jax.block_until_ready((logits, labels, f1, f2))

    N = 2 * B
    assert logits.shape == (N, N - 1), logits.shape
    assert labels.shape == (N,), labels.shape
    assert f1.shape == (B, ENC_DIM) and f2.shape == (B, ENC_DIM)
    assert bool(jnp.all(jnp.isfinite(logits)))

    logits_ref, _ = reference_forward(params, x1, x2, TEMPERATURE)
    max_err = float(jnp.max(jnp.abs(logits - logits_ref)))
    assert bool(jnp.allclose(logits, logits_ref, atol=5e-2, rtol=5e-2)), max_err

    print("KERNEL_OK")
</pallas_src>

<mosaic_0001>
module attributes {stable_mosaic.version = 11 : i64} {
  func.func @_encoder_kernel(%arg0: i32, %arg1: i32, %arg2: i32, %arg3: memref<1x16x16x4xbf16, #tpu.memory_space<vmem>>, %arg4: memref<36x128xbf16, #tpu.memory_space<vmem>>, %arg5: memref<2x128xf32, #tpu.memory_space<vmem>>, %arg6: memref<18x18x4xbf16, #tpu.memory_space<vmem>>, %arg7: memref<8x16x36xbf16, #tpu.memory_space<vmem>>, %arg8: memref<1x128xf32, #tpu.memory_space<vmem>>, %arg9: memref<1x128xf32, #tpu.memory_space<vmem>>) attributes {dimension_semantics = [#tpu.dimension_semantics<arbitrary>, #tpu.dimension_semantics<arbitrary>, #tpu.dimension_semantics<arbitrary>], iteration_bounds = array<i64: 2, 2, 2>, scalar_prefetch = 0 : i64, scratch_operands = 4 : i64, tpu.core_type = #tpu.core_type<tc>, window_params = [{transform_indices = @transform_0, window_bounds = array<i64: 1, 16, 16, 4>}, {pipeline_mode = #tpu.pipeline_mode<synchronous>, transform_indices = @transform_1, window_bounds = array<i64: 36, 128>}, {pipeline_mode = #tpu.pipeline_mode<synchronous>, transform_indices = @transform_2, window_bounds = array<i64: 2, 128>}]} {
    %c0_i32 = arith.constant 0 : i32
    %0 = arith.cmpi eq, %arg0, %c0_i32 : i32
    %c0_i32_0 = arith.constant 0 : i32
    %1 = arith.cmpi eq, %arg1, %c0_i32_0 : i32
    %2 = arith.andi %0, %1 : i1
    %c0_i32_1 = arith.constant 0 : i32
    %3 = arith.cmpi eq, %arg2, %c0_i32_1 : i32
    %4 = arith.andi %2, %3 : i1
    %5 = arith.extui %4 : i1 to i32
    %c0_i32_2 = arith.constant 0 : i32
    %6 = arith.cmpi ne, %5, %c0_i32_2 : i32
    scf.if %6 {
      %cst_55 = arith.constant 0.000000e+00 : bf16
      %57 = vector.broadcast %cst_55 : bf16 to vector<18x18x4xbf16>
      %c0_56 = arith.constant 0 : index
      %c0_57 = arith.constant 0 : index
      %c0_58 = arith.constant 0 : index
      %58 = vector.load %arg6[%c0_56, %c0_57, %c0_58] : memref<18x18x4xbf16, #tpu.memory_space<vmem>>, vector<18x18x4xbf16>
      tpu.vector_store %arg6[%c0_56, %c0_57, %c0_58], %57 {strides = array<i32>} : memref<18x18x4xbf16, #tpu.memory_space<vmem>>, vector<18x18x4xbf16>,
      %cst_59 = arith.constant 0.000000e+00 : f32
      %59 = vector.broadcast %cst_59 : f32 to vector<1x128xf32>
      %c0_60 = arith.constant 0 : index
      %c0_61 = arith.constant 0 : index
      %60 = vector.load %arg8[%c0_60, %c0_61] : memref<1x128xf32, #tpu.memory_space<vmem>>, vector<1x128xf32>
      tpu.vector_store %arg8[%c0_60, %c0_61], %59 {strides = array<i32>} : memref<1x128xf32, #tpu.memory_space<vmem>>, vector<1x128xf32>,
      %cst_62 = arith.constant 0.000000e+00 : f32
      %61 = vector.broadcast %cst_62 : f32 to vector<1x128xf32>
      %c0_63 = arith.constant 0 : index
      %c0_64 = arith.constant 0 : index
      %62 = vector.load %arg9[%c0_63, %c0_64] : memref<1x128xf32, #tpu.memory_space<vmem>>, vector<1x128xf32>
      tpu.vector_store %arg9[%c0_63, %c0_64], %61 {strides = array<i32>} : memref<1x128xf32, #tpu.memory_space<vmem>>, vector<1x128xf32>,
    } else {
    }
    %c0_i32_3 = arith.constant 0 : i32
    %7 = arith.cmpi eq, %arg2, %c0_i32_3 : i32
    %8 = arith.extui %7 : i1 to i32
    %c0_i32_4 = arith.constant 0 : i32
    %9 = arith.cmpi ne, %8, %c0_i32_4 : i32
    scf.if %9 {
      %c0_55 = arith.constant 0 : index
      %c0_56 = arith.constant 0 : index
      %c0_57 = arith.constant 0 : index
      %c0_58 = arith.constant 0 : index
      %57 = vector.load %arg3[%c0_55, %c0_56, %c0_57, %c0_58] : memref<1x16x16x4xbf16, #tpu.memory_space<vmem>>, vector<1x16x16x4xbf16>
      %58 = vector.shape_cast %57 : vector<1x16x16x4xbf16> to vector<16x16x4xbf16>
      %c1_59 = arith.constant 1 : index
      %c1_60 = arith.constant 1 : index
      %c0_61 = arith.constant 0 : index
      %59 = vector.load %arg6[%c1_59, %c1_60, %c0_61] : memref<18x18x4xbf16, #tpu.memory_space<vmem>>, vector<16x16x4xbf16>
      tpu.vector_store %arg6[%c1_59, %c1_60, %c0_61], %58 {strides = array<i32>} : memref<18x18x4xbf16, #tpu.memory_space<vmem>>, vector<16x16x4xbf16>,
    } else {
    }
    %c8_i32 = arith.constant 8 : i32
    %10 = arith.muli %arg2, %c8_i32 : i32
    %c0_i32_5 = arith.constant 0 : i32
    %11 = arith.addi %10, %c0_i32_5 : i32
    %12 = arith.index_cast %11 : i32 to index
    %c0 = arith.constant 0 : index
    %c0_6 = arith.constant 0 : index
    %13 = vector.load %arg6[%12, %c0, %c0_6] : memref<18x18x4xbf16, #tpu.memory_space<vmem>>, vector<8x16x4xbf16>
    %c0_7 = arith.constant 0 : index
    %c0_8 = arith.constant 0 : index
    %c0_9 = arith.constant 0 : index
    %14 = vector.load %arg7[%c0_7, %c0_8, %c0_9] : memref<8x16x36xbf16, #tpu.memory_space<vmem>>, vector<8x16x4xbf16>
    tpu.vector_store %arg7[%c0_7, %c0_8, %c0_9], %13 {strides = array<i32>} : memref<8x16x36xbf16, #tpu.memory_space<vmem>>, vector<8x16x4xbf16>,
    %c0_i32_10 = arith.constant 0 : i32
    %15 = arith.addi %10, %c0_i32_10 : i32
    %16 = arith.index_cast %15 : i32 to index
    %c1 = arith.constant 1 : index
    %c0_11 = arith.constant 0 : index
    %17 = vector.load %arg6[%16, %c1, %c0_11] : memref<18x18x4xbf16, #tpu.memory_space<vmem>>, vector<8x16x4xbf16>
    %c0_12 = arith.constant 0 : index
    %c0_13 = arith.constant 0 : index
    %c4 = arith.constant 4 : index
    %18 = vector.load %arg7[%c0_12, %c0_13, %c4] : memref<8x16x36xbf16, #tpu.memory_space<vmem>>, vector<8x16x4xbf16>
    tpu.vector_store %arg7[%c0_12, %c0_13, %c4], %17 {strides = array<i32>} : memref<8x16x36xbf16, #tpu.memory_space<vmem>>, vector<8x16x4xbf16>,
    %c0_i32_14 = arith.constant 0 : i32
    %19 = arith.addi %10, %c0_i32_14 : i32
    %20 = arith.index_cast %19 : i32 to index
    %c2 = arith.constant 2 : index
    %c0_15 = arith.constant 0 : index
    %21 = vector.load %arg6[%20, %c2, %c0_15] : memref<18x18x4xbf16, #tpu.memory_space<vmem>>, vector<8x16x4xbf16>
    %c0_16 = arith.constant 0 : index
    %c0_17 = arith.constant 0 : index
    %c8 = arith.constant 8 : index
    %22 = vector.load %arg7[%c0_16, %c0_17, %c8] : memref<8x16x36xbf16, #tpu.memory_space<vmem>>, vector<8x16x4xbf16>
    tpu.vector_store %arg7[%c0_16, %c0_17, %c8], %21 {strides = array<i32>} : memref<8x16x36xbf16, #tpu.memory_space<vmem>>, vector<8x16x4xbf16>,
    %c1_i32 = arith.constant 1 : i32
    %23 = arith.addi %10, %c1_i32 : i32
    %24 = arith.index_cast %23 : i32 to index
    %c0_18 = arith.constant 0 : index
    %c0_19 = arith.constant 0 : index
    %25 = vector.load %arg6[%24, %c0_18, %c0_19] : memref<18x18x4xbf16, #tpu.memory_space<vmem>>, vector<8x16x4xbf16>
    %c0_20 = arith.constant 0 : index
    %c0_21 = arith.constant 0 : index
    %c12 = arith.constant 12 : index
    %26 = vector.load %arg7[%c0_20, %c0_21, %c12] : memref<8x16x36xbf16, #tpu.memory_space<vmem>>, vector<8x16x4xbf16>
    tpu.vector_store %arg7[%c0_20, %c0_21, %c12], %25 {strides = array<i32>} : memref<8x16x36xbf16, #tpu.memory_space<vmem>>, vector<8x16x4xbf16>,
    %c1_i32_22 = arith.constant 1 : i32
    %27 = arith.addi %10, %c1_i32_22 : i32
    %28 = arith.index_cast %27 : i32 to index
    %c1_23 = arith.constant 1 : index
    %c0_24 = arith.constant 0 : index
    %29 = vector.load %arg6[%28, %c1_23, %c0_24] : memref<18x18x4xbf16, #tpu.memory_space<vmem>>, vector<8x16x4xbf16>
    %c0_25 = arith.constant 0 : index
    %c0_26 = arith.constant 0 : index
    %c16 = arith.constant 16 : index
    %30 = vector.load %arg7[%c0_25, %c0_26, %c16] : memref<8x16x36xbf16, #tpu.memory_space<vmem>>, vector<8x16x4xbf16>
    tpu.vector_store %arg7[%c0_25, %c0_26, %c16], %29 {strides = array<i32>} : memref<8x16x36xbf16, #tpu.memory_space<vmem>>, vector<8x16x4xbf16>,
    %c1_i32_27 = arith.constant 1 : i32
    %31 = arith.addi %10, %c1_i32_27 : i32
    %32 = arith.index_cast %31 : i32 to index
    %c2_28 = arith.constant 2 : index
    %c0_29 = arith.constant 0 : index
    %33 = vector.load %arg6[%32, %c2_28, %c0_29] : memref<18x18x4xbf16, #tpu.memory_space<vmem>>, vector<8x16x4xbf16>
    %c0_30 = arith.constant 0 : index
    %c0_31 = arith.constant 0 : index
    %c20 = arith.constant 20 : index
    %34 = vector.load %arg7[%c0_30, %c0_31, %c20] : memref<8x16x36xbf16, #tpu.memory_space<vmem>>, vector<8x16x4xbf16>
    tpu.vector_store %arg7[%c0_30, %c0_31, %c20], %33 {strides = array<i32>} : memref<8x16x36xbf16, #tpu.memory_space<vmem>>, vector<8x16x4xbf16>,
    %c2_i32 = arith.constant 2 : i32
    %35 = arith.addi %10, %c2_i32 : i32
    %36 = arith.index_cast %35 : i32 to index
    %c0_32 = arith.constant 0 : index
    %c0_33 = arith.constant 0 : index
    %37 = vector.load %arg6[%36, %c0_32, %c0_33] : memref<18x18x4xbf16, #tpu.memory_space<vmem>>, vector<8x16x4xbf16>
    %c0_34 = arith.constant 0 : index
    %c0_35 = arith.constant 0 : index
    %c24 = arith.constant 24 : index
    %38 = vector.load %arg7[%c0_34, %c0_35, %c24] : memref<8x16x36xbf16, #tpu.memory_space<vmem>>, vector<8x16x4xbf16>
    tpu.vector_store %arg7[%c0_34, %c0_35, %c24], %37 {strides = array<i32>} : memref<8x16x36xbf16, #tpu.memory_space<vmem>>, vector<8x16x4xbf16>,
    %c2_i32_36 = arith.constant 2 : i32
    %39 = arith.addi %10, %c2_i32_36 : i32
    %40 = arith.index_cast %39 : i32 to index
    %c1_37 = arith.constant 1 : index
    %c0_38 = arith.constant 0 : index
    %41 = vector.load %arg6[%40, %c1_37, %c0_38] : memref<18x18x4xbf16, #tpu.memory_space<vmem>>, vector<8x16x4xbf16>
    %c0_39 = arith.constant 0 : index
    %c0_40 = arith.constant 0 : index
    %c28 = arith.constant 28 : index
    %42 = vector.load %arg7[%c0_39, %c0_40, %c28] : memref<8x16x36xbf16, #tpu.memory_space<vmem>>, vector<8x16x4xbf16>
    tpu.vector_store %arg7[%c0_39, %c0_40, %c28], %41 {strides = array<i32>} : memref<8x16x36xbf16, #tpu.memory_space<vmem>>, vector<8x16x4xbf16>,
    %c2_i32_41 = arith.constant 2 : i32
    %43 = arith.addi %10, %c2_i32_41 : i32
    %44 = arith.index_cast %43 : i32 to index
    %c2_42 = arith.constant 2 : index
    %c0_43 = arith.constant 0 : index
    %45 = vector.load %arg6[%44, %c2_42, %c0_43] : memref<18x18x4xbf16, #tpu.memory_space<vmem>>, vector<8x16x4xbf16>
    %c0_44 = arith.constant 0 : index
    %c0_45 = arith.constant 0 : index
    %c32 = arith.constant 32 : index
    %46 = vector.load %arg7[%c0_44, %c0_45, %c32] : memref<8x16x36xbf16, #tpu.memory_space<vmem>>, vector<8x16x4xbf16>
    tpu.vector_store %arg7[%c0_44, %c0_45, %c32], %45 {strides = array<i32>} : memref<8x16x36xbf16, #tpu.memory_space<vmem>>, vector<8x16x4xbf16>,
    %c0_46 = arith.constant 0 : index
    %c0_47 = arith.constant 0 : index
    %c0_48 = arith.constant 0 : index
    %47 = vector.load %arg7[%c0_46, %c0_47, %c0_48] : memref<8x16x36xbf16, #tpu.memory_space<vmem>>, vector<8x16x36xbf16>
    %48 = vector.shape_cast %47 : vector<8x16x36xbf16> to vector<128x36xbf16>
    %c0_49 = arith.constant 0 : index
    %c0_50 = arith.constant 0 : index
    %49 = vector.load %arg4[%c0_49, %c0_50] : memref<36x128xbf16, #tpu.memory_space<vmem>>, vector<36x128xbf16>
    %cst = arith.constant dense<0.000000e+00> : vector<128x128xf32>
    %50 = tpu.matmul %48, %49, %cst {dimension_numbers = #tpu.dot_dimension_numbers<[1], [0], [0], [1], [0, 0, 1, 1], [], []>} : vector<128x36xbf16>, vector<36x128xbf16>, vector<128x128xf32> -> vector<128x128xf32>
    %c0_i32_51 = arith.constant 0 : i32
    %51 = arith.cmpi eq, %arg0, %c0_i32_51 : i32
    %52 = arith.extui %51 : i1 to i32
    %c0_i32_52 = arith.constant 0 : i32
    %53 = arith.cmpi ne, %52, %c0_i32_52 : i32
    scf.if %53 {
      %c0_55 = arith.constant 0 : index
      %c0_56 = arith.constant 0 : index
      %57 = vector.load %arg8[%c0_55, %c0_56] : memref<1x128xf32, #tpu.memory_space<vmem>>, vector<1x128xf32>
      %cst_57 = arith.constant dense<0.000000e+00> : vector<128xf32>
      %58 = vector.multi_reduction <add>, %50, %cst_57 [0] : vector<128x128xf32> to vector<128xf32>
      %59 = vector.shape_cast %58 : vector<128xf32> to vector<1x128xf32>
      %60 = arith.addf %57, %59 : vector<1x128xf32>
      %c0_58 = arith.constant 0 : index
      %c0_59 = arith.constant 0 : index
      %61 = vector.load %arg8[%c0_58, %c0_59] : memref<1x128xf32, #tpu.memory_space<vmem>>, vector<1x128xf32>
      tpu.vector_store %arg8[%c0_58, %c0_59], %60 {strides = array<i32>} : memref<1x128xf32, #tpu.memory_space<vmem>>, vector<1x128xf32>,
      %c0_60 = arith.constant 0 : index
      %c0_61 = arith.constant 0 : index
      %62 = vector.load %arg9[%c0_60, %c0_61] : memref<1x128xf32, #tpu.memory_space<vmem>>, vector<1x128xf32>
      %63 = arith.mulf %50, %50 : vector<128x128xf32>
      %cst_62 = arith.constant dense<0.000000e+00> : vector<128xf32>
      %64 = vector.multi_reduction <add>, %63, %cst_62 [0] : vector<128x128xf32> to vector<128xf32>
      %65 = vector.shape_cast %64 : vector<128xf32> to vector<1x128xf32>
      %66 = arith.addf %62, %65 : vector<1x128xf32>
      %c0_63 = arith.constant 0 : index
      %c0_64 = arith.constant 0 : index
      %67 = vector.load %arg9[%c0_63, %c0_64] : memref<1x128xf32, #tpu.memory_space<vmem>>, vector<1x128xf32>
      tpu.vector_store %arg9[%c0_63, %c0_64], %66 {strides = array<i32>} : memref<1x128xf32, #tpu.memory_space<vmem>>, vector<1x128xf32>,
    } else {
    }
    %c1_i32_53 = arith.constant 1 : i32
    %54 = arith.cmpi eq, %arg0, %c1_i32_53 : i32
    %55 = arith.extui %54 : i1 to i32
    %c0_i32_54 = arith.constant 0 : i32
    %56 = arith.cmpi ne, %55, %c0_i32_54 : i32
    scf.if %56 {
      %c0_55 = arith.constant 0 : index
      %c0_56 = arith.constant 0 : index
      %57 = vector.load %arg8[%c0_55, %c0_56] : memref<1x128xf32, #tpu.memory_space<vmem>>, vector<1x128xf32>
      %cst_57 = arith.constant 0.001953125 : f32
      %58 = vector.broadcast %cst_57 : f32 to vector<1x128xf32>
      %59 = arith.mulf %57, %58 : vector<1x128xf32>
      %c0_58 = arith.constant 0 : index
      %c0_59 = arith.constant 0 : index
      %60 = vector.load %arg9[%c0_58, %c0_59] : memref<1x128xf32, #tpu.memory_space<vmem>>, vector<1x128xf32>
      %cst_60 = arith.constant 0.001953125 : f32
      %61 = vector.broadcast %cst_60 : f32 to vector<1x128xf32>
      %62 = arith.mulf %60, %61 : vector<1x128xf32>
      %63 = arith.mulf %59, %59 : vector<1x128xf32>
      %64 = arith.subf %62, %63 : vector<1x128xf32>
      %cst_61 = arith.constant 0.000000e+00 : f32
      %65 = vector.broadcast %cst_61 : f32 to vector<1x128xf32>
      %66 = arith.maximumf %64, %65 : vector<1x128xf32>
      %67 = vector.broadcast %59 : vector<1x128xf32> to vector<128x128xf32>
      %68 = arith.subf %50, %67 : vector<128x128xf32>
      %cst_62 = arith.constant 9.99999974E-6 : f32
      %69 = vector.broadcast %cst_62 : f32 to vector<1x128xf32>
      %70 = arith.addf %66, %69 : vector<1x128xf32>
      %71 = math.rsqrt %70 : vector<1x128xf32>
      %72 = vector.broadcast %71 : vector<1x128xf32> to vector<128x128xf32>
      %73 = arith.mulf %68, %72 : vector<128x128xf32>
      %cst_63 = arith.constant 0.000000e+00 : f32
      %74 = vector.broadcast %cst_63 : f32 to vector<128x128xf32>
      %75 = arith.maximumf %73, %74 : vector<128x128xf32>
      %cst_64 = arith.constant dense<0.000000e+00> : vector<128xf32>
      %76 = vector.multi_reduction <add>, %75, %cst_64 [0] : vector<128x128xf32> to vector<128xf32>
      %77 = vector.shape_cast %76 : vector<128xf32> to vector<1x128xf32>
      %cst_65 = arith.constant 3.906250e-03 : f32
      %78 = vector.broadcast %cst_65 : f32 to vector<1x128xf32>
      %79 = arith.mulf %77, %78 : vector<1x128xf32>
      %c0_i32_66 = arith.constant 0 : i32
      %80 = arith.cmpi eq, %arg2, %c0_i32_66 : i32
      %81 = arith.extui %80 : i1 to i32
      %c0_i32_67 = arith.constant 0 : i32
      %82 = arith.cmpi ne, %81, %c0_i32_67 : i32
      scf.if %82 {
        %86 = arith.index_cast %arg1 : i32 to index
        %c0_70 = arith.constant 0 : index
        %87 = vector.load %arg5[%86, %c0_70] : memref<2x128xf32, #tpu.memory_space<vmem>>, vector<1x128xf32>
        tpu.vector_store %arg5[%86, %c0_70], %79 {strides = array<i32>} : memref<2x128xf32, #tpu.memory_space<vmem>>, vector<1x128xf32>,
      } else {
      }
      %c0_i32_68 = arith.constant 0 : i32
      %83 = arith.cmpi ne, %arg2, %c0_i32_68 : i32
      %84 = arith.extui %83 : i1 to i32
      %c0_i32_69 = arith.constant 0 : i32
      %85 = arith.cmpi ne, %84, %c0_i32_69 : i32
      scf.if %85 {
        %86 = arith.index_cast %arg1 : i32 to index
        %c0_70 = arith.constant 0 : index
        %87 = vector.load %arg5[%86, %c0_70] : memref<2x128xf32, #tpu.memory_space<vmem>>, vector<1x128xf32>
        %88 = arith.addf %87, %79 : vector<1x128xf32>
        %89 = arith.index_cast %arg1 : i32 to index
        %c0_71 = arith.constant 0 : index
        %90 = vector.load %arg5[%89, %c0_71] : memref<2x128xf32, #tpu.memory_space<vmem>>, vector<1x128xf32>
        tpu.vector_store %arg5[%89, %c0_71], %88 {strides = array<i32>} : memref<2x128xf32, #tpu.memory_space<vmem>>, vector<1x128xf32>,
      } else {
      }
    } else {
    }
    return
  }
  func.func @transform_0(%arg0: i32, %arg1: i32, %arg2: i32) -> (i32, i32, i32, i32) {
    %c0_i32 = arith.constant 0 : i32
    %c0_i32_0 = arith.constant 0 : i32
    %c0_i32_1 = arith.constant 0 : i32
    %c0_i32_2 = arith.constant 0 : i32
    return %arg1, %c0_i32, %c0_i32_0, %c0_i32_1 : i32, i32, i32, i32
  }
  func.func @transform_1(%arg0: i32, %arg1: i32, %arg2: i32) -> (i32, i32) {
    %c0_i32 = arith.constant 0 : i32
    %c0_i32_0 = arith.constant 0 : i32
    %c0_i32_1 = arith.constant 0 : i32
    return %c0_i32, %c0_i32_0 : i32, i32
  }
  func.func @transform_2(%arg0: i32, %arg1: i32, %arg2: i32) -> (i32, i32) {
    %c0_i32 = arith.constant 0 : i32
    %c0_i32_0 = arith.constant 0 : i32
    %c0_i32_1 = arith.constant 0 : i32
    return %c0_i32, %c0_i32_0 : i32, i32
  }
}

module attributes {stable_mosaic.version = 11 : i64} {
  func.func @_proj_norm_sim_kernel(%arg0: memref<4x128xf32, #tpu.memory_space<vmem>>, %arg1: memref<128x128xbf16, #tpu.memory_space<vmem>>, %arg2: memref<128x128xbf16, #tpu.memory_space<vmem>>, %arg3: memref<128x128xbf16, #tpu.memory_space<vmem>>, %arg4: memref<4x4xf32, #tpu.memory_space<vmem>>) attributes {dimension_semantics = [], scalar_prefetch = 0 : i64, scratch_operands = 0 : i64, tpu.core_type = #tpu.core_type<tc>} {
    %c0 = arith.constant 0 : index
    %c0_0 = arith.constant 0 : index
    %0 = vector.load %arg0[%c0, %c0_0] : memref<4x128xf32, #tpu.memory_space<vmem>>, vector<4x128xf32>
    %1 = arith.truncf %0 : vector<4x128xf32> to vector<4x128xbf16>
    %c0_1 = arith.constant 0 : index
    %c0_2 = arith.constant 0 : index
    %2 = vector.load %arg1[%c0_1, %c0_2] : memref<128x128xbf16, #tpu.memory_space<vmem>>, vector<128x128xbf16>
    %cst = arith.constant dense<0.000000e+00> : vector<4x128xf32>
    %3 = tpu.matmul %1, %2, %cst {dimension_numbers = #tpu.dot_dimension_numbers<[1], [0], [0], [1], [0, 0, 1, 1], [], []>} : vector<4x128xbf16>, vector<128x128xbf16>, vector<4x128xf32> -> vector<4x128xf32>
    %cst_3 = arith.constant dense<0.000000e+00> : vector<128xf32>
    %4 = vector.multi_reduction <add>, %3, %cst_3 [0] : vector<4x128xf32> to vector<128xf32>
    %5 = vector.shape_cast %4 : vector<128xf32> to vector<1x128xf32>
    %cst_4 = arith.constant 4.000000e+00 : f32
    %6 = vector.broadcast %cst_4 : f32 to vector<1x128xf32>
    %7 = arith.divf %5, %6 : vector<1x128xf32>
    %8 = arith.mulf %3, %3 : vector<4x128xf32>
    %cst_5 = arith.constant dense<0.000000e+00> : vector<128xf32>
    %9 = vector.multi_reduction <add>, %8, %cst_5 [0] : vector<4x128xf32> to vector<128xf32>
    %10 = vector.shape_cast %9 : vector<128xf32> to vector<1x128xf32>
    %cst_6 = arith.constant 4.000000e+00 : f32
    %11 = vector.broadcast %cst_6 : f32 to vector<1x128xf32>
    %12 = arith.divf %10, %11 : vector<1x128xf32>
    %13 = arith.mulf %7, %7 : vector<1x128xf32>
    %14 = arith.subf %12, %13 : vector<1x128xf32>
    %cst_7 = arith.constant 0.000000e+00 : f32
    %15 = vector.broadcast %cst_7 : f32 to vector<1x128xf32>
    %16 = arith.maximumf %14, %15 : vector<1x128xf32>
    %17 = vector.broadcast %7 : vector<1x128xf32> to vector<4x128xf32>
    %18 = arith.subf %3, %17 : vector<4x128xf32>
    %cst_8 = arith.constant 9.99999974E-6 : f32
    %19 = vector.broadcast %cst_8 : f32 to vector<1x128xf32>
    %20 = arith.addf %16, %19 : vector<1x128xf32>
    %21 = math.rsqrt %20 : vector<1x128xf32>
    %22 = vector.broadcast %21 : vector<1x128xf32> to vector<4x128xf32>
    %23 = arith.mulf %18, %22 : vector<4x128xf32>
    %cst_9 = arith.constant 0.000000e+00 : f32
    %24 = vector.broadcast %cst_9 : f32 to vector<4x128xf32>
    %25 = arith.maximumf %23, %24 : vector<4x128xf32>
    %26 = arith.truncf %25 : vector<4x128xf32> to vector<4x128xbf16>
    %c0_10 = arith.constant 0 : index
    %c0_11 = arith.constant 0 : index
    %27 = vector.load %arg2[%c0_10, %c0_11] : memref<128x128xbf16, #tpu.memory_space<vmem>>, vector<128x128xbf16>
    %cst_12 = arith.constant dense<0.000000e+00> : vector<4x128xf32>
    %28 = tpu.matmul %26, %27, %cst_12 {dimension_numbers = #tpu.dot_dimension_numbers<[1], [0], [0], [1], [0, 0, 1, 1], [], []>} : vector<4x128xbf16>, vector<128x128xbf16>, vector<4x128xf32> -> vector<4x128xf32>
    %cst_13 = arith.constant dense<0.000000e+00> : vector<128xf32>
    %29 = vector.multi_reduction <add>, %28, %cst_13 [0] : vector<4x128xf32> to vector<128xf32>
    %30 = vector.shape_cast %29 : vector<128xf32> to vector<1x128xf32>
    %cst_14 = arith.constant 4.000000e+00 : f32
    %31 = vector.broadcast %cst_14 : f32 to vector<1x128xf32>
    %32 = arith.divf %30, %31 : vector<1x128xf32>
    %33 = arith.mulf %28, %28 : vector<4x128xf32>
    %cst_15 = arith.constant dense<0.000000e+00> : vector<128xf32>
    %34 = vector.multi_reduction <add>, %33, %cst_15 [0] : vector<4x128xf32> to vector<128xf32>
    %35 = vector.shape_cast %34 : vector<128xf32> to vector<1x128xf32>
    %cst_16 = arith.constant 4.000000e+00 : f32
    %36 = vector.broadcast %cst_16 : f32 to vector<1x128xf32>
    %37 = arith.divf %35, %36 : vector<1x128xf32>
    %38 = arith.mulf %32, %32 : vector<1x128xf32>
    %39 = arith.subf %37, %38 : vector<1x128xf32>
    %cst_17 = arith.constant 0.000000e+00 : f32
    %40 = vector.broadcast %cst_17 : f32 to vector<1x128xf32>
    %41 = arith.maximumf %39, %40 : vector<1x128xf32>
    %42 = vector.broadcast %32 : vector<1x128xf32> to vector<4x128xf32>
    %43 = arith.subf %28, %42 : vector<4x128xf32>
    %cst_18 = arith.constant 9.99999974E-6 : f32
    %44 = vector.broadcast %cst_18 : f32 to vector<1x128xf32>
    %45 = arith.addf %41, %44 : vector<1x128xf32>
    %46 = math.rsqrt %45 : vector<1x128xf32>
    %47 = vector.broadcast %46 : vector<1x128xf32> to vector<4x128xf32>
    %48 = arith.mulf %43, %47 : vector<4x128xf32>
    %cst_19 = arith.constant 0.000000e+00 : f32
    %49 = vector.broadcast %cst_19 : f32 to vector<4x128xf32>
    %50 = arith.maximumf %48, %49 : vector<4x128xf32>
    %51 = arith.truncf %50 : vector<4x128xf32> to vector<4x128xbf16>
    %c0_20 = arith.constant 0 : index
    %c0_21 = arith.constant 0 : index
    %52 = vector.load %arg3[%c0_20, %c0_21] : memref<128x128xbf16, #tpu.memory_space<vmem>>, vector<128x128xbf16>
    %cst_22 = arith.constant dense<0.000000e+00> : vector<4x128xf32>
    %53 = tpu.matmul %51, %52, %cst_22 {dimension_numbers = #tpu.dot_dimension_numbers<[1], [0], [0], [1], [0, 0, 1, 1], [], []>} : vector<4x128xbf16>, vector<128x128xbf16>, vector<4x128xf32> -> vector<4x128xf32>
    %cst_23 = arith.constant dense<0.000000e+00> : vector<128xf32>
    %54 = vector.multi_reduction <add>, %53, %cst_23 [0] : vector<4x128xf32> to vector<128xf32>
    %55 = vector.shape_cast %54 : vector<128xf32> to vector<1x128xf32>
    %cst_24 = arith.constant 4.000000e+00 : f32
    %56 = vector.broadcast %cst_24 : f32 to vector<1x128xf32>
    %57 = arith.divf %55, %56 : vector<1x128xf32>
    %58 = arith.mulf %53, %53 : vector<4x128xf32>
    %cst_25 = arith.constant dense<0.000000e+00> : vector<128xf32>
    %59 = vector.multi_reduction <add>, %58, %cst_25 [0] : vector<4x128xf32> to vector<128xf32>
    %60 = vector.shape_cast %59 : vector<128xf32> to vector<1x128xf32>
    %cst_26 = arith.constant 4.000000e+00 : f32
    %61 = vector.broadcast %cst_26 : f32 to vector<1x128xf32>
    %62 = arith.divf %60, %61 : vector<1x128xf32>
    %63 = arith.mulf %57, %57 : vector<1x128xf32>
    %64 = arith.subf %62, %63 : vector<1x128xf32>
    %cst_27 = arith.constant 0.000000e+00 : f32
    %65 = vector.broadcast %cst_27 : f32 to vector<1x128xf32>
    %66 = arith.maximumf %64, %65 : vector<1x128xf32>
    %67 = vector.broadcast %57 : vector<1x128xf32> to vector<4x128xf32>
    %68 = arith.subf %53, %67 : vector<4x128xf32>
    %cst_28 = arith.constant 9.99999974E-6 : f32
    %69 = vector.broadcast %cst_28 : f32 to vector<1x128xf32>
    %70 = arith.addf %66, %69 : vector<1x128xf32>
    %71 = math.rsqrt %70 : vector<1x128xf32>
    %72 = vector.broadcast %71 : vector<1x128xf32> to vector<4x128xf32>
    %73 = arith.mulf %68, %72 : vector<4x128xf32>
    %74 = arith.mulf %73, %73 : vector<4x128xf32>
    %cst_29 = arith.constant dense<0.000000e+00> : vector<4xf32>
    %75 = vector.multi_reduction <add>, %74, %cst_29 [1] : vector<4x128xf32> to vector<4xf32>
    %76 = vector.shape_cast %75 : vector<4xf32> to vector<4x1xf32>
    %cst_30 = arith.constant 1.000000e-24 : f32
    %77 = vector.broadcast %cst_30 : f32 to vector<4x1xf32>
    %78 = arith.maximumf %76, %77 : vector<4x1xf32>
    %79 = math.rsqrt %78 : vector<4x1xf32>
    %80 = vector.broadcast %79 : vector<4x1xf32> to vector<4x128xf32>
    %81 = arith.mulf %73, %80 : vector<4x128xf32>
    %82 = arith.truncf %81 : vector<4x128xf32> to vector<4x128xbf16>
    %cst_31 = arith.constant dense<0.000000e+00> : vector<4x4xf32>
    %83 = tpu.matmul %82, %82, %cst_31 {dimension_numbers = #tpu.dot_dimension_numbers<[1], [1], [0], [0], [0, 0, 1, 0], [], []>} : vector<4x128xbf16>, vector<4x128xbf16>, vector<4x4xf32> -> vector<4x4xf32>
    %c0_32 = arith.constant 0 : index
    %c0_33 = arith.constant 0 : index
    %84 = vector.load %arg4[%c0_32, %c0_33] : memref<4x4xf32, #tpu.memory_space<vmem>>, vector<4x4xf32>
    tpu.vector_store %arg4[%c0_32, %c0_33], %83 {strides = array<i32>} : memref<4x4xf32, #tpu.memory_space<vmem>>, vector<4x4xf32>,
    return
  }
}

</mosaic_0001>

<llo_original>
// kernel: simclr_forward.5
$region0: #{simclr_forward.5}
  #allocation0 [shape = 'u32[]', space=smem, size = 0x4, offset = 0x4, fixed_abs, tag = 'smem constant byte address 0x4 - core index']
  #allocation1 [shape = 'u32[72,128]{1,0:T(1,128)}', space=vmem, size = 0x9000, scoped, tag = 'internal scratch']
  %s0 = inlined_call_operand.vmem [shape: f32[4,128], index: 0, kind: input, shape index: {}]
  %s1 = inlined_call_operand.vmem [shape: bf16[128,128], index: 1, kind: input, shape index: {}]
  %s2 = inlined_call_operand.vmem [shape: bf16[128,128], index: 2, kind: input, shape index: {}]
  %s3 = inlined_call_operand.vmem [shape: bf16[128,128], index: 3, kind: input, shape index: {}]
  %s4 = inlined_call_operand.vmem [shape: f32[4,4], index: 4, kind: output, shape index: {}]
  %s5 = sld [smem:[#allocation0]]
  $region26: #{simclr_forward.5} parent=0
    _
  %s7 = ssub.s32 1, %s5
  %s8 = scalar_select 0, %s7, %s5
  // Predicated region
  $region2: #{simclr_forward.5} parent=0 // pred_check
    _
  $region3: #{simclr_forward.5} parent=0 // pred_check_branch
    %10 = sbr.rel (0) target = $region5
  $region4: #{simclr_forward.5} parent=0 // pred_region
    _
  $region5: #{simclr_forward.5} parent=0 // pred_fallthru
    _
  // Predicated region
  $region6: #{simclr_forward.5} parent=0 // pred_check
    _
  $region7: #{simclr_forward.5} parent=0 // pred_check_branch
    %12 = sbr.rel (0) target = $region9
  $region8: #{simclr_forward.5} parent=0 // pred_region
    _
  $region9: #{simclr_forward.5} parent=0 // pred_fallthru
    _
  // Predicated region
  $region10: #{simclr_forward.5} parent=0 // pred_check
    _
  $region11: #{simclr_forward.5} parent=0 // pred_check_branch
    %14 = sbr.rel (0) target = $region13
  $region12: #{simclr_forward.5} parent=0 // pred_region
    _
  $region13: #{simclr_forward.5} parent=0 // pred_fallthru
    _
  // Predicated region
  $region14: #{simclr_forward.5} parent=0 // pred_check
    _
  $region15: #{simclr_forward.5} parent=0 // pred_check_branch
    %16 = sbr.rel (0) target = $region17
  $region16: #{simclr_forward.5} parent=0 // pred_region
    _
  $region17: #{simclr_forward.5} parent=0 // pred_fallthru
    _
  %v18 = vld [vmem:[%s0] sm:$0xf]
  %v19 = vpack.c.bf16 %v18, %v18
  %v20 = vld [vmem:[%s1] sm:$0xf]
  %v21 = vld [vmem:[%s1 + $0x4] sm:$0xf]
  %v22 = vld [vmem:[%s1 + $0x8] sm:$0xf]
  %v23 = vld [vmem:[%s1 + $0xc] sm:$0xf]
  %v24 = vld [vmem:[%s1 + $0x10] sm:$0xf]
  %v25 = vld [vmem:[%s1 + $0x14] sm:$0xf]
  %v26 = vld [vmem:[%s1 + $0x18] sm:$0xf]
  %v27 = vld [vmem:[%s1 + $0x1c] sm:$0xf]
  %v28 = vld [vmem:[%s1 + $0x20] sm:$0xf]
  %v29 = vld [vmem:[%s1 + $0x24] sm:$0xf]
  %v30 = vld [vmem:[%s1 + $0x28] sm:$0xf]
  %v31 = vld [vmem:[%s1 + $0x2c] sm:$0xf]
  %v32 = vld [vmem:[%s1 + $0x30] sm:$0xf]
  %v33 = vld [vmem:[%s1 + $0x34] sm:$0xf]
  %v34 = vld [vmem:[%s1 + $0x38] sm:$0xf]
  %v35 = vld [vmem:[%s1 + $0x3c] sm:$0xf]
  %v52 = vunpack.c.l.b16 %v20
  %v53 = vunpack.c.l.b16 %v21
  %v54 = vunpack.c.l.b16 %v22
  %v55 = vunpack.c.l.b16 %v23
  %v56 = vunpack.c.l.b16 %v24
  %v57 = vunpack.c.l.b16 %v25
  %v58 = vunpack.c.l.b16 %v26
  %v59 = vunpack.c.l.b16 %v27
  %v60 = vunpack.c.l.b16 %v28
  %v61 = vunpack.c.l.b16 %v29
  %v62 = vunpack.c.l.b16 %v30
  %v63 = vunpack.c.l.b16 %v31
  %v64 = vunpack.c.l.b16 %v32
  %v65 = vunpack.c.l.b16 %v33
  %v66 = vunpack.c.l.b16 %v34
  %v67 = vunpack.c.l.b16 %v35
  %v68 = vpack.c.b16 %v53, %v52
  %v69 = vpack.c.b16 %v55, %v54
  %v70 = vpack.c.b16 %v57, %v56
  %v71 = vpack.c.b16 %v59, %v58
  %v72 = vpack.c.b16 %v61, %v60
  %v73 = vpack.c.b16 %v63, %v62
  %v74 = vpack.c.b16 %v65, %v64
  %v75 = vpack.c.b16 %v67, %v66
  %84 = vmatpush.bf16.msra.mxu0 %v75
  %85 = vmatpush.bf16.msra.mxu0 %v74
  %86 = vmatpush.bf16.msra.mxu0 %v73
  %87 = vmatpush.bf16.msra.mxu0 %v72
  %88 = vmatpush.bf16.msra.mxu0 %v71
  %89 = vmatpush.bf16.msra.mxu0 %v70
  %90 = vmatpush.bf16.msra.mxu0 %v69
  %91 = vmatpush.bf16.msra.mxu0 %v68
  %92 = vmatmul.bf16.gmra.mxu0 %v19
  %v93 = vpop.f32.mrf.mxu0
  %v94 = vadd.f32 0.0, %v93
  %v95 = vpop.f32.mrf.mxu0
  %96 = vdwg.mxu0
  %vm97 = vcmask 1043456
  %v98 = vsel %vm97, %v94, 0.0
  %v99 = vrot.slane %v98, 4
  %v100 = vadd.f32 %v98, %v99
  %v101 = vrot.slane %v100, 2
  %v102 = vadd.f32 %v100, %v101
  %v103 = vrot.slane %v102, 1
  %v104 = vadd.f32 %v102, %v103
  %v105 = vrcp.pop 4.0
  %v106 = vmul.f32 4.0, %v105
  %v107 = vsub.f32 1.0, %v106
  %v108 = vmul.f32 %v105, %v107
  %v109 = vadd.f32 %v105, %v108
  %vm110 = vweird.f32 %v105
  %v111 = vsel %vm110, %v105, %v109
  %v112 = vmul.f32 %v104, %v111
  %v113 = vmul.f32 %v94, %v94
  %v114 = vsel %vm97, %v113, 0.0
  %v115 = vrot.slane %v114, 4
  %v116 = vadd.f32 %v114, %v115
  %v117 = vrot.slane %v116, 2
  %v118 = vadd.f32 %v116, %v117
  %v119 = vrot.slane %v118, 1
  %v120 = vadd.f32 %v118, %v119
  %v121 = vmul.f32 %v120, %v111
  %v122 = vmul.f32 %v112, %v112
  %v123 = vsub.f32 %v121, %v122
  %v124 = vmax.f32 %v123, 0.0
  %v125 = vsub.f32 %v94, %v112
  %v126 = vadd.f32 %v124, 1e-05
  %v127 = vrsqrt.pop %v126
  %v128 = vmul.f32 %v127, %v126
  %v129 = vmul.f32 %v128, %v127
  %v130 = vmul.f32 0.5, %v129
  %v131 = vsub.f32 1.5, %v130
  %v132 = vmul.f32 %v127, %v131
  %vm133 = vweird.f32 %v126
  %vm134 = vweird.f32 %v127
  %vm135 = vmor %vm133, %vm134
  %v136 = vsel %vm135, %v127, %v132
  %v137 = vmul.f32 %v125, %v136
  %v138 = vmax.f32 %v137, 0.0
  %v139 = vpack.c.bf16 %v138, %v138
  %v140 = vld [vmem:[%s2] sm:$0xf]
  %v141 = vld [vmem:[%s2 + $0x4] sm:$0xf]
  %v142 = vld [vmem:[%s2 + $0x8] sm:$0xf]
  %v143 = vld [vmem:[%s2 + $0xc] sm:$0xf]
  %v144 = vld [vmem:[%s2 + $0x10] sm:$0xf]
  %v145 = vld [vmem:[%s2 + $0x14] sm:$0xf]
  %v146 = vld [vmem:[%s2 + $0x18] sm:$0xf]
  %v147 = vld [vmem:[%s2 + $0x1c] sm:$0xf]
  %v148 = vld [vmem:[%s2 + $0x20] sm:$0xf]
  %v149 = vld [vmem:[%s2 + $0x24] sm:$0xf]
  %v150 = vld [vmem:[%s2 + $0x28] sm:$0xf]
  %v151 = vld [vmem:[%s2 + $0x2c] sm:$0xf]
  %v152 = vld [vmem:[%s2 + $0x30] sm:$0xf]
  %v153 = vld [vmem:[%s2 + $0x34] sm:$0xf]
  %v154 = vld [vmem:[%s2 + $0x38] sm:$0xf]
  %v155 = vld [vmem:[%s2 + $0x3c] sm:$0xf]
  %v172 = vunpack.c.l.b16 %v140
  %v173 = vunpack.c.l.b16 %v141
  %v174 = vunpack.c.l.b16 %v142
  %v175 = vunpack.c.l.b16 %v143
  %v176 = vunpack.c.l.b16 %v144
  %v177 = vunpack.c.l.b16 %v145
  %v178 = vunpack.c.l.b16 %v146
  %v179 = vunpack.c.l.b16 %v147
  %v180 = vunpack.c.l.b16 %v148
  %v181 = vunpack.c.l.b16 %v149
  %v182 = vunpack.c.l.b16 %v150
  %v183 = vunpack.c.l.b16 %v151
  %v184 = vunpack.c.l.b16 %v152
  %v185 = vunpack.c.l.b16 %v153
  %v186 = vunpack.c.l.b16 %v154
  %v187 = vunpack.c.l.b16 %v155
  %v188 = vpack.c.b16 %v173, %v172
  %v189 = vpack.c.b16 %v175, %v174
  %v190 = vpack.c.b16 %v177, %v176
  %v191 = vpack.c.b16 %v179, %v178
  %v192 = vpack.c.b16 %v181, %v180
  %v193 = vpack.c.b16 %v183, %v182
  %v194 = vpack.c.b16 %v185, %v184
  %v195 = vpack.c.b16 %v187, %v186
  %204 = vmatpush.bf16.msra.mxu0 %v195
  %205 = vmatpush.bf16.msra.mxu0 %v194
  %206 = vmatpush.bf16.msra.mxu0 %v193
  %207 = vmatpush.bf16.msra.mxu0 %v192
  %208 = vmatpush.bf16.msra.mxu0 %v191
  %209 = vmatpush.bf16.msra.mxu0 %v190
  %210 = vmatpush.bf16.msra.mxu0 %v189
  %211 = vmatpush.bf16.msra.mxu0 %v188
  %212 = vmatmul.bf16.gmra.mxu0 %v139
  %v213 = vpop.f32.mrf.mxu0
  %v214 = vadd.f32 0.0, %v213
  %v215 = vpop.f32.mrf.mxu0
  %216 = vdwg.mxu0
  %v217 = vsel %vm97, %v214, 0.0
  %v218 = vrot.slane %v217, 4
  %v219 = vadd.f32 %v217, %v218
  %v220 = vrot.slane %v219, 2
  %v221 = vadd.f32 %v219, %v220
  %v222 = vrot.slane %v221, 1
  %v223 = vadd.f32 %v221, %v222
  %v224 = vmul.f32 %v223, %v111
  %v225 = vmul.f32 %v214, %v214
  %v226 = vsel %vm97, %v225, 0.0
  %v227 = vrot.slane %v226, 4
  %v228 = vadd.f32 %v226, %v227
  %v229 = vrot.slane %v228, 2
  %v230 = vadd.f32 %v228, %v229
  %v231 = vrot.slane %v230, 1
  %v232 = vadd.f32 %v230, %v231
  %v233 = vmul.f32 %v232, %v111
  %v234 = vmul.f32 %v224, %v224
  %v235 = vsub.f32 %v233, %v234
  %v236 = vmax.f32 %v235, 0.0
  %v237 = vsub.f32 %v214, %v224
  %v238 = vadd.f32 %v236, 1e-05
  %v239 = vrsqrt.pop %v238
  %v240 = vmul.f32 %v239, %v238
  %v241 = vmul.f32 %v240, %v239
  %v242 = vmul.f32 0.5, %v241
  %v243 = vsub.f32 1.5, %v242
  %v244 = vmul.f32 %v239, %v243
  %vm245 = vweird.f32 %v238
  %vm246 = vweird.f32 %v239
  %vm247 = vmor %vm245, %vm246
  %v248 = vsel %vm247, %v239, %v244
  %v249 = vmul.f32 %v237, %v248
  %v250 = vmax.f32 %v249, 0.0
  %v251 = vpack.c.bf16 %v250, %v250
  %v252 = vld [vmem:[%s3] sm:$0xf]
  %v253 = vld [vmem:[%s3 + $0x4] sm:$0xf]
  %v254 = vld [vmem:[%s3 + $0x8] sm:$0xf]
  %v255 = vld [vmem:[%s3 + $0xc] sm:$0xf]
  %v256 = vld [vmem:[%s3 + $0x10] sm:$0xf]
  %v257 = vld [vmem:[%s3 + $0x14] sm:$0xf]
  %v258 = vld [vmem:[%s3 + $0x18] sm:$0xf]
  %v259 = vld [vmem:[%s3 + $0x1c] sm:$0xf]
  %v260 = vld [vmem:[%s3 + $0x20] sm:$0xf]
  %v261 = vld [vmem:[%s3 + $0x24] sm:$0xf]
  %v262 = vld [vmem:[%s3 + $0x28] sm:$0xf]
  %v263 = vld [vmem:[%s3 + $0x2c] sm:$0xf]
  %v264 = vld [vmem:[%s3 + $0x30] sm:$0xf]
  %v265 = vld [vmem:[%s3 + $0x34] sm:$0xf]
  %v266 = vld [vmem:[%s3 + $0x38] sm:$0xf]
  %v267 = vld [vmem:[%s3 + $0x3c] sm:$0xf]
  %v284 = vunpack.c.l.b16 %v252
  %v285 = vunpack.c.l.b16 %v253
  %v286 = vunpack.c.l.b16 %v254
  %v287 = vunpack.c.l.b16 %v255
  %v288 = vunpack.c.l.b16 %v256
  %v289 = vunpack.c.l.b16 %v257
  %v290 = vunpack.c.l.b16 %v258
  %v291 = vunpack.c.l.b16 %v259
  %v292 = vunpack.c.l.b16 %v260
  %v293 = vunpack.c.l.b16 %v261
  %v294 = vunpack.c.l.b16 %v262
  %v295 = vunpack.c.l.b16 %v263
  %v296 = vunpack.c.l.b16 %v264
  %v297 = vunpack.c.l.b16 %v265
  %v298 = vunpack.c.l.b16 %v266
  %v299 = vunpack.c.l.b16 %v267
  %v300 = vpack.c.b16 %v285, %v284
  %v301 = vpack.c.b16 %v287, %v286
  %v302 = vpack.c.b16 %v289, %v288
  %v303 = vpack.c.b16 %v291, %v290
  %v304 = vpack.c.b16 %v293, %v292
  %v305 = vpack.c.b16 %v295, %v294
  %v306 = vpack.c.b16 %v297, %v296
  %v307 = vpack.c.b16 %v299, %v298
  %316 = vmatpush.bf16.msra.mxu0 %v307
  %317 = vmatpush.bf16.msra.mxu0 %v306
  %318 = vmatpush.bf16.msra.mxu0 %v305
  %319 = vmatpush.bf16.msra.mxu0 %v304
  %320 = vmatpush.bf16.msra.mxu0 %v303
  %321 = vmatpush.bf16.msra.mxu0 %v302
  %322 = vmatpush.bf16.msra.mxu0 %v301
  %323 = vmatpush.bf16.msra.mxu0 %v300
  %324 = vmatmul.bf16.gmra.mxu0 %v251
  %v325 = vpop.f32.mrf.mxu0
  %v326 = vadd.f32 0.0, %v325
  %v327 = vpop.f32.mrf.mxu0
  %328 = vdwg.mxu0
  %v329 = vsel %vm97, %v326, 0.0
  %v330 = vrot.slane %v329, 4
  %v331 = vadd.f32 %v329, %v330
  %v332 = vrot.slane %v331, 2
  %v333 = vadd.f32 %v331, %v332
  %v334 = vrot.slane %v333, 1
  %v335 = vadd.f32 %v333, %v334
  %v336 = vmul.f32 %v335, %v111
  %v337 = vmul.f32 %v326, %v326
  %v338 = vsel %vm97, %v337, 0.0
  %v339 = vrot.slane %v338, 4
  %v340 = vadd.f32 %v338, %v339
  %v341 = vrot.slane %v340, 2
  %v342 = vadd.f32 %v340, %v341
  %v343 = vrot.slane %v342, 1
  %v344 = vadd.f32 %v342, %v343
  %v345 = vmul.f32 %v344, %v111
  %v346 = vmul.f32 %v336, %v336
  %v347 = vsub.f32 %v345, %v346
  %v348 = vmax.f32 %v347, 0.0
  %v349 = vsub.f32 %v326, %v336
  %v350 = vadd.f32 %v348, 1e-05
  %v351 = vrsqrt.pop %v350
  %v352 = vmul.f32 %v351, %v350
  %v353 = vmul.f32 %v352, %v351
  %v354 = vmul.f32 0.5, %v353
  %v355 = vsub.f32 1.5, %v354
  %v356 = vmul.f32 %v351, %v355
  %vm357 = vweird.f32 %v350
  %vm358 = vweird.f32 %v351
  %vm359 = vmor %vm357, %vm358
  %v360 = vsel %vm359, %v351, %v356
  %v361 = vmul.f32 %v349, %v360
  %v362 = vmul.f32 %v361, %v361
  %v363 = vsel %vm97, %v362, 0.0
  %364 = vadd.xlane.f32.xlu0 %v363
  %v365 = vpop.xlane.xlu0 %364
  %v366 = vmax.f32 %v365, 1e-24
  %v367 = vrsqrt.pop %v366
  %v368 = vmul.f32 %v367, %v366
  %v369 = vmul.f32 %v368, %v367
  %v370 = vmul.f32 0.5, %v369
  %v371 = vsub.f32 1.5, %v370
  %v372 = vmul.f32 %v367, %v371
  %vm373 = vweird.f32 %v366
  %vm374 = vweird.f32 %v367
  %vm375 = vmor %vm373, %vm374
  %v376 = vsel %vm375, %v367, %v372
  %v377 = vmul.f32 %v361, %v376
  %v378 = vpack.c.bf16 %v377, %v377
  %379 = vmatpush.bf16.xpose.msra.mxu0 0
  %380 = vmatpush.bf16.xpose.msra.mxu0 0
  %381 = vmatpush.bf16.xpose.msra.mxu0 0
  %382 = vmatpush.bf16.xpose.msra.mxu0 0
  %383 = vmatpush.bf16.xpose.msra.mxu0 0
  %384 = vmatpush.bf16.xpose.msra.mxu0 0
  %385 = vmatpush.bf16.xpose.msra.mxu0 0
  %386 = vmatpush.bf16.xpose.msra.mxu0 %v378
  %387 = vmatmul.bf16.gmra.mxu0 %v378
  %v388 = vpop.f32.mrf.mxu0
  %v389 = vadd.f32 0.0, %v388
  %v390 = vpop.f32.mrf.mxu0
  %391 = vdwg.mxu0
  %vm392 = vcmask 27648
  %393 = vst.msk [vmem:[%s4] sm:$0xf] %vm392, %v389
  // Predicated region
  $region18: #{simclr_forward.5} parent=0 // pred_check
    _
  $region19: #{simclr_forward.5} parent=0 // pred_check_branch
    %395 = sbr.rel (0) target = $region21
  $region20: #{simclr_forward.5} parent=0 // pred_region
    _
  $region21: #{simclr_forward.5} parent=0 // pred_fallthru
    _
  // Predicated region
  $region22: #{simclr_forward.5} parent=0 // pred_check
    _
  $region23: #{simclr_forward.5} parent=0 // pred_check_branch
    %397 = sbr.rel (0) target = $region25
  $region24: #{simclr_forward.5} parent=0 // pred_region
    _
  $region25: #{simclr_forward.5} parent=0 // pred_fallthru
    _

// kernel: simclr_forward.3
$region0: #{simclr_forward.3}
  #allocation0 [shape = 'u32[]', space=smem, size = 0x4, offset = 0x4, fixed_abs, tag = 'smem constant byte address 0x4 - core index']
  #allocation1 [shape = 'u32[72,128]{1,0:T(1,128)}', space=vmem, size = 0x9000, scoped, tag = 'internal scratch']
  #allocation2 [shape = 'bf16[18,18,4]{2,1,0:T(8,128)(2,1)}', space=vmem, size = 0x1b000, scoped, tag = 'scratch operand']
  #allocation3 [shape = 'bf16[8,16,36]{2,1,0:T(8,128)(2,1)}', space=vmem, size = 0x8000, scoped, tag = 'scratch operand']
  #allocation4 [shape = 'f32[1,128]{1,0:T(1,128)}', space=vmem, size = 0x200, scoped, tag = 'scratch operand']
  #allocation5 [shape = 'f32[1,128]{1,0:T(1,128)}', space=vmem, size = 0x200, scoped, tag = 'scratch operand']
  %s0 = inlined_call_operand.vmem [shape: bf16[2,16,16,4], index: 0, kind: input, shape index: {}]
  %s1 = inlined_call_operand.vmem [shape: bf16[36,128], index: 1, kind: input, shape index: {}]
  %s2 = inlined_call_operand.vmem [shape: f32[2,128], index: 2, kind: output, shape index: {}]
  %s3 = sld [smem:[#allocation0]]
  $region65: #{simclr_forward.3} parent=0
    _
  %s5 = ssub.s32 1, %s3
  %s6 = scalar_select 0, %s5, %s3
  loop: start=0, step=1, limit=10
  $region2: #{simclr_forward.3} parent=0 // loop_pre_header
    _
  $region3: #{simclr_forward.3} parent=0 // loop_header
    %s8 = sphi 0, %s12
    %p9 = scmp.ge.s32.totalorder %s8, 10
    %s15 = sphi 0, %s34
    %s16 = sphi 0, %s30
    %s17 = sphi 0, %s26
    %s18 = sphi 0, %s15
    %s19 = sphi 0, %s16
    %s20 = sphi 0, %s17
    %s21 = sphi 0, %s18
    %s22 = sphi 0, %s19
    %s23 = sphi 0, %s20
    %s37 = sphi 0, %s39
    %s40 = sphi 0, %s37
    %s41 = sphi 0, %s40
    %s57 = sphi 0, %s41
    %s61 = sphi 0, %s61
    %s63 = sphi 0, %s61
    %s64 = sphi 0, %s63
    %s78 = sphi 0, %s64
    %s82 = sphi 0, %s82
    %s84 = sphi 0, %s82
    %s85 = sphi 0, %s84
    %s99 = sphi 0, %s85
  $region4: #{simclr_forward.3} parent=0 // loop_header_branch
    %11 = sbr.rel (%p9) target = $region8
  $region5: #{simclr_forward.3} parent=0 // loop_body
    %s13 = ssub.s32 %s8, 1
    %s14 = ssub.s32 %s8, 2
    %s24 = sadd.s32 1, %s17
    %p25 = scmp.ge.s32.totalorder %s24, 2
    %s26 = scalar_select %p25, 0, %s24
    %s27 = sadd.s32 1, %s16
    %s28 = scalar_select %p25, %s27, %s16
    %p29 = scmp.ge.s32.totalorder %s28, 2
    %s30 = scalar_select %p29, 0, %s28
    %s31 = sadd.s32 1, %s15
    %s32 = scalar_select %p29, %s31, %s15
    %p33 = scmp.ge.s32.totalorder %s32, 2
    %s34 = scalar_select %p33, 0, %s32
    %s35 = ssub.s32 %s16, %s30
    %p36 = scmp.eq.s32.totalorder %s35, 0
    %s38 = sadd.s32 %s37, 1
    %s39 = scalar_select %p36, %s37, %s38
    %p42 = pneg %p36
    %p43 = scmp.eq.s32.totalorder %s8, 7
    %p44 = por %p42, %p43
    %p45 = scmp.ne.s32.totalorder %s37, %s40
    %p46 = scmp.eq.s32.totalorder %s8, 0
    %p47 = por %p45, %p46
    %p48 = scmp.ne.s32.totalorder %s37, %s40
    %p49 = scmp.eq.s32.totalorder %s13, 7
    %p50 = por %p48, %p49
    %p51 = scmp.ne.s32.totalorder %s40, %s41
    %p52 = scmp.eq.s32.totalorder %s13, 0
    %p53 = por %p51, %p52
    %p54 = scmp.ne.s32.totalorder %s40, %s41
    %p55 = scmp.eq.s32.totalorder %s14, 7
    %p56 = por %p54, %p55
    %p58 = scmp.ne.s32.totalorder %s41, %s57
    %p59 = scmp.eq.s32.totalorder %s14, 0
    %p60 = por %p58, %p59
    %s62 = sadd.s32 %s61, 1
    %p65 = scmp.eq.s32.totalorder %s8, 7
    %p66 = scmp.ne.s32.totalorder %s61, %s63
    %p67 = scmp.eq.s32.totalorder %s8, 0
    %p68 = por %p66, %p67
    %p69 = scmp.ne.s32.totalorder %s61, %s63
    %p70 = scmp.eq.s32.totalorder %s13, 7
    %p71 = por %p69, %p70
    %p72 = scmp.ne.s32.totalorder %s63, %s64
    %p73 = scmp.eq.s32.totalorder %s13, 0
    %p74 = por %p72, %p73
    %p75 = scmp.ne.s32.totalorder %s63, %s64
    %p76 = scmp.eq.s32.totalorder %s14, 7
    %p77 = por %p75, %p76
    %p79 = scmp.ne.s32.totalorder %s64, %s78
    %p80 = scmp.eq.s32.totalorder %s14, 0
    %p81 = por %p79, %p80
    %s83 = sadd.s32 %s82, 1
    %p86 = scmp.eq.s32.totalorder %s8, 7
    %p87 = scmp.ne.s32.totalorder %s82, %s84
    %p88 = scmp.eq.s32.totalorder %s8, 0
    %p89 = por %p87, %p88
    %p90 = scmp.ne.s32.totalorder %s82, %s84
    %p91 = scmp.eq.s32.totalorder %s13, 7
    %p92 = por %p90, %p91
    %p93 = scmp.ne.s32.totalorder %s84, %s85
    %p94 = scmp.eq.s32.totalorder %s13, 0
    %p95 = por %p93, %p94
    %p96 = scmp.ne.s32.totalorder %s84, %s85
    %p97 = scmp.eq.s32.totalorder %s14, 7
    %p98 = por %p96, %p97
    %p100 = scmp.ne.s32.totalorder %s85, %s99
    %p101 = scmp.eq.s32.totalorder %s14, 0
    %p102 = por %p100, %p101
    %p103 = scmp.le.s32.totalorder 1, %s8
    %p104 = scmp.lt.s32.totalorder %s8, 9
    %p105 = pnand %p103, %p104
    %p106 = pneg %p105
    // Predicated region
    $region9: #{simclr_forward.3} parent=5 // pred_check
      _
    $region10: #{simclr_forward.3} parent=5 // pred_check_branch
      %108 = sbr.rel (%p105) target = $region12
    $region11: #{simclr_forward.3} parent=5 // pred_region
      %s109 = ssub.s32 %s8, 1
      // Predicated region
      $region13: #{simclr_forward.3} parent=11 // pred_check
        %p110 = pneg %p74
      $region14: #{simclr_forward.3} parent=11 // pred_check_branch
        %112 = sbr.rel (%p110) target = $region16
      $region15: #{simclr_forward.3} parent=11 // pred_region
        _
      $region16: #{simclr_forward.3} parent=11 // pred_fallthru
        _
    $region12: #{simclr_forward.3} parent=5 // pred_fallthru
      _
    %p113 = scmp.lt.s32.totalorder %s8, 8
    // Predicated region
    $region17: #{simclr_forward.3} parent=5 // pred_check
      %p114 = pneg %p113
    $region18: #{simclr_forward.3} parent=5 // pred_check_branch
      %116 = sbr.rel (%p114) target = $region20
    $region19: #{simclr_forward.3} parent=5 // pred_region
      // Predicated region
      $region21: #{simclr_forward.3} parent=19 // pred_check
        %p117 = pneg %p47
      $region22: #{simclr_forward.3} parent=19 // pred_check_branch
        %119 = sbr.rel (%p117) target = $region24
      $region23: #{simclr_forward.3} parent=19 // pred_region
        %p120 = scmp.lt.s32.totalorder %s16, 1
        %s121 = scalar_select %p120, %s16, 1
        %s122 = smul.addr %s121, 32
        %s123 = smul.addr %s122, 4
        %s124 = scalar_lea.vmem %s0, %s123
      $region24: #{simclr_forward.3} parent=19 // pred_fallthru
        _
    $region20: #{simclr_forward.3} parent=5 // pred_fallthru
      _
    %p125 = scmp.le.s32.totalorder 1, %s8
    %p126 = scmp.lt.s32.totalorder %s8, 9
    %p127 = pnand %p125, %p126
    %p128 = pneg %p127
    // Predicated region
    $region25: #{simclr_forward.3} parent=5 // pred_check
      _
    $region26: #{simclr_forward.3} parent=5 // pred_check_branch
      %130 = sbr.rel (%p127) target = $region28
    $region27: #{simclr_forward.3} parent=5 // pred_region
      %s131 = ssub.s32 %s8, 1
      %p132 = scmp.lt.s32.totalorder %s19, 1
      %s133 = scalar_select %p132, %s19, 1
      %s134 = smul.addr %s133, 32
      %s135 = smul.addr %s134, 4
      %s136 = scalar_lea.vmem %s0, %s135
      %p137 = pneg %p53
      %p138 = pneg %p50
      %p139 = pneg %p74
      %p140 = pneg %p71
      %p141 = pneg %p95
      %p142 = pneg %p92
      %p143 = scmp.lt.s32.totalorder %s19, 1
      %s144 = scalar_select %p143, %s19, 1
      %s145 = smul.addr %s144, 32
      %s146 = smul.addr %s145, 4
      %s147 = scalar_lea.vmem %s0, %s146
      %p149 = scmp.eq.s32.totalorder %s18, 0
      %p150 = scmp.eq.s32.totalorder %s19, 0
      %p151 = pnand %p149, %p150
      %p152 = pneg %p151
      %p153 = scmp.eq.s32.totalorder %s20, 0
      %p154 = pnand %p152, %p153
      %p155 = pneg %p154
      // Predicated region
      $region29: #{simclr_forward.3} parent=27 // pred_check
        _
      $region30: #{simclr_forward.3} parent=27 // pred_check_branch
        %157 = sbr.rel (%p154) target = $region32
      $region31: #{simclr_forward.3} parent=27 // pred_region
        %vm158 = vcmask 27648
        %159 = vst.msk [vmem:[#allocation2] sm:$0xf] %vm158, 0
        %160 = vst.msk [vmem:[#allocation2 + $0x4] sm:$0xf] %vm158, 0
        %vm161 = vcmask 24576
        %162 = vst.msk [vmem:[#allocation2 + $0x8] sm:$0x1] %vm161, 0
        %163 = vst.msk [vmem:[#allocation2 + $0xc] sm:$0xf] %vm158, 0
        %164 = vst.msk [vmem:[#allocation2 + $0x10] sm:$0xf] %vm158, 0
        %165 = vst.msk [vmem:[#allocation2 + $0x14] sm:$0x1] %vm161, 0
        %166 = vst.msk [vmem:[#allocation2 + $0x18] sm:$0xf] %vm158, 0
        %167 = vst.msk [vmem:[#allocation2 + $0x1c] sm:$0xf] %vm158, 0
        %168 = vst.msk [vmem:[#allocation2 + $0x20] sm:$0x1] %vm161, 0
        %169 = vst.msk [vmem:[#allocation2 + $0x24] sm:$0xf] %vm158, 0
        %170 = vst.msk [vmem:[#allocation2 + $0x28] sm:$0xf] %vm158, 0
        %171 = vst.msk [vmem:[#allocation2 + $0x2c] sm:$0x1] %vm161, 0
        %172 = vst.msk [vmem:[#allocation2 + $0x30] sm:$0xf] %vm158, 0
        %173 = vst.msk [vmem:[#allocation2 + $0x34] sm:$0xf] %vm158, 0
        %174 = vst.msk [vmem:[#allocation2 + $0x38] sm:$0x1] %vm161, 0
        %175 = vst.msk [vmem:[#allocation2 + $0x3c] sm:$0xf] %vm158, 0
        %176 = vst.msk [vmem:[#allocation2 + $0x40] sm:$0xf] %vm158, 0
        %177 = vst.msk [vmem:[#allocation2 + $0x44] sm:$0x1] %vm161, 0
        %178 = vst.msk [vmem:[#allocation2 + $0x48] sm:$0xf] %vm158, 0
        %179 = vst.msk [vmem:[#allocation2 + $0x4c] sm:$0xf] %vm158, 0
        %180 = vst.msk [vmem:[#allocation2 + $0x50] sm:$0x1] %vm161, 0
        %181 = vst.msk [vmem:[#allocation2 + $0x54] sm:$0xf] %vm158, 0
        %182 = vst.msk [vmem:[#allocation2 + $0x58] sm:$0xf] %vm158, 0
        %183 = vst.msk [vmem:[#allocation2 + $0x5c] sm:$0x1] %vm161, 0
        %184 = vst.msk [vmem:[#allocation2 + $0x60] sm:$0xf] %vm158, 0
        %185 = vst.msk [vmem:[#allocation2 + $0x64] sm:$0xf] %vm158, 0
        %186 = vst.msk [vmem:[#allocation2 + $0x68] sm:$0x1] %vm161, 0
        %187 = vst.msk [vmem:[#allocation2 + $0x6c] sm:$0xf] %vm158, 0
        %188 = vst.msk [vmem:[#allocation2 + $0x70] sm:$0xf] %vm158, 0
        %189 = vst.msk [vmem:[#allocation2 + $0x74] sm:$0x1] %vm161, 0
        %190 = vst.msk [vmem:[#allocation2 + $0x78] sm:$0xf] %vm158, 0
        %191 = vst.msk [vmem:[#allocation2 + $0x7c] sm:$0xf] %vm158, 0
        %192 = vst.msk [vmem:[#allocation2 + $0x80] sm:$0x1] %vm161, 0
        %193 = vst.msk [vmem:[#allocation2 + $0x84] sm:$0xf] %vm158, 0
        %194 = vst.msk [vmem:[#allocation2 + $0x88] sm:$0xf] %vm158, 0
        %195 = vst.msk [vmem:[#allocation2 + $0x8c] sm:$0x1] %vm161, 0
        %196 = vst.msk [vmem:[#allocation2 + $0x90] sm:$0xf] %vm158, 0
        %197 = vst.msk [vmem:[#allocation2 + $0x94] sm:$0xf] %vm158, 0
        %198 = vst.msk [vmem:[#allocation2 + $0x98] sm:$0x1] %vm161, 0
        %199 = vst.msk [vmem:[#allocation2 + $0x9c] sm:$0xf] %vm158, 0
        %200 = vst.msk [vmem:[#allocation2 + $0xa0] sm:$0xf] %vm158, 0
        %201 = vst.msk [vmem:[#allocation2 + $0xa4] sm:$0x1] %vm161, 0
        %202 = vst.msk [vmem:[#allocation2 + $0xa8] sm:$0xf] %vm158, 0
        %203 = vst.msk [vmem:[#allocation2 + $0xac] sm:$0xf] %vm158, 0
        %204 = vst.msk [vmem:[#allocation2 + $0xb0] sm:$0x1] %vm161, 0
        %205 = vst.msk [vmem:[#allocation2 + $0xb4] sm:$0xf] %vm158, 0
        %206 = vst.msk [vmem:[#allocation2 + $0xb8] sm:$0xf] %vm158, 0
        %207 = vst.msk [vmem:[#allocation2 + $0xbc] sm:$0x1] %vm161, 0
        %208 = vst.msk [vmem:[#allocation2 + $0xc0] sm:$0xf] %vm158, 0
        %209 = vst.msk [vmem:[#allocation2 + $0xc4] sm:$0xf] %vm158, 0
        %210 = vst.msk [vmem:[#allocation2 + $0xc8] sm:$0x1] %vm161, 0
        %211 = vst.msk [vmem:[#allocation2 + $0xcc] sm:$0xf] %vm158, 0
        %212 = vst.msk [vmem:[#allocation2 + $0xd0] sm:$0xf] %vm158, 0
        %213 = vst.msk [vmem:[#allocation2 + $0xd4] sm:$0x1] %vm161, 0
        %214 = vst [vmem:[#allocation4] sm:$0x1] 0.0
        %215 = vst [vmem:[#allocation5] sm:$0x1] 0.0
      $region32: #{simclr_forward.3} parent=27 // pred_fallthru
        _
      // Predicated region
      $region33: #{simclr_forward.3} parent=27 // pred_check
        %p216 = pneg %p153
      $region34: #{simclr_forward.3} parent=27 // pred_check_branch
        %218 = sbr.rel (%p216) target = $region36
      $region35: #{simclr_forward.3} parent=27 // pred_region
        %v219 = vld [vmem:[%s147] sm:$0xf]
        %v220 = vld [vmem:[%s147 + $0x4] sm:$0xf]
        %v221 = vld [vmem:[%s147 + $0x8] sm:$0xf]
        %v222 = vld [vmem:[%s147 + $0xc] sm:$0xf]
        %v223 = vld [vmem:[%s147 + $0x10] sm:$0xf]
        %v224 = vld [vmem:[%s147 + $0x14] sm:$0xf]
        %v225 = vld [vmem:[%s147 + $0x18] sm:$0xf]
        %v226 = vld [vmem:[%s147 + $0x1c] sm:$0xf]
        %v227 = vld [vmem:[%s147 + $0x20] sm:$0xf]
        %v228 = vld [vmem:[%s147 + $0x24] sm:$0xf]
        %v229 = vld [vmem:[%s147 + $0x28] sm:$0xf]
        %v230 = vld [vmem:[%s147 + $0x2c] sm:$0xf]
        %v231 = vld [vmem:[%s147 + $0x30] sm:$0xf]
        %v232 = vld [vmem:[%s147 + $0x34] sm:$0xf]
        %v233 = vld [vmem:[%s147 + $0x38] sm:$0xf]
        %v234 = vld [vmem:[%s147 + $0x3c] sm:$0xf]
        %v235 = vld [vmem:[%s147 + $0x40] sm:$0xf]
        %v236 = vld [vmem:[%s147 + $0x44] sm:$0xf]
        %v237 = vld [vmem:[%s147 + $0x48] sm:$0xf]
        %v238 = vld [vmem:[%s147 + $0x4c] sm:$0xf]
        %v239 = vld [vmem:[%s147 + $0x50] sm:$0xf]
        %v240 = vld [vmem:[%s147 + $0x54] sm:$0xf]
        %v241 = vld [vmem:[%s147 + $0x58] sm:$0xf]
        %v242 = vld [vmem:[%s147 + $0x5c] sm:$0xf]
        %v243 = vld [vmem:[%s147 + $0x60] sm:$0xf]
        %v244 = vld [vmem:[%s147 + $0x64] sm:$0xf]
        %v245 = vld [vmem:[%s147 + $0x68] sm:$0xf]
        %v246 = vld [vmem:[%s147 + $0x6c] sm:$0xf]
        %v247 = vld [vmem:[%s147 + $0x70] sm:$0xf]
        %v248 = vld [vmem:[%s147 + $0x74] sm:$0xf]
        %v249 = vld [vmem:[%s147 + $0x78] sm:$0xf]
        %v250 = vld [vmem:[%s147 + $0x7c] sm:$0xf]
        %vm251 = vsmask.f32 256
        %vm252 = vsmask.f32 4368
        %vm253 = vmor %vm251, %vm252
        %v255 = vshrl.u32 %v219, 16
        %v257 = vrot.slane %v255, 7
        %v258 = vshll.u32 %v219, 16
        %v260 = vor.u32 %v257, %v258
        %v261 = vrot.slane %v257, 4
        %v263 = vshrl.u32 %v220, 16
        %v265 = vrot.slane %v263, 7
        %v266 = vshll.u32 %v220, 16
        %v268 = vor.u32 %v265, %v266
        %v269 = vsel %vm253, %v261, %v268
        %v270 = vrot.slane %v265, 4
        %v272 = vshrl.u32 %v221, 16
        %v274 = vrot.slane %v272, 7
        %v275 = vshll.u32 %v221, 16
        %v277 = vor.u32 %v274, %v275
        %v278 = vrot.slane %v274, 4
        %v280 = vshrl.u32 %v222, 16
        %v282 = vrot.slane %v280, 7
        %v283 = vshll.u32 %v222, 16
        %v285 = vor.u32 %v282, %v283
        %v286 = vsel %vm253, %v278, %v285
        %v287 = vrot.slane %v282, 4
        %v289 = vshrl.u32 %v223, 16
        %v291 = vrot.slane %v289, 7
        %v292 = vshll.u32 %v223, 16
        %v294 = vor.u32 %v291, %v292
        %v295 = vrot.slane %v291, 4
        %v297 = vshrl.u32 %v224, 16
        %v299 = vrot.slane %v297, 7
        %v300 = vshll.u32 %v224, 16
        %v302 = vor.u32 %v299, %v300
        %v303 = vsel %vm253, %v295, %v302
        %v304 = vrot.slane %v299, 4
        %v306 = vshrl.u32 %v225, 16
        %v308 = vrot.slane %v306, 7
        %v309 = vshll.u32 %v225, 16
        %v311 = vor.u32 %v308, %v309
        %v312 = vrot.slane %v308, 4
        %v314 = vshrl.u32 %v226, 16
        %v316 = vrot.slane %v314, 7
        %v317 = vshll.u32 %v226, 16
        %v319 = vor.u32 %v316, %v317
        %v320 = vsel %vm253, %v312, %v319
        %v321 = vrot.slane %v316, 4
        %v323 = vshrl.u32 %v227, 16
        %v325 = vrot.slane %v323, 7
        %v326 = vshll.u32 %v227, 16
        %v328 = vor.u32 %v325, %v326
        %v329 = vrot.slane %v325, 4
        %v331 = vshrl.u32 %v228, 16
        %v333 = vrot.slane %v331, 7
        %v334 = vshll.u32 %v228, 16
        %v336 = vor.u32 %v333, %v334
        %v337 = vsel %vm253, %v329, %v336
        %v338 = vrot.slane %v333, 4
        %v340 = vshrl.u32 %v229, 16
        %v342 = vrot.slane %v340, 7
        %v343 = vshll.u32 %v229, 16
        %v345 = vor.u32 %v342, %v343
        %v346 = vrot.slane %v342, 4
        %v348 = vshrl.u32 %v230, 16
        %v350 = vrot.slane %v348, 7
        %v351 = vshll.u32 %v230, 16
        %v353 = vor.u32 %v350, %v351
        %v354 = vsel %vm253, %v346, %v353
        %v355 = vrot.slane %v350, 4
        %v357 = vshrl.u32 %v231, 16
        %v359 = vrot.slane %v357, 7
        %v360 = vshll.u32 %v231, 16
        %v362 = vor.u32 %v359, %v360
        %v363 = vrot.slane %v359, 4
        %v365 = vshrl.u32 %v232, 16
        %v367 = vrot.slane %v365, 7
        %v368 = vshll.u32 %v232, 16
        %v370 = vor.u32 %v367, %v368
        %v371 = vsel %vm253, %v363, %v370
        %v372 = vrot.slane %v367, 4
        %v374 = vshrl.u32 %v233, 16
        %v376 = vrot.slane %v374, 7
        %v377 = vshll.u32 %v233, 16
        %v379 = vor.u32 %v376, %v377
        %v380 = vrot.slane %v376, 4
        %v382 = vshrl.u32 %v234, 16
        %v384 = vrot.slane %v382, 7
        %v385 = vshll.u32 %v234, 16
        %v387 = vor.u32 %v384, %v385
        %v388 = vsel %vm253, %v380, %v387
        %v389 = vrot.slane %v384, 4
        %v391 = vshrl.u32 %v235, 16
        %v393 = vrot.slane %v391, 7
        %v394 = vshll.u32 %v235, 16
        %v396 = vor.u32 %v393, %v394
        %v397 = vrot.slane %v393, 4
        %v399 = vshrl.u32 %v236, 16
        %v401 = vrot.slane %v399, 7
        %v402 = vshll.u32 %v236, 16
        %v404 = vor.u32 %v401, %v402
        %v405 = vsel %vm253, %v397, %v404
        %v406 = vrot.slane %v401, 4
        %v408 = vshrl.u32 %v237, 16
        %v410 = vrot.slane %v408, 7
        %v411 = vshll.u32 %v237, 16
        %v413 = vor.u32 %v410, %v411
        %v414 = vrot.slane %v410, 4
        %v416 = vshrl.u32 %v238, 16
        %v418 = vrot.slane %v416, 7
        %v419 = vshll.u32 %v238, 16
        %v421 = vor.u32 %v418, %v419
        %v422 = vsel %vm253, %v414, %v421
        %v423 = vrot.slane %v418, 4
        %v425 = vshrl.u32 %v239, 16
        %v427 = vrot.slane %v425, 7
        %v428 = vshll.u32 %v239, 16
        %v430 = vor.u32 %v427, %v428
        %v431 = vrot.slane %v427, 4
        %v433 = vshrl.u32 %v240, 16
        %v435 = vrot.slane %v433, 7
        %v436 = vshll.u32 %v240, 16
        %v438 = vor.u32 %v435, %v436
        %v439 = vsel %vm253, %v431, %v438
        %v440 = vrot.slane %v435, 4
        %v442 = vshrl.u32 %v241, 16
        %v444 = vrot.slane %v442, 7
        %v445 = vshll.u32 %v241, 16
        %v447 = vor.u32 %v444, %v445
        %v448 = vrot.slane %v444, 4
        %v450 = vshrl.u32 %v242, 16
        %v452 = vrot.slane %v450, 7
        %v453 = vshll.u32 %v242, 16
        %v455 = vor.u32 %v452, %v453
        %v456 = vsel %vm253, %v448, %v455
        %v457 = vrot.slane %v452, 4
        %v459 = vshrl.u32 %v243, 16
        %v461 = vrot.slane %v459, 7
        %v462 = vshll.u32 %v243, 16
        %v464 = vor.u32 %v461, %v462
        %v465 = vrot.slane %v461, 4
        %v467 = vshrl.u32 %v244, 16
        %v469 = vrot.slane %v467, 7
        %v470 = vshll.u32 %v244, 16
        %v472 = vor.u32 %v469, %v470
        %v473 = vsel %vm253, %v465, %v472
        %v474 = vrot.slane %v469, 4
        %v476 = vshrl.u32 %v245, 16
        %v478 = vrot.slane %v476, 7
        %v479 = vshll.u32 %v245, 16
        %v481 = vor.u32 %v478, %v479
        %v482 = vrot.slane %v478, 4
        %v484 = vshrl.u32 %v246, 16
        %v486 = vrot.slane %v484, 7
        %v487 = vshll.u32 %v246, 16
        %v489 = vor.u32 %v486, %v487
        %v490 = vsel %vm253, %v482, %v489
        %v491 = vrot.slane %v486, 4
        %v493 = vshrl.u32 %v247, 16
        %v495 = vrot.slane %v493, 7
        %v496 = vshll.u32 %v247, 16
        %v498 = vor.u32 %v495, %v496
        %v499 = vrot.slane %v495, 4
        %v501 = vshrl.u32 %v248, 16
        %v503 = vrot.slane %v501, 7
        %v504 = vshll.u32 %v248, 16
        %v506 = vor.u32 %v503, %v504
        %v507 = vsel %vm253, %v499, %v506
        %v508 = vrot.slane %v503, 4
        %v510 = vshrl.u32 %v249, 16
        %v512 = vrot.slane %v510, 7
        %v513 = vshll.u32 %v249, 16
        %v515 = vor.u32 %v512, %v513
        %v516 = vrot.slane %v512, 4
        %v518 = vshrl.u32 %v250, 16
        %v520 = vrot.slane %v518, 7
        %v521 = vshll.u32 %v250, 16
        %v523 = vor.u32 %v520, %v521
        %v524 = vsel %vm253, %v516, %v523
        %v525 = vrot.slane %v520, 4
        %s574 = scalar_lea.vmem [#allocation2], 12
        %vm575 = vcmask 27648
        %vm576 = vsmask.f32 7938
        %vm577 = vmand %vm575, %vm576
        %v578 = vld [vmem:[%s574] sm:$0xf]
        %v579 = vsel %vm577, %v260, %v578
        %580 = vst [vmem:[%s574] sm:$0xf] %v579
        %vm581 = vcmask 27648
        %582 = vst.msk [vmem:[%s574 + $0x4] sm:$0xf] %vm581, %v269
        %vm583 = vcmask 24576
        %vm584 = vmand %vm583, %vm251
        %v585 = vld [vmem:[%s574 + $0x8] sm:$0x1]
        %v586 = vsel %vm584, %v270, %v585
        %587 = vst [vmem:[%s574 + $0x8] sm:$0x1] %v586
        %v588 = vld [vmem:[%s574 + $0xc] sm:$0xf]
        %v589 = vsel %vm577, %v277, %v588
        %590 = vst [vmem:[%s574 + $0xc] sm:$0xf] %v589
        %591 = vst.msk [vmem:[%s574 + $0x10] sm:$0xf] %vm581, %v286
        %v592 = vld [vmem:[%s574 + $0x14] sm:$0x1]
        %v593 = vsel %vm584, %v287, %v592
        %594 = vst [vmem:[%s574 + $0x14] sm:$0x1] %v593
        %v595 = vld [vmem:[%s574 + $0x18] sm:$0xf]
        %v596 = vsel %vm577, %v294, %v595
        %597 = vst [vmem:[%s574 + $0x18] sm:$0xf] %v596
        %598 = vst.msk [vmem:[%s574 + $0x1c] sm:$0xf] %vm581, %v303
        %v599 = vld [vmem:[%s574 + $0x20] sm:$0x1]
        %v600 = vsel %vm584, %v304, %v599
        %601 = vst [vmem:[%s574 + $0x20] sm:$0x1] %v600
        %v602 = vld [vmem:[%s574 + $0x24] sm:$0xf]
        %v603 = vsel %vm577, %v311, %v602
        %604 = vst [vmem:[%s574 + $0x24] sm:$0xf] %v603
        %605 = vst.msk [vmem:[%s574 + $0x28] sm:$0xf] %vm581, %v320
        %v606 = vld [vmem:[%s574 + $0x2c] sm:$0x1]
        %v607 = vsel %vm584, %v321, %v606
        %608 = vst [vmem:[%s574 + $0x2c] sm:$0x1] %v607
        %v609 = vld [vmem:[%s574 + $0x30] sm:$0xf]
        %v610 = vsel %vm577, %v328, %v609
        %611 = vst [vmem:[%s574 + $0x30] sm:$0xf] %v610
        %612 = vst.msk [vmem:[%s574 + $0x34] sm:$0xf] %vm581, %v337
        %v613 = vld [vmem:[%s574 + $0x38] sm:$0x1]
        %v614 = vsel %vm584, %v338, %v613
        %615 = vst [vmem:[%s574 + $0x38] sm:$0x1] %v614
        %v616 = vld [vmem:[%s574 + $0x3c] sm:$0xf]
        %v617 = vsel %vm577, %v345, %v616
        %618 = vst [vmem:[%s574 + $0x3c] sm:$0xf] %v617
        %619 = vst.msk [vmem:[%s574 + $0x40] sm:$0xf] %vm581, %v354
        %v620 = vld [vmem:[%s574 + $0x44] sm:$0x1]
        %v621 = vsel %vm584, %v355, %v620
        %622 = vst [vmem:[%s574 + $0x44] sm:$0x1] %v621
        %v623 = vld [vmem:[%s574 + $0x48] sm:$0xf]
        %v624 = vsel %vm577, %v362, %v623
        %625 = vst [vmem:[%s574 + $0x48] sm:$0xf] %v624
        %626 = vst.msk [vmem:[%s574 + $0x4c] sm:$0xf] %vm581, %v371
        %v627 = vld [vmem:[%s574 + $0x50] sm:$0x1]
        %v628 = vsel %vm584, %v372, %v627
        %629 = vst [vmem:[%s574 + $0x50] sm:$0x1] %v628
        %v630 = vld [vmem:[%s574 + $0x54] sm:$0xf]
        %v631 = vsel %vm577, %v379, %v630
        %632 = vst [vmem:[%s574 + $0x54] sm:$0xf] %v631
        %633 = vst.msk [vmem:[%s574 + $0x58] sm:$0xf] %vm581, %v388
        %v634 = vld [vmem:[%s574 + $0x5c] sm:$0x1]
        %v635 = vsel %vm584, %v389, %v634
        %636 = vst [vmem:[%s574 + $0x5c] sm:$0x1] %v635
        %v637 = vld [vmem:[%s574 + $0x60] sm:$0xf]
        %v638 = vsel %vm577, %v396, %v637
        %639 = vst [vmem:[%s574 + $0x60] sm:$0xf] %v638
        %640 = vst.msk [vmem:[%s574 + $0x64] sm:$0xf] %vm581, %v405
        %v641 = vld [vmem:[%s574 + $0x68] sm:$0x1]
        %v642 = vsel %vm584, %v406, %v641
        %643 = vst [vmem:[%s574 + $0x68] sm:$0x1] %v642
        %v644 = vld [vmem:[%s574 + $0x6c] sm:$0xf]
        %v645 = vsel %vm577, %v413, %v644
        %646 = vst [vmem:[%s574 + $0x6c] sm:$0xf] %v645
        %647 = vst.msk [vmem:[%s574 + $0x70] sm:$0xf] %vm581, %v422
        %v648 = vld [vmem:[%s574 + $0x74] sm:$0x1]
        %v649 = vsel %vm584, %v423, %v648
        %650 = vst [vmem:[%s574 + $0x74] sm:$0x1] %v649
        %v651 = vld [vmem:[%s574 + $0x78] sm:$0xf]
        %v652 = vsel %vm577, %v430, %v651
        %653 = vst [vmem:[%s574 + $0x78] sm:$0xf] %v652
        %654 = vst.msk [vmem:[%s574 + $0x7c] sm:$0xf] %vm581, %v439
        %v655 = vld [vmem:[%s574 + $0x80] sm:$0x1]
        %v656 = vsel %vm584, %v440, %v655
        %657 = vst [vmem:[%s574 + $0x80] sm:$0x1] %v656
        %v658 = vld [vmem:[%s574 + $0x84] sm:$0xf]
        %v659 = vsel %vm577, %v447, %v658
        %660 = vst [vmem:[%s574 + $0x84] sm:$0xf] %v659
        %661 = vst.msk [vmem:[%s574 + $0x88] sm:$0xf] %vm581, %v456
        %v662 = vld [vmem:[%s574 + $0x8c] sm:$0x1]
        %v663 = vsel %vm584, %v457, %v662
        %664 = vst [vmem:[%s574 + $0x8c] sm:$0x1] %v663
        %v665 = vld [vmem:[%s574 + $0x90] sm:$0xf]
        %v666 = vsel %vm577, %v464, %v665
        %667 = vst [vmem:[%s574 + $0x90] sm:$0xf] %v666
        %668 = vst.msk [vmem:[%s574 + $0x94] sm:$0xf] %vm581, %v473
        %v669 = vld [vmem:[%s574 + $0x98] sm:$0x1]
        %v670 = vsel %vm584, %v474, %v669
        %671 = vst [vmem:[%s574 + $0x98] sm:$0x1] %v670
        %v672 = vld [vmem:[%s574 + $0x9c] sm:$0xf]
        %v673 = vsel %vm577, %v481, %v672
        %674 = vst [vmem:[%s574 + $0x9c] sm:$0xf] %v673
        %675 = vst.msk [vmem:[%s574 + $0xa0] sm:$0xf] %vm581, %v490
        %v676 = vld [vmem:[%s574 + $0xa4] sm:$0x1]
        %v677 = vsel %vm584, %v491, %v676
        %678 = vst [vmem:[%s574 + $0xa4] sm:$0x1] %v677
        %v679 = vld [vmem:[%s574 + $0xa8] sm:$0xf]
        %v680 = vsel %vm577, %v498, %v679
        %681 = vst [vmem:[%s574 + $0xa8] sm:$0xf] %v680
        %682 = vst.msk [vmem:[%s574 + $0xac] sm:$0xf] %vm581, %v507
        %v683 = vld [vmem:[%s574 + $0xb0] sm:$0x1]
        %v684 = vsel %vm584, %v508, %v683
        %685 = vst [vmem:[%s574 + $0xb0] sm:$0x1] %v684
        %v686 = vld [vmem:[%s574 + $0xb4] sm:$0xf]
        %v687 = vsel %vm577, %v515, %v686
        %688 = vst [vmem:[%s574 + $0xb4] sm:$0xf] %v687
        %689 = vst.msk [vmem:[%s574 + $0xb8] sm:$0xf] %vm581, %v524
        %v690 = vld [vmem:[%s574 + $0xbc] sm:$0x1]
        %v691 = vsel %vm584, %v525, %v690
        %692 = vst [vmem:[%s574 + $0xbc] sm:$0x1] %v691
      $region36: #{simclr_forward.3} parent=27 // pred_fallthru
        _
      %s693 = smul.u32 %s20, 8
      %s694 = smul.u32 %s693, 3
      %s695 = smul.addr %s694, 4
      %s696 = scalar_lea.vmem [#allocation2], %s695
      %v697 = vld [vmem:[%s696] sm:$0xf]
      %v698 = vld [vmem:[%s696 + $0x4] sm:$0xf]
      %v699 = vld [vmem:[%s696 + $0xc] sm:$0xf]
      %v700 = vld [vmem:[%s696 + $0x10] sm:$0xf]
      %v701 = vld [vmem:[%s696 + $0x18] sm:$0xf]
      %v702 = vld [vmem:[%s696 + $0x1c] sm:$0xf]
      %v703 = vld [vmem:[%s696 + $0x24] sm:$0xf]
      %v704 = vld [vmem:[%s696 + $0x28] sm:$0xf]
      %v705 = vld [vmem:[%s696 + $0x30] sm:$0xf]
      %v706 = vld [vmem:[%s696 + $0x34] sm:$0xf]
      %v707 = vld [vmem:[%s696 + $0x3c] sm:$0xf]
      %v708 = vld [vmem:[%s696 + $0x40] sm:$0xf]
      %v709 = vld [vmem:[%s696 + $0x48] sm:$0xf]
      %v710 = vld [vmem:[%s696 + $0x4c] sm:$0xf]
      %v711 = vld [vmem:[%s696 + $0x54] sm:$0xf]
      %v712 = vld [vmem:[%s696 + $0x58] sm:$0xf]
      %vm713 = vcmask 27648
      %714 = vst.msk [vmem:[#allocation3] sm:$0xf] %vm713, %v697
      %715 = vst.msk [vmem:[#allocation3 + $0x4] sm:$0xf] %vm713, %v698
      %716 = vst.msk [vmem:[#allocation3 + $0x8] sm:$0xf] %vm713, %v699
      %717 = vst.msk [vmem:[#allocation3 + $0xc] sm:$0xf] %vm713, %v700
      %718 = vst.msk [vmem:[#allocation3 + $0x10] sm:$0xf] %vm713, %v701
      %719 = vst.msk [vmem:[#allocation3 + $0x14] sm:$0xf] %vm713, %v702
      %720 = vst.msk [vmem:[#allocation3 + $0x18] sm:$0xf] %vm713, %v703
      %721 = vst.msk [vmem:[#allocation3 + $0x1c] sm:$0xf] %vm713, %v704
      %722 = vst.msk [vmem:[#allocation3 + $0x20] sm:$0xf] %vm713, %v705
      %723 = vst.msk [vmem:[#allocation3 + $0x24] sm:$0xf] %vm713, %v706
      %724 = vst.msk [vmem:[#allocation3 + $0x28] sm:$0xf] %vm713, %v707
      %725 = vst.msk [vmem:[#allocation3 + $0x2c] sm:$0xf] %vm713, %v708
      %726 = vst.msk [vmem:[#allocation3 + $0x30] sm:$0xf] %vm713, %v709
      %727 = vst.msk [vmem:[#allocation3 + $0x34] sm:$0xf] %vm713, %v710
      %728 = vst.msk [vmem:[#allocation3 + $0x38] sm:$0xf] %vm713, %v711
      %729 = vst.msk [vmem:[#allocation3 + $0x3c] sm:$0xf] %vm713, %v712
      %v730 = vld [vmem:[%s696] sm:$0xf]
      %v731 = vld [vmem:[%s696 + $0x4] sm:$0xf]
      %v732 = vld [vmem:[%s696 + $0x8] sm:$0x1]
      %v733 = vld [vmem:[%s696 + $0xc] sm:$0xf]
      %v734 = vld [vmem:[%s696 + $0x10] sm:$0xf]
      %v735 = vld [vmem:[%s696 + $0x14] sm:$0x1]
      %v736 = vld [vmem:[%s696 + $0x18] sm:$0xf]
      %v737 = vld [vmem:[%s696 + $0x1c] sm:$0xf]
      %v738 = vld [vmem:[%s696 + $0x20] sm:$0x1]
      %v739 = vld [vmem:[%s696 + $0x24] sm:$0xf]
      %v740 = vld [vmem:[%s696 + $0x28] sm:$0xf]
      %v741 = vld [vmem:[%s696 + $0x2c] sm:$0x1]
      %v742 = vld [vmem:[%s696 + $0x30] sm:$0xf]
      %v743 = vld [vmem:[%s696 + $0x34] sm:$0xf]
      %v744 = vld [vmem:[%s696 + $0x38] sm:$0x1]
      %v745 = vld [vmem:[%s696 + $0x3c] sm:$0xf]
      %v746 = vld [vmem:[%s696 + $0x40] sm:$0xf]
      %v747 = vld [vmem:[%s696 + $0x44] sm:$0x1]
      %v748 = vld [vmem:[%s696 + $0x48] sm:$0xf]
      %v749 = vld [vmem:[%s696 + $0x4c] sm:$0xf]
      %v750 = vld [vmem:[%s696 + $0x50] sm:$0x1]
      %v751 = vld [vmem:[%s696 + $0x54] sm:$0xf]
      %v752 = vld [vmem:[%s696 + $0x58] sm:$0xf]
      %v753 = vld [vmem:[%s696 + $0x5c] sm:$0x1]
      %vm754 = vsmask.f32 3328
      %vm755 = vsmask.f32 7440
      %vm756 = vmor %vm754, %vm755
      %v758 = vshrl.u32 %v730, 16
      %v760 = vrot.slane %v758, 4
      %v761 = vshll.u32 %v730, 16
      %v763 = vrot.slane %v761, 5
      %v764 = vor.u32 %v760, %v763
      %v765 = vrot.slane %v764, 4
      %v767 = vshll.u32 %v731, 16
      %v769 = vrot.slane %v767, 5
      %v770 = vsel %vm756, %v765, %v769
      %v771 = vshrl.u32 %v731, 16
      %v773 = vrot.slane %v771, 4
      %v774 = vor.u32 %v773, %v769
      %v775 = vrot.slane %v774, 4
      %v777 = vshll.u32 %v732, 16
      %v779 = vrot.slane %v777, 5
      %v780 = vsel %vm756, %v775, %v779
      %v782 = vshrl.u32 %v733, 16
      %v784 = vrot.slane %v782, 4
      %v785 = vshll.u32 %v733, 16
      %v787 = vrot.slane %v785, 5
      %v788 = vor.u32 %v784, %v787
      %v789 = vrot.slane %v788, 4
      %v791 = vshll.u32 %v734, 16
      %v793 = vrot.slane %v791, 5
      %v794 = vsel %vm756, %v789, %v793
      %v795 = vshrl.u32 %v734, 16
      %v797 = vrot.slane %v795, 4
      %v798 = vor.u32 %v797, %v793
      %v799 = vrot.slane %v798, 4
      %v801 = vshll.u32 %v735, 16
      %v803 = vrot.slane %v801, 5
      %v804 = vsel %vm756, %v799, %v803
      %v806 = vshrl.u32 %v736, 16
      %v808 = vrot.slane %v806, 4
      %v809 = vshll.u32 %v736, 16
      %v811 = vrot.slane %v809, 5
      %v812 = vor.u32 %v808, %v811
      %v813 = vrot.slane %v812, 4
      %v815 = vshll.u32 %v737, 16
      %v817 = vrot.slane %v815, 5
      %v818 = vsel %vm756, %v813, %v817
      %v819 = vshrl.u32 %v737, 16
      %v821 = vrot.slane %v819, 4
      %v822 = vor.u32 %v821, %v817
      %v823 = vrot.slane %v822, 4
      %v825 = vshll.u32 %v738, 16
      %v827 = vrot.slane %v825, 5
      %v828 = vsel %vm756, %v823, %v827
      %v830 = vshrl.u32 %v739, 16
      %v832 = vrot.slane %v830, 4
      %v833 = vshll.u32 %v739, 16
      %v835 = vrot.slane %v833, 5
      %v836 = vor.u32 %v832, %v835
      %v837 = vrot.slane %v836, 4
      %v839 = vshll.u32 %v740, 16
      %v841 = vrot.slane %v839, 5
      %v842 = vsel %vm756, %v837, %v841
      %v843 = vshrl.u32 %v740, 16
      %v845 = vrot.slane %v843, 4
      %v846 = vor.u32 %v845, %v841
      %v847 = vrot.slane %v846, 4
      %v849 = vshll.u32 %v741, 16
      %v851 = vrot.slane %v849, 5
      %v852 = vsel %vm756, %v847, %v851
      %v854 = vshrl.u32 %v742, 16
      %v856 = vrot.slane %v854, 4
      %v857 = vshll.u32 %v742, 16
      %v859 = vrot.slane %v857, 5
      %v860 = vor.u32 %v856, %v859
      %v861 = vrot.slane %v860, 4
      %v863 = vshll.u32 %v743, 16
      %v865 = vrot.slane %v863, 5
      %v866 = vsel %vm756, %v861, %v865
      %v867 = vshrl.u32 %v743, 16
      %v869 = vrot.slane %v867, 4
      %v870 = vor.u32 %v869, %v865
      %v871 = vrot.slane %v870, 4
      %v873 = vshll.u32 %v744, 16
      %v875 = vrot.slane %v873, 5
      %v876 = vsel %vm756, %v871, %v875
      %v878 = vshrl.u32 %v745, 16
      %v880 = vrot.slane %v878, 4
      %v881 = vshll.u32 %v745, 16
      %v883 = vrot.slane %v881, 5
      %v884 = vor.u32 %v880, %v883
      %v885 = vrot.slane %v884, 4
      %v887 = vshll.u32 %v746, 16
      %v889 = vrot.slane %v887, 5
      %v890 = vsel %vm756, %v885, %v889
      %v891 = vshrl.u32 %v746, 16
      %v893 = vrot.slane %v891, 4
      %v894 = vor.u32 %v893, %v889
      %v895 = vrot.slane %v894, 4
      %v897 = vshll.u32 %v747, 16
      %v899 = vrot.slane %v897, 5
      %v900 = vsel %vm756, %v895, %v899
      %v902 = vshrl.u32 %v748, 16
      %v904 = vrot.slane %v902, 4
      %v905 = vshll.u32 %v748, 16
      %v907 = vrot.slane %v905, 5
      %v908 = vor.u32 %v904, %v907
      %v909 = vrot.slane %v908, 4
      %v911 = vshll.u32 %v749, 16
      %v913 = vrot.slane %v911, 5
      %v914 = vsel %vm756, %v909, %v913
      %v915 = vshrl.u32 %v749, 16
      %v917 = vrot.slane %v915, 4
      %v918 = vor.u32 %v917, %v913
      %v919 = vrot.slane %v918, 4
      %v921 = vshll.u32 %v750, 16
      %v923 = vrot.slane %v921, 5
      %v924 = vsel %vm756, %v919, %v923
      %v926 = vshrl.u32 %v751, 16
      %v928 = vrot.slane %v926, 4
      %v929 = vshll.u32 %v751, 16
      %v931 = vrot.slane %v929, 5
      %v932 = vor.u32 %v928, %v931
      %v933 = vrot.slane %v932, 4
      %v935 = vshll.u32 %v752, 16
      %v937 = vrot.slane %v935, 5
      %v938 = vsel %vm756, %v933, %v937
      %v939 = vshrl.u32 %v752, 16
      %v941 = vrot.slane %v939, 4
      %v942 = vor.u32 %v941, %v937
      %v943 = vrot.slane %v942, 4
      %v945 = vshll.u32 %v753, 16
      %v947 = vrot.slane %v945, 5
      %v948 = vsel %vm756, %v943, %v947
      %949 = vrot.lane.b32.xlu0 %v770, 4
      %v950 = vpop.permute.xlu0 %949
      %951 = vrot.lane.b32.xlu0 %v780, 4
      %v952 = vpop.permute.xlu0 %951
      %953 = vrot.lane.b32.xlu0 %v794, 4
      %v954 = vpop.permute.xlu0 %953
      %955 = vrot.lane.b32.xlu0 %v804, 4
      %v956 = vpop.permute.xlu0 %955
      %957 = vrot.lane.b32.xlu0 %v818, 4
      %v958 = vpop.permute.xlu0 %957
      %959 = vrot.lane.b32.xlu0 %v828, 4
      %v960 = vpop.permute.xlu0 %959
      %961 = vrot.lane.b32.xlu0 %v842, 4
      %v962 = vpop.permute.xlu0 %961
      %963 = vrot.lane.b32.xlu0 %v852, 4
      %v964 = vpop.permute.xlu0 %963
      %965 = vrot.lane.b32.xlu0 %v866, 4
      %v966 = vpop.permute.xlu0 %965
      %967 = vrot.lane.b32.xlu0 %v876, 4
      %v968 = vpop.permute.xlu0 %967
      %969 = vrot.lane.b32.xlu0 %v890, 4
      %v970 = vpop.permute.xlu0 %969
      %971 = vrot.lane.b32.xlu0 %v900, 4
      %v972 = vpop.permute.xlu0 %971
      %973 = vrot.lane.b32.xlu0 %v914, 4
      %v974 = vpop.permute.xlu0 %973
      %975 = vrot.lane.b32.xlu0 %v924, 4
      %v976 = vpop.permute.xlu0 %975
      %977 = vrot.lane.b32.xlu0 %v938, 4
      %v978 = vpop.permute.xlu0 %977
      %979 = vrot.lane.b32.xlu0 %v948, 4
      %v980 = vpop.permute.xlu0 %979
      %vm997 = vcmask 60448
      %998 = vst.msk [vmem:[#allocation3] sm:$0xf] %vm997, %v950
      %999 = vst.msk [vmem:[#allocation3 + $0x4] sm:$0xf] %vm997, %v952
      %1000 = vst.msk [vmem:[#allocation3 + $0x8] sm:$0xf] %vm997, %v954
      %1001 = vst.msk [vmem:[#allocation3 + $0xc] sm:$0xf] %vm997, %v956
      %1002 = vst.msk [vmem:[#allocation3 + $0x10] sm:$0xf] %vm997, %v958
      %1003 = vst.msk [vmem:[#allocation3 + $0x14] sm:$0xf] %vm997, %v960
      %1004 = vst.msk [vmem:[#allocation3 + $0x18] sm:$0xf] %vm997, %v962
      %1005 = vst.msk [vmem:[#allocation3 + $0x1c] sm:$0xf] %vm997, %v964
      %1006 = vst.msk [vmem:[#allocation3 + $0x20] sm:$0xf] %vm997, %v966
      %1007 = vst.msk [vmem:[#allocation3 + $0x24] sm:$0xf] %vm997, %v968
      %1008 = vst.msk [vmem:[#allocation3 + $0x28] sm:$0xf] %vm997, %v970
      %1009 = vst.msk [vmem:[#allocation3 + $0x2c] sm:$0xf] %vm997, %v972
      %1010 = vst.msk [vmem:[#allocation3 + $0x30] sm:$0xf] %vm997, %v974
      %1011 = vst.msk [vmem:[#allocation3 + $0x34] sm:$0xf] %vm997, %v976
      %1012 = vst.msk [vmem:[#allocation3 + $0x38] sm:$0xf] %vm997, %v978
      %1013 = vst.msk [vmem:[#allocation3 + $0x3c] sm:$0xf] %vm997, %v980
      %v1014 = vld [vmem:[%s696] sm:$0xe]
      %v1015 = vld [vmem:[%s696 + $0x4] sm:$0xf]
      %v1016 = vld [vmem:[%s696 + $0x8] sm:$0x1]
      %v1017 = vld [vmem:[%s696 + $0xc] sm:$0xe]
      %v1018 = vld [vmem:[%s696 + $0x10] sm:$0xf]
      %v1019 = vld [vmem:[%s696 + $0x14] sm:$0x1]
      %v1020 = vld [vmem:[%s696 + $0x18] sm:$0xe]
      %v1021 = vld [vmem:[%s696 + $0x1c] sm:$0xf]
      %v1022 = vld [vmem:[%s696 + $0x20] sm:$0x1]
      %v1023 = vld [vmem:[%s696 + $0x24] sm:$0xe]
      %v1024 = vld [vmem:[%s696 + $0x28] sm:$0xf]
      %v1025 = vld [vmem:[%s696 + $0x2c] sm:$0x1]
      %v1026 = vld [vmem:[%s696 + $0x30] sm:$0xe]
      %v1027 = vld [vmem:[%s696 + $0x34] sm:$0xf]
      %v1028 = vld [vmem:[%s696 + $0x38] sm:$0x1]
      %v1029 = vld [vmem:[%s696 + $0x3c] sm:$0xe]
      %v1030 = vld [vmem:[%s696 + $0x40] sm:$0xf]
      %v1031 = vld [vmem:[%s696 + $0x44] sm:$0x1]
      %v1032 = vld [vmem:[%s696 + $0x48] sm:$0xe]
      %v1033 = vld [vmem:[%s696 + $0x4c] sm:$0xf]
      %v1034 = vld [vmem:[%s696 + $0x50] sm:$0x1]
      %v1035 = vld [vmem:[%s696 + $0x54] sm:$0xe]
      %v1036 = vld [vmem:[%s696 + $0x58] sm:$0xf]
      %v1037 = vld [vmem:[%s696 + $0x5c] sm:$0x1]
      %vm1062 = vcmask 1042432
      %vm1063 = vcmask 1046532
      %vm1064 = vmor %vm1062, %vm1063
      %v1065 = vrot.slane %v1014, 5
      %v1066 = vrot.slane %v1065, 4
      %v1067 = vrot.slane %v1015, 5
      %v1068 = vsel %vm1064, %v1066, %v1067
      %v1069 = vrot.slane %v1067, 4
      %v1070 = vrot.slane %v1016, 5
      %v1071 = vsel %vm1064, %v1069, %v1070
      %v1072 = vrot.slane %v1017, 5
      %v1073 = vrot.slane %v1072, 4
      %v1074 = vrot.slane %v1018, 5
      %v1075 = vsel %vm1064, %v1073, %v1074
      %v1076 = vrot.slane %v1074, 4
      %v1077 = vrot.slane %v1019, 5
      %v1078 = vsel %vm1064, %v1076, %v1077
      %v1079 = vrot.slane %v1020, 5
      %v1080 = vrot.slane %v1079, 4
      %v1081 = vrot.slane %v1021, 5
      %v1082 = vsel %vm1064, %v1080, %v1081
      %v1083 = vrot.slane %v1081, 4
      %v1084 = vrot.slane %v1022, 5
      %v1085 = vsel %vm1064, %v1083, %v1084
      %v1086 = vrot.slane %v1023, 5
      %v1087 = vrot.slane %v1086, 4
      %v1088 = vrot.slane %v1024, 5
      %v1089 = vsel %vm1064, %v1087, %v1088
      %v1090 = vrot.slane %v1088, 4
      %v1091 = vrot.slane %v1025, 5
      %v1092 = vsel %vm1064, %v1090, %v1091
      %v1093 = vrot.slane %v1026, 5
      %v1094 = vrot.slane %v1093, 4
      %v1095 = vrot.slane %v1027, 5
      %v1096 = vsel %vm1064, %v1094, %v1095
      %v1097 = vrot.slane %v1095, 4
      %v1098 = vrot.slane %v1028, 5
      %v1099 = vsel %vm1064, %v1097, %v1098
      %v1100 = vrot.slane %v1029, 5
      %v1101 = vrot.slane %v1100, 4
      %v1102 = vrot.slane %v1030, 5
      %v1103 = vsel %vm1064, %v1101, %v1102
      %v1104 = vrot.slane %v1102, 4
      %v1105 = vrot.slane %v1031, 5
      %v1106 = vsel %vm1064, %v1104, %v1105
      %v1107 = vrot.slane %v1032, 5
      %v1108 = vrot.slane %v1107, 4
      %v1109 = vrot.slane %v1033, 5
      %v1110 = vsel %vm1064, %v1108, %v1109
      %v1111 = vrot.slane %v1109, 4
      %v1112 = vrot.slane %v1034, 5
      %v1113 = vsel %vm1064, %v1111, %v1112
      %v1114 = vrot.slane %v1035, 5
      %v1115 = vrot.slane %v1114, 4
      %v1116 = vrot.slane %v1036, 5
      %v1117 = vsel %vm1064, %v1115, %v1116
      %v1118 = vrot.slane %v1116, 4
      %v1119 = vrot.slane %v1037, 5
      %v1120 = vsel %vm1064, %v1118, %v1119
      %1121 = vrot.lane.b32.xlu0 %v1068, 8
      %v1122 = vpop.permute.xlu0 %1121
      %1123 = vrot.lane.b32.xlu0 %v1071, 8
      %v1124 = vpop.permute.xlu0 %1123
      %1125 = vrot.lane.b32.xlu0 %v1075, 8
      %v1126 = vpop.permute.xlu0 %1125
      %1127 = vrot.lane.b32.xlu0 %v1078, 8
      %v1128 = vpop.permute.xlu0 %1127
      %1129 = vrot.lane.b32.xlu0 %v1082, 8
      %v1130 = vpop.permute.xlu0 %1129
      %1131 = vrot.lane.b32.xlu0 %v1085, 8
      %v1132 = vpop.permute.xlu0 %1131
      %1133 = vrot.lane.b32.xlu0 %v1089, 8
      %v1134 = vpop.permute.xlu0 %1133
      %1135 = vrot.lane.b32.xlu0 %v1092, 8
      %v1136 = vpop.permute.xlu0 %1135
      %1137 = vrot.lane.b32.xlu0 %v1096, 8
      %v1138 = vpop.permute.xlu0 %1137
      %1139 = vrot.lane.b32.xlu0 %v1099, 8
      %v1140 = vpop.permute.xlu0 %1139
      %1141 = vrot.lane.b32.xlu0 %v1103, 8
      %v1142 = vpop.permute.xlu0 %1141
      %1143 = vrot.lane.b32.xlu0 %v1106, 8
      %v1144 = vpop.permute.xlu0 %1143
      %1145 = vrot.lane.b32.xlu0 %v1110, 8
      %v1146 = vpop.permute.xlu0 %1145
      %1147 = vrot.lane.b32.xlu0 %v1113, 8
      %v1148 = vpop.permute.xlu0 %1147
      %1149 = vrot.lane.b32.xlu0 %v1117, 8
      %v1150 = vpop.permute.xlu0 %1149
      %1151 = vrot.lane.b32.xlu0 %v1120, 8
      %v1152 = vpop.permute.xlu0 %1151
      %vm1169 = vcmask 93248
      %1170 = vst.msk [vmem:[#allocation3] sm:$0xf] %vm1169, %v1122
      %1171 = vst.msk [vmem:[#allocation3 + $0x4] sm:$0xf] %vm1169, %v1124
      %1172 = vst.msk [vmem:[#allocation3 + $0x8] sm:$0xf] %vm1169, %v1126
      %1173 = vst.msk [vmem:[#allocation3 + $0xc] sm:$0xf] %vm1169, %v1128
      %1174 = vst.msk [vmem:[#allocation3 + $0x10] sm:$0xf] %vm1169, %v1130
      %1175 = vst.msk [vmem:[#allocation3 + $0x14] sm:$0xf] %vm1169, %v1132
      %1176 = vst.msk [vmem:[#allocation3 + $0x18] sm:$0xf] %vm1169, %v1134
      %1177 = vst.msk [vmem:[#allocation3 + $0x1c] sm:$0xf] %vm1169, %v1136
      %1178 = vst.msk [vmem:[#allocation3 + $0x20] sm:$0xf] %vm1169, %v1138
      %1179 = vst.msk [vmem:[#allocation3 + $0x24] sm:$0xf] %vm1169, %v1140
      %1180 = vst.msk [vmem:[#allocation3 + $0x28] sm:$0xf] %vm1169, %v1142
      %1181 = vst.msk [vmem:[#allocation3 + $0x2c] sm:$0xf] %vm1169, %v1144
      %1182 = vst.msk [vmem:[#allocation3 + $0x30] sm:$0xf] %vm1169, %v1146
      %1183 = vst.msk [vmem:[#allocation3 + $0x34] sm:$0xf] %vm1169, %v1148
      %1184 = vst.msk [vmem:[#allocation3 + $0x38] sm:$0xf] %vm1169, %v1150
      %1185 = vst.msk [vmem:[#allocation3 + $0x3c] sm:$0xf] %vm1169, %v1152
      %s1186 = sadd.s32 %s693, 1
      %s1187 = smul.u32 %s1186, 3
      %s1188 = smul.addr %s1187, 4
      %s1189 = scalar_lea.vmem [#allocation2], %s1188
      %v1190 = vld [vmem:[%s1189] sm:$0xf]
      %v1191 = vld [vmem:[%s1189 + $0x4] sm:$0xf]
      %v1192 = vld [vmem:[%s1189 + $0xc] sm:$0xf]
      %v1193 = vld [vmem:[%s1189 + $0x10] sm:$0xf]
      %v1194 = vld [vmem:[%s1189 + $0x18] sm:$0xf]
      %v1195 = vld [vmem:[%s1189 + $0x1c] sm:$0xf]
      %v1196 = vld [vmem:[%s1189 + $0x24] sm:$0xf]
      %v1197 = vld [vmem:[%s1189 + $0x28] sm:$0xf]
      %v1198 = vld [vmem:[%s1189 + $0x30] sm:$0xf]
      %v1199 = vld [vmem:[%s1189 + $0x34] sm:$0xf]
      %v1200 = vld [vmem:[%s1189 + $0x3c] sm:$0xf]
      %v1201 = vld [vmem:[%s1189 + $0x40] sm:$0xf]
      %v1202 = vld [vmem:[%s1189 + $0x48] sm:$0xf]
      %v1203 = vld [vmem:[%s1189 + $0x4c] sm:$0xf]
      %v1204 = vld [vmem:[%s1189 + $0x54] sm:$0xf]
      %v1205 = vld [vmem:[%s1189 + $0x58] sm:$0xf]
      %1222 = vrot.lane.b32.xlu0 %v1190, 12
      %v1223 = vpop.permute.xlu0 %1222
      %1224 = vrot.lane.b32.xlu0 %v1191, 12
      %v1225 = vpop.permute.xlu0 %1224
      %1226 = vrot.lane.b32.xlu0 %v1192, 12
      %v1227 = vpop.permute.xlu0 %1226
      %1228 = vrot.lane.b32.xlu0 %v1193, 12
      %v1229 = vpop.permute.xlu0 %1228
      %1230 = vrot.lane.b32.xlu0 %v1194, 12
      %v1231 = vpop.permute.xlu0 %1230
      %1232 = vrot.lane.b32.xlu0 %v1195, 12
      %v1233 = vpop.permute.xlu0 %1232
      %1234 = vrot.lane.b32.xlu0 %v1196, 12
      %v1235 = vpop.permute.xlu0 %1234
      %1236 = vrot.lane.b32.xlu0 %v1197, 12
      %v1237 = vpop.permute.xlu0 %1236
      %1238 = vrot.lane.b32.xlu0 %v1198, 12
      %v1239 = vpop.permute.xlu0 %1238
      %1240 = vrot.lane.b32.xlu0 %v1199, 12
      %v1241 = vpop.permute.xlu0 %1240
      %1242 = vrot.lane.b32.xlu0 %v1200, 12
      %v1243 = vpop.permute.xlu0 %1242
      %1244 = vrot.lane.b32.xlu0 %v1201, 12
      %v1245 = vpop.permute.xlu0 %1244
      %1246 = vrot.lane.b32.xlu0 %v1202, 12
      %v1247 = vpop.permute.xlu0 %1246
      %1248 = vrot.lane.b32.xlu0 %v1203, 12
      %v1249 = vpop.permute.xlu0 %1248
      %1250 = vrot.lane.b32.xlu0 %v1204, 12
      %v1251 = vpop.permute.xlu0 %1250
      %1252 = vrot.lane.b32.xlu0 %v1205, 12
      %v1253 = vpop.permute.xlu0 %1252
      %vm1270 = vcmask 126048
      %1271 = vst.msk [vmem:[#allocation3] sm:$0xf] %vm1270, %v1223
      %1272 = vst.msk [vmem:[#allocation3 + $0x4] sm:$0xf] %vm1270, %v1225
      %1273 = vst.msk [vmem:[#allocation3 + $0x8] sm:$0xf] %vm1270, %v1227
      %1274 = vst.msk [vmem:[#allocation3 + $0xc] sm:$0xf] %vm1270, %v1229
      %1275 = vst.msk [vmem:[#allocation3 + $0x10] sm:$0xf] %vm1270, %v1231
      %1276 = vst.msk [vmem:[#allocation3 + $0x14] sm:$0xf] %vm1270, %v1233
      %1277 = vst.msk [vmem:[#allocation3 + $0x18] sm:$0xf] %vm1270, %v1235
      %1278 = vst.msk [vmem:[#allocation3 + $0x1c] sm:$0xf] %vm1270, %v1237
      %1279 = vst.msk [vmem:[#allocation3 + $0x20] sm:$0xf] %vm1270, %v1239
      %1280 = vst.msk [vmem:[#allocation3 + $0x24] sm:$0xf] %vm1270, %v1241
      %1281 = vst.msk [vmem:[#allocation3 + $0x28] sm:$0xf] %vm1270, %v1243
      %1282 = vst.msk [vmem:[#allocation3 + $0x2c] sm:$0xf] %vm1270, %v1245
      %1283 = vst.msk [vmem:[#allocation3 + $0x30] sm:$0xf] %vm1270, %v1247
      %1284 = vst.msk [vmem:[#allocation3 + $0x34] sm:$0xf] %vm1270, %v1249
      %1285 = vst.msk [vmem:[#allocation3 + $0x38] sm:$0xf] %vm1270, %v1251
      %1286 = vst.msk [vmem:[#allocation3 + $0x3c] sm:$0xf] %vm1270, %v1253
      %v1287 = vld [vmem:[%s1189] sm:$0xf]
      %v1288 = vld [vmem:[%s1189 + $0x4] sm:$0xf]
      %v1289 = vld [vmem:[%s1189 + $0x8] sm:$0x1]
      %v1290 = vld [vmem:[%s1189 + $0xc] sm:$0xf]
      %v1291 = vld [vmem:[%s1189 + $0x10] sm:$0xf]
      %v1292 = vld [vmem:[%s1189 + $0x14] sm:$0x1]
      %v1293 = vld [vmem:[%s1189 + $0x18] sm:$0xf]
      %v1294 = vld [vmem:[%s1189 + $0x1c] sm:$0xf]
      %v1295 = vld [vmem:[%s1189 + $0x20] sm:$0x1]
      %v1296 = vld [vmem:[%s1189 + $0x24] sm:$0xf]
      %v1297 = vld [vmem:[%s1189 + $0x28] sm:$0xf]
      %v1298 = vld [vmem:[%s1189 + $0x2c] sm:$0x1]
      %v1299 = vld [vmem:[%s1189 + $0x30] sm:$0xf]
      %v1300 = vld [vmem:[%s1189 + $0x34] sm:$0xf]
      %v1301 = vld [vmem:[%s1189 + $0x38] sm:$0x1]
      %v1302 = vld [vmem:[%s1189 + $0x3c] sm:$0xf]
      %v1303 = vld [vmem:[%s1189 + $0x40] sm:$0xf]
      %v1304 = vld [vmem:[%s1189 + $0x44] sm:$0x1]
      %v1305 = vld [vmem:[%s1189 + $0x48] sm:$0xf]
      %v1306 = vld [vmem:[%s1189 + $0x4c] sm:$0xf]
      %v1307 = vld [vmem:[%s1189 + $0x50] sm:$0x1]
      %v1308 = vld [vmem:[%s1189 + $0x54] sm:$0xf]
      %v1309 = vld [vmem:[%s1189 + $0x58] sm:$0xf]
      %v1310 = vld [vmem:[%s1189 + $0x5c] sm:$0x1]
      %v1312 = vshrl.u32 %v1287, 16
      %v1314 = vrot.slane %v1312, 4
      %v1315 = vshll.u32 %v1287, 16
      %v1317 = vrot.slane %v1315, 5
      %v1318 = vor.u32 %v1314, %v1317
      %v1319 = vrot.slane %v1318, 4
      %v1321 = vshll.u32 %v1288, 16
      %v1323 = vrot.slane %v1321, 5
      %v1324 = vsel %vm756, %v1319, %v1323
      %v1325 = vshrl.u32 %v1288, 16
      %v1327 = vrot.slane %v1325, 4
      %v1328 = vor.u32 %v1327, %v1323
      %v1329 = vrot.slane %v1328, 4
      %v1331 = vshll.u32 %v1289, 16
      %v1333 = vrot.slane %v1331, 5
      %v1334 = vsel %vm756, %v1329, %v1333
      %v1336 = vshrl.u32 %v1290, 16
      %v1338 = vrot.slane %v1336, 4
      %v1339 = vshll.u32 %v1290, 16
      %v1341 = vrot.slane %v1339, 5
      %v1342 = vor.u32 %v1338, %v1341
      %v1343 = vrot.slane %v1342, 4
      %v1345 = vshll.u32 %v1291, 16
      %v1347 = vrot.slane %v1345, 5
      %v1348 = vsel %vm756, %v1343, %v1347
      %v1349 = vshrl.u32 %v1291, 16
      %v1351 = vrot.slane %v1349, 4
      %v1352 = vor.u32 %v1351, %v1347
      %v1353 = vrot.slane %v1352, 4
      %v1355 = vshll.u32 %v1292, 16
      %v1357 = vrot.slane %v1355, 5
      %v1358 = vsel %vm756, %v1353, %v1357
      %v1360 = vshrl.u32 %v1293, 16
      %v1362 = vrot.slane %v1360, 4
      %v1363 = vshll.u32 %v1293, 16
      %v1365 = vrot.slane %v1363, 5
      %v1366 = vor.u32 %v1362, %v1365
      %v1367 = vrot.slane %v1366, 4
      %v1369 = vshll.u32 %v1294, 16
      %v1371 = vrot.slane %v1369, 5
      %v1372 = vsel %vm756, %v1367, %v1371
      %v1373 = vshrl.u32 %v1294, 16
      %v1375 = vrot.slane %v1373, 4
      %v1376 = vor.u32 %v1375, %v1371
      %v1377 = vrot.slane %v1376, 4
      %v1379 = vshll.u32 %v1295, 16
      %v1381 = vrot.slane %v1379, 5
      %v1382 = vsel %vm756, %v1377, %v1381
      %v1384 = vshrl.u32 %v1296, 16
      %v1386 = vrot.slane %v1384, 4
      %v1387 = vshll.u32 %v1296, 16
      %v1389 = vrot.slane %v1387, 5
      %v1390 = vor.u32 %v1386, %v1389
      %v1391 = vrot.slane %v1390, 4
      %v1393 = vshll.u32 %v1297, 16
      %v1395 = vrot.slane %v1393, 5
      %v1396 = vsel %vm756, %v1391, %v1395
      %v1397 = vshrl.u32 %v1297, 16
      %v1399 = vrot.slane %v1397, 4
      %v1400 = vor.u32 %v1399, %v1395
      %v1401 = vrot.slane %v1400, 4
      %v1403 = vshll.u32 %v1298, 16
      %v1405 = vrot.slane %v1403, 5
      %v1406 = vsel %vm756, %v1401, %v1405
      %v1408 = vshrl.u32 %v1299, 16
      %v1410 = vrot.slane %v1408, 4
      %v1411 = vshll.u32 %v1299, 16
      %v1413 = vrot.slane %v1411, 5
      %v1414 = vor.u32 %v1410, %v1413
      %v1415 = vrot.slane %v1414, 4
      %v1417 = vshll.u32 %v1300, 16
      %v1419 = vrot.slane %v1417, 5
      %v1420 = vsel %vm756, %v1415, %v1419
      %v1421 = vshrl.u32 %v1300, 16
      %v1423 = vrot.slane %v1421, 4
      %v1424 = vor.u32 %v1423, %v1419
      %v1425 = vrot.slane %v1424, 4
      %v1427 = vshll.u32 %v1301, 16
      %v1429 = vrot.slane %v1427, 5
      %v1430 = vsel %vm756, %v1425, %v1429
      %v1432 = vshrl.u32 %v1302, 16
      %v1434 = vrot.slane %v1432, 4
      %v1435 = vshll.u32 %v1302, 16
      %v1437 = vrot.slane %v1435, 5
      %v1438 = vor.u32 %v1434, %v1437
      %v1439 = vrot.slane %v1438, 4
      %v1441 = vshll.u32 %v1303, 16
      %v1443 = vrot.slane %v1441, 5
      %v1444 = vsel %vm756, %v1439, %v1443
      %v1445 = vshrl.u32 %v1303, 16
      %v1447 = vrot.slane %v1445, 4
      %v1448 = vor.u32 %v1447, %v1443
      %v1449 = vrot.slane %v1448, 4
      %v1451 = vshll.u32 %v1304, 16
      %v1453 = vrot.slane %v1451, 5
      %v1454 = vsel %vm756, %v1449, %v1453
      %v1456 = vshrl.u32 %v1305, 16
      %v1458 = vrot.slane %v1456, 4
      %v1459 = vshll.u32 %v1305, 16
      %v1461 = vrot.slane %v1459, 5
      %v1462 = vor.u32 %v1458, %v1461
      %v1463 = vrot.slane %v1462, 4
      %v1465 = vshll.u32 %v1306, 16
      %v1467 = vrot.slane %v1465, 5
      %v1468 = vsel %vm756, %v1463, %v1467
      %v1469 = vshrl.u32 %v1306, 16
      %v1471 = vrot.slane %v1469, 4
      %v1472 = vor.u32 %v1471, %v1467
      %v1473 = vrot.slane %v1472, 4
      %v1475 = vshll.u32 %v1307, 16
      %v1477 = vrot.slane %v1475, 5
      %v1478 = vsel %vm756, %v1473, %v1477
      %v1480 = vshrl.u32 %v1308, 16
      %v1482 = vrot.slane %v1480, 4
      %v1483 = vshll.u32 %v1308, 16
      %v1485 = vrot.slane %v1483, 5
      %v1486 = vor.u32 %v1482, %v1485
      %v1487 = vrot.slane %v1486, 4
      %v1489 = vshll.u32 %v1309, 16
      %v1491 = vrot.slane %v1489, 5
      %v1492 = vsel %vm756, %v1487, %v1491
      %v1493 = vshrl.u32 %v1309, 16
      %v1495 = vrot.slane %v1493, 4
      %v1496 = vor.u32 %v1495, %v1491
      %v1497 = vrot.slane %v1496, 4
      %v1499 = vshll.u32 %v1310, 16
      %v1501 = vrot.slane %v1499, 5
      %v1502 = vsel %vm756, %v1497, %v1501
      %1503 = vrot.lane.b32.xlu0 %v1324, 16
      %v1504 = vpop.permute.xlu0 %1503
      %1505 = vrot.lane.b32.xlu0 %v1334, 16
      %v1506 = vpop.permute.xlu0 %1505
      %1507 = vrot.lane.b32.xlu0 %v1348, 16
      %v1508 = vpop.permute.xlu0 %1507
      %1509 = vrot.lane.b32.xlu0 %v1358, 16
      %v1510 = vpop.permute.xlu0 %1509
      %1511 = vrot.lane.b32.xlu0 %v1372, 16
      %v1512 = vpop.permute.xlu0 %1511
      %1513 = vrot.lane.b32.xlu0 %v1382, 16
      %v1514 = vpop.permute.xlu0 %1513
      %1515 = vrot.lane.b32.xlu0 %v1396, 16
      %v1516 = vpop.permute.xlu0 %1515
      %1517 = vrot.lane.b32.xlu0 %v1406, 16
      %v1518 = vpop.permute.xlu0 %1517
      %1519 = vrot.lane.b32.xlu0 %v1420, 16
      %v1520 = vpop.permute.xlu0 %1519
      %1521 = vrot.lane.b32.xlu0 %v1430, 16
      %v1522 = vpop.permute.xlu0 %1521
      %1523 = vrot.lane.b32.xlu0 %v1444, 16
      %v1524 = vpop.permute.xlu0 %1523
      %1525 = vrot.lane.b32.xlu0 %v1454, 16
      %v1526 = vpop.permute.xlu0 %1525
      %1527 = vrot.lane.b32.xlu0 %v1468, 16
      %v1528 = vpop.permute.xlu0 %1527
      %1529 = vrot.lane.b32.xlu0 %v1478, 16
      %v1530 = vpop.permute.xlu0 %1529
      %1531 = vrot.lane.b32.xlu0 %v1492, 16
      %v1532 = vpop.permute.xlu0 %1531
      %1533 = vrot.lane.b32.xlu0 %v1502, 16
      %v1534 = vpop.permute.xlu0 %1533
      %vm1551 = vcmask 158848
      %1552 = vst.msk [vmem:[#allocation3] sm:$0xf] %vm1551, %v1504
      %1553 = vst.msk [vmem:[#allocation3 + $0x4] sm:$0xf] %vm1551, %v1506
      %1554 = vst.msk [vmem:[#allocation3 + $0x8] sm:$0xf] %vm1551, %v1508
      %1555 = vst.msk [vmem:[#allocation3 + $0xc] sm:$0xf] %vm1551, %v1510
      %1556 = vst.msk [vmem:[#allocation3 + $0x10] sm:$0xf] %vm1551, %v1512
      %1557 = vst.msk [vmem:[#allocation3 + $0x14] sm:$0xf] %vm1551, %v1514
      %1558 = vst.msk [vmem:[#allocation3 + $0x18] sm:$0xf] %vm1551, %v1516
      %1559 = vst.msk [vmem:[#allocation3 + $0x1c] sm:$0xf] %vm1551, %v1518
      %1560 = vst.msk [vmem:[#allocation3 + $0x20] sm:$0xf] %vm1551, %v1520
      %1561 = vst.msk [vmem:[#allocation3 + $0x24] sm:$0xf] %vm1551, %v1522
      %1562 = vst.msk [vmem:[#allocation3 + $0x28] sm:$0xf] %vm1551, %v1524
      %1563 = vst.msk [vmem:[#allocation3 + $0x2c] sm:$0xf] %vm1551, %v1526
      %1564 = vst.msk [vmem:[#allocation3 + $0x30] sm:$0xf] %vm1551, %v1528
      %1565 = vst.msk [vmem:[#allocation3 + $0x34] sm:$0xf] %vm1551, %v1530
      %1566 = vst.msk [vmem:[#allocation3 + $0x38] sm:$0xf] %vm1551, %v1532
      %1567 = vst.msk [vmem:[#allocation3 + $0x3c] sm:$0xf] %vm1551, %v1534
      %v1568 = vld [vmem:[%s1189] sm:$0xe]
      %v1569 = vld [vmem:[%s1189 + $0x4] sm:$0xf]
      %v1570 = vld [vmem:[%s1189 + $0x8] sm:$0x1]
      %v1571 = vld [vmem:[%s1189 + $0xc] sm:$0xe]
      %v1572 = vld [vmem:[%s1189 + $0x10] sm:$0xf]
      %v1573 = vld [vmem:[%s1189 + $0x14] sm:$0x1]
      %v1574 = vld [vmem:[%s1189 + $0x18] sm:$0xe]
      %v1575 = vld [vmem:[%s1189 + $0x1c] sm:$0xf]
      %v1576 = vld [vmem:[%s1189 + $0x20] sm:$0x1]
      %v1577 = vld [vmem:[%s1189 + $0x24] sm:$0xe]
      %v1578 = vld [vmem:[%s1189 + $0x28] sm:$0xf]
      %v1579 = vld [vmem:[%s1189 + $0x2c] sm:$0x1]
      %v1580 = vld [vmem:[%s1189 + $0x30] sm:$0xe]
      %v1581 = vld [vmem:[%s1189 + $0x34] sm:$0xf]
      %v1582 = vld [vmem:[%s1189 + $0x38] sm:$0x1]
      %v1583 = vld [vmem:[%s1189 + $0x3c] sm:$0xe]
      %v1584 = vld [vmem:[%s1189 + $0x40] sm:$0xf]
      %v1585 = vld [vmem:[%s1189 + $0x44] sm:$0x1]
      %v1586 = vld [vmem:[%s1189 + $0x48] sm:$0xe]
      %v1587 = vld [vmem:[%s1189 + $0x4c] sm:$0xf]
      %v1588 = vld [vmem:[%s1189 + $0x50] sm:$0x1]
      %v1589 = vld [vmem:[%s1189 + $0x54] sm:$0xe]
      %v1590 = vld [vmem:[%s1189 + $0x58] sm:$0xf]
      %v1591 = vld [vmem:[%s1189 + $0x5c] sm:$0x1]
      %v1616 = vrot.slane %v1568, 5
      %v1617 = vrot.slane %v1616, 4
      %v1618 = vrot.slane %v1569, 5
      %v1619 = vsel %vm1064, %v1617, %v1618
      %v1620 = vrot.slane %v1618, 4
      %v1621 = vrot.slane %v1570, 5
      %v1622 = vsel %vm1064, %v1620, %v1621
      %v1623 = vrot.slane %v1571, 5
      %v1624 = vrot.slane %v1623, 4
      %v1625 = vrot.slane %v1572, 5
      %v1626 = vsel %vm1064, %v1624, %v1625
      %v1627 = vrot.slane %v1625, 4
      %v1628 = vrot.slane %v1573, 5
      %v1629 = vsel %vm1064, %v1627, %v1628
      %v1630 = vrot.slane %v1574, 5
      %v1631 = vrot.slane %v1630, 4
      %v1632 = vrot.slane %v1575, 5
      %v1633 = vsel %vm1064, %v1631, %v1632
      %v1634 = vrot.slane %v1632, 4
      %v1635 = vrot.slane %v1576, 5
      %v1636 = vsel %vm1064, %v1634, %v1635
      %v1637 = vrot.slane %v1577, 5
      %v1638 = vrot.slane %v1637, 4
      %v1639 = vrot.slane %v1578, 5
      %v1640 = vsel %vm1064, %v1638, %v1639
      %v1641 = vrot.slane %v1639, 4
      %v1642 = vrot.slane %v1579, 5
      %v1643 = vsel %vm1064, %v1641, %v1642
      %v1644 = vrot.slane %v1580, 5
      %v1645 = vrot.slane %v1644, 4
      %v1646 = vrot.slane %v1581, 5
      %v1647 = vsel %vm1064, %v1645, %v1646
      %v1648 = vrot.slane %v1646, 4
      %v1649 = vrot.slane %v1582, 5
      %v1650 = vsel %vm1064, %v1648, %v1649
      %v1651 = vrot.slane %v1583, 5
      %v1652 = vrot.slane %v1651, 4
      %v1653 = vrot.slane %v1584, 5
      %v1654 = vsel %vm1064, %v1652, %v1653
      %v1655 = vrot.slane %v1653, 4
      %v1656 = vrot.slane %v1585, 5
      %v1657 = vsel %vm1064, %v1655, %v1656
      %v1658 = vrot.slane %v1586, 5
      %v1659 = vrot.slane %v1658, 4
      %v1660 = vrot.slane %v1587, 5
      %v1661 = vsel %vm1064, %v1659, %v1660
      %v1662 = vrot.slane %v1660, 4
      %v1663 = vrot.slane %v1588, 5
      %v1664 = vsel %vm1064, %v1662, %v1663
      %v1665 = vrot.slane %v1589, 5
      %v1666 = vrot.slane %v1665, 4
      %v1667 = vrot.slane %v1590, 5
      %v1668 = vsel %vm1064, %v1666, %v1667
      %v1669 = vrot.slane %v1667, 4
      %v1670 = vrot.slane %v1591, 5
      %v1671 = vsel %vm1064, %v1669, %v1670
      %1672 = vrot.lane.b32.xlu0 %v1619, 20
      %v1673 = vpop.permute.xlu0 %1672
      %1674 = vrot.lane.b32.xlu0 %v1622, 20
      %v1675 = vpop.permute.xlu0 %1674
      %1676 = vrot.lane.b32.xlu0 %v1626, 20
      %v1677 = vpop.permute.xlu0 %1676
      %1678 = vrot.lane.b32.xlu0 %v1629, 20
      %v1679 = vpop.permute.xlu0 %1678
      %1680 = vrot.lane.b32.xlu0 %v1633, 20
      %v1681 = vpop.permute.xlu0 %1680
      %1682 = vrot.lane.b32.xlu0 %v1636, 20
      %v1683 = vpop.permute.xlu0 %1682
      %1684 = vrot.lane.b32.xlu0 %v1640, 20
      %v1685 = vpop.permute.xlu0 %1684
      %1686 = vrot.lane.b32.xlu0 %v1643, 20
      %v1687 = vpop.permute.xlu0 %1686
      %1688 = vrot.lane.b32.xlu0 %v1647, 20
      %v1689 = vpop.permute.xlu0 %1688
      %1690 = vrot.lane.b32.xlu0 %v1650, 20
      %v1691 = vpop.permute.xlu0 %1690
      %1692 = vrot.lane.b32.xlu0 %v1654, 20
      %v1693 = vpop.permute.xlu0 %1692
      %1694 = vrot.lane.b32.xlu0 %v1657, 20
      %v1695 = vpop.permute.xlu0 %1694
      %1696 = vrot.lane.b32.xlu0 %v1661, 20
      %v1697 = vpop.permute.xlu0 %1696
      %1698 = vrot.lane.b32.xlu0 %v1664, 20
      %v1699 = vpop.permute.xlu0 %1698
      %1700 = vrot.lane.b32.xlu0 %v1668, 20
      %v1701 = vpop.permute.xlu0 %1700
      %1702 = vrot.lane.b32.xlu0 %v1671, 20
      %v1703 = vpop.permute.xlu0 %1702
      %vm1720 = vcmask 191648
      %1721 = vst.msk [vmem:[#allocation3] sm:$0xf] %vm1720, %v1673
      %1722 = vst.msk [vmem:[#allocation3 + $0x4] sm:$0xf] %vm1720, %v1675
      %1723 = vst.msk [vmem:[#allocation3 + $0x8] sm:$0xf] %vm1720, %v1677
      %1724 = vst.msk [vmem:[#allocation3 + $0xc] sm:$0xf] %vm1720, %v1679
      %1725 = vst.msk [vmem:[#allocation3 + $0x10] sm:$0xf] %vm1720, %v1681
      %1726 = vst.msk [vmem:[#allocation3 + $0x14] sm:$0xf] %vm1720, %v1683
      %1727 = vst.msk [vmem:[#allocation3 + $0x18] sm:$0xf] %vm1720, %v1685
      %1728 = vst.msk [vmem:[#allocation3 + $0x1c] sm:$0xf] %vm1720, %v1687
      %1729 = vst.msk [vmem:[#allocation3 + $0x20] sm:$0xf] %vm1720, %v1689
      %1730 = vst.msk [vmem:[#allocation3 + $0x24] sm:$0xf] %vm1720, %v1691
      %1731 = vst.msk [vmem:[#allocation3 + $0x28] sm:$0xf] %vm1720, %v1693
      %1732 = vst.msk [vmem:[#allocation3 + $0x2c] sm:$0xf] %vm1720, %v1695
      %1733 = vst.msk [vmem:[#allocation3 + $0x30] sm:$0xf] %vm1720, %v1697
      %1734 = vst.msk [vmem:[#allocation3 + $0x34] sm:$0xf] %vm1720, %v1699
      %1735 = vst.msk [vmem:[#allocation3 + $0x38] sm:$0xf] %vm1720, %v1701
      %1736 = vst.msk [vmem:[#allocation3 + $0x3c] sm:$0xf] %vm1720, %v1703
      %s1737 = sadd.s32 %s693, 2
      %s1738 = smul.u32 %s1737, 3
      %s1739 = smul.addr %s1738, 4
      %s1740 = scalar_lea.vmem [#allocation2], %s1739
      %v1741 = vld [vmem:[%s1740] sm:$0xf]
      %v1742 = vld [vmem:[%s1740 + $0x4] sm:$0xf]
      %v1743 = vld [vmem:[%s1740 + $0xc] sm:$0xf]
      %v1744 = vld [vmem:[%s1740 + $0x10] sm:$0xf]
      %v1745 = vld [vmem:[%s1740 + $0x18] sm:$0xf]
      %v1746 = vld [vmem:[%s1740 + $0x1c] sm:$0xf]
      %v1747 = vld [vmem:[%s1740 + $0x24] sm:$0xf]
      %v1748 = vld [vmem:[%s1740 + $0x28] sm:$0xf]
      %v1749 = vld [vmem:[%s1740 + $0x30] sm:$0xf]
      %v1750 = vld [vmem:[%s1740 + $0x34] sm:$0xf]
      %v1751 = vld [vmem:[%s1740 + $0x3c] sm:$0xf]
      %v1752 = vld [vmem:[%s1740 + $0x40] sm:$0xf]
      %v1753 = vld [vmem:[%s1740 + $0x48] sm:$0xf]
      %v1754 = vld [vmem:[%s1740 + $0x4c] sm:$0xf]
      %v1755 = vld [vmem:[%s1740 + $0x54] sm:$0xf]
      %v1756 = vld [vmem:[%s1740 + $0x58] sm:$0xf]
      %1773 = vrot.lane.b32.xlu0 %v1741, 24
      %v1774 = vpop.permute.xlu0 %1773
      %1775 = vrot.lane.b32.xlu0 %v1742, 24
      %v1776 = vpop.permute.xlu0 %1775
      %1777 = vrot.lane.b32.xlu0 %v1743, 24
      %v1778 = vpop.permute.xlu0 %1777
      %1779 = vrot.lane.b32.xlu0 %v1744, 24
      %v1780 = vpop.permute.xlu0 %1779
      %1781 = vrot.lane.b32.xlu0 %v1745, 24
      %v1782 = vpop.permute.xlu0 %1781
      %1783 = vrot.lane.b32.xlu0 %v1746, 24
      %v1784 = vpop.permute.xlu0 %1783
      %1785 = vrot.lane.b32.xlu0 %v1747, 24
      %v1786 = vpop.permute.xlu0 %1785
      %1787 = vrot.lane.b32.xlu0 %v1748, 24
      %v1788 = vpop.permute.xlu0 %1787
      %1789 = vrot.lane.b32.xlu0 %v1749, 24
      %v1790 = vpop.permute.xlu0 %1789
      %1791 = vrot.lane.b32.xlu0 %v1750, 24
      %v1792 = vpop.permute.xlu0 %1791
      %1793 = vrot.lane.b32.xlu0 %v1751, 24
      %v1794 = vpop.permute.xlu0 %1793
      %1795 = vrot.lane.b32.xlu0 %v1752, 24
      %v1796 = vpop.permute.xlu0 %1795
      %1797 = vrot.lane.b32.xlu0 %v1753, 24
      %v1798 = vpop.permute.xlu0 %1797
      %1799 = vrot.lane.b32.xlu0 %v1754, 24
      %v1800 = vpop.permute.xlu0 %1799
      %1801 = vrot.lane.b32.xlu0 %v1755, 24
      %v1802 = vpop.permute.xlu0 %1801
      %1803 = vrot.lane.b32.xlu0 %v1756, 24
      %v1804 = vpop.permute.xlu0 %1803
      %vm1821 = vcmask 224448
      %1822 = vst.msk [vmem:[#allocation3] sm:$0xf] %vm1821, %v1774
      %1823 = vst.msk [vmem:[#allocation3 + $0x4] sm:$0xf] %vm1821, %v1776
      %1824 = vst.msk [vmem:[#allocation3 + $0x8] sm:$0xf] %vm1821, %v1778
      %1825 = vst.msk [vmem:[#allocation3 + $0xc] sm:$0xf] %vm1821, %v1780
      %1826 = vst.msk [vmem:[#allocation3 + $0x10] sm:$0xf] %vm1821, %v1782
      %1827 = vst.msk [vmem:[#allocation3 + $0x14] sm:$0xf] %vm1821, %v1784
      %1828 = vst.msk [vmem:[#allocation3 + $0x18] sm:$0xf] %vm1821, %v1786
      %1829 = vst.msk [vmem:[#allocation3 + $0x1c] sm:$0xf] %vm1821, %v1788
      %1830 = vst.msk [vmem:[#allocation3 + $0x20] sm:$0xf] %vm1821, %v1790
      %1831 = vst.msk [vmem:[#allocation3 + $0x24] sm:$0xf] %vm1821, %v1792
      %1832 = vst.msk [vmem:[#allocation3 + $0x28] sm:$0xf] %vm1821, %v1794
      %1833 = vst.msk [vmem:[#allocation3 + $0x2c] sm:$0xf] %vm1821, %v1796
      %1834 = vst.msk [vmem:[#allocation3 + $0x30] sm:$0xf] %vm1821, %v1798
      %1835 = vst.msk [vmem:[#allocation3 + $0x34] sm:$0xf] %vm1821, %v1800
      %1836 = vst.msk [vmem:[#allocation3 + $0x38] sm:$0xf] %vm1821, %v1802
      %1837 = vst.msk [vmem:[#allocation3 + $0x3c] sm:$0xf] %vm1821, %v1804
      %v1838 = vld [vmem:[%s1740] sm:$0xf]
      %v1839 = vld [vmem:[%s1740 + $0x4] sm:$0xf]
      %v1840 = vld [vmem:[%s1740 + $0x8] sm:$0x1]
      %v1841 = vld [vmem:[%s1740 + $0xc] sm:$0xf]
      %v1842 = vld [vmem:[%s1740 + $0x10] sm:$0xf]
      %v1843 = vld [vmem:[%s1740 + $0x14] sm:$0x1]
      %v1844 = vld [vmem:[%s1740 + $0x18] sm:$0xf]
      %v1845 = vld [vmem:[%s1740 + $0x1c] sm:$0xf]
      %v1846 = vld [vmem:[%s1740 + $0x20] sm:$0x1]
      %v1847 = vld [vmem:[%s1740 + $0x24] sm:$0xf]
      %v1848 = vld [vmem:[%s1740 + $0x28] sm:$0xf]
      %v1849 = vld [vmem:[%s1740 + $0x2c] sm:$0x1]
      %v1850 = vld [vmem:[%s1740 + $0x30] sm:$0xf]
      %v1851 = vld [vmem:[%s1740 + $0x34] sm:$0xf]
      %v1852 = vld [vmem:[%s1740 + $0x38] sm:$0x1]
      %v1853 = vld [vmem:[%s1740 + $0x3c] sm:$0xf]
      %v1854 = vld [vmem:[%s1740 + $0x40] sm:$0xf]
      %v1855 = vld [vmem:[%s1740 + $0x44] sm:$0x1]
      %v1856 = vld [vmem:[%s1740 + $0x48] sm:$0xf]
      %v1857 = vld [vmem:[%s1740 + $0x4c] sm:$0xf]
      %v1858 = vld [vmem:[%s1740 + $0x50] sm:$0x1]
      %v1859 = vld [vmem:[%s1740 + $0x54] sm:$0xf]
      %v1860 = vld [vmem:[%s1740 + $0x58] sm:$0xf]
      %v1861 = vld [vmem:[%s1740 + $0x5c] sm:$0x1]
      %v1863 = vshrl.u32 %v1838, 16
      %v1865 = vrot.slane %v1863, 4
      %v1866 = vshll.u32 %v1838, 16
      %v1868 = vrot.slane %v1866, 5
      %v1869 = vor.u32 %v1865, %v1868
      %v1870 = vrot.slane %v1869, 4
      %v1872 = vshll.u32 %v1839, 16
      %v1874 = vrot.slane %v1872, 5
      %v1875 = vsel %vm756, %v1870, %v1874
      %v1876 = vshrl.u32 %v1839, 16
      %v1878 = vrot.slane %v1876, 4
      %v1879 = vor.u32 %v1878, %v1874
      %v1880 = vrot.slane %v1879, 4
      %v1882 = vshll.u32 %v1840, 16
      %v1884 = vrot.slane %v1882, 5
      %v1885 = vsel %vm756, %v1880, %v1884
      %v1887 = vshrl.u32 %v1841, 16
      %v1889 = vrot.slane %v1887, 4
      %v1890 = vshll.u32 %v1841, 16
      %v1892 = vrot.slane %v1890, 5
      %v1893 = vor.u32 %v1889, %v1892
      %v1894 = vrot.slane %v1893, 4
      %v1896 = vshll.u32 %v1842, 16
      %v1898 = vrot.slane %v1896, 5
      %v1899 = vsel %vm756, %v1894, %v1898
      %v1900 = vshrl.u32 %v1842, 16
      %v1902 = vrot.slane %v1900, 4
      %v1903 = vor.u32 %v1902, %v1898
      %v1904 = vrot.slane %v1903, 4
      %v1906 = vshll.u32 %v1843, 16
      %v1908 = vrot.slane %v1906, 5
      %v1909 = vsel %vm756, %v1904, %v1908
      %v1911 = vshrl.u32 %v1844, 16
      %v1913 = vrot.slane %v1911, 4
      %v1914 = vshll.u32 %v1844, 16
      %v1916 = vrot.slane %v1914, 5
      %v1917 = vor.u32 %v1913, %v1916
      %v1918 = vrot.slane %v1917, 4
      %v1920 = vshll.u32 %v1845, 16
      %v1922 = vrot.slane %v1920, 5
      %v1923 = vsel %vm756, %v1918, %v1922
      %v1924 = vshrl.u32 %v1845, 16
      %v1926 = vrot.slane %v1924, 4
      %v1927 = vor.u32 %v1926, %v1922
      %v1928 = vrot.slane %v1927, 4
      %v1930 = vshll.u32 %v1846, 16
      %v1932 = vrot.slane %v1930, 5
      %v1933 = vsel %vm756, %v1928, %v1932
      %v1935 = vshrl.u32 %v1847, 16
      %v1937 = vrot.slane %v1935, 4
      %v1938 = vshll.u32 %v1847, 16
      %v1940 = vrot.slane %v1938, 5
      %v1941 = vor.u32 %v1937, %v1940
      %v1942 = vrot.slane %v1941, 4
      %v1944 = vshll.u32 %v1848, 16
      %v1946 = vrot.slane %v1944, 5
      %v1947 = vsel %vm756, %v1942, %v1946
      %v1948 = vshrl.u32 %v1848, 16
      %v1950 = vrot.slane %v1948, 4
      %v1951 = vor.u32 %v1950, %v1946
      %v1952 = vrot.slane %v1951, 4
      %v1954 = vshll.u32 %v1849, 16
      %v1956 = vrot.slane %v1954, 5
      %v1957 = vsel %vm756, %v1952, %v1956
      %v1959 = vshrl.u32 %v1850, 16
      %v1961 = vrot.slane %v1959, 4
      %v1962 = vshll.u32 %v1850, 16
      %v1964 = vrot.slane %v1962, 5
      %v1965 = vor.u32 %v1961, %v1964
      %v1966 = vrot.slane %v1965, 4
      %v1968 = vshll.u32 %v1851, 16
      %v1970 = vrot.slane %v1968, 5
      %v1971 = vsel %vm756, %v1966, %v1970
      %v1972 = vshrl.u32 %v1851, 16
      %v1974 = vrot.slane %v1972, 4
      %v1975 = vor.u32 %v1974, %v1970
      %v1976 = vrot.slane %v1975, 4
      %v1978 = vshll.u32 %v1852, 16
      %v1980 = vrot.slane %v1978, 5
      %v1981 = vsel %vm756, %v1976, %v1980
      %v1983 = vshrl.u32 %v1853, 16
      %v1985 = vrot.slane %v1983, 4
      %v1986 = vshll.u32 %v1853, 16
      %v1988 = vrot.slane %v1986, 5
      %v1989 = vor.u32 %v1985, %v1988
      %v1990 = vrot.slane %v1989, 4
      %v1992 = vshll.u32 %v1854, 16
      %v1994 = vrot.slane %v1992, 5
      %v1995 = vsel %vm756, %v1990, %v1994
      %v1996 = vshrl.u32 %v1854, 16
      %v1998 = vrot.slane %v1996, 4
      %v1999 = vor.u32 %v1998, %v1994
      %v2000 = vrot.slane %v1999, 4
      %v2002 = vshll.u32 %v1855, 16
      %v2004 = vrot.slane %v2002, 5
      %v2005 = vsel %vm756, %v2000, %v2004
      %v2007 = vshrl.u32 %v1856, 16
      %v2009 = vrot.slane %v2007, 4
      %v2010 = vshll.u32 %v1856, 16
      %v2012 = vrot.slane %v2010, 5
      %v2013 = vor.u32 %v2009, %v2012
      %v2014 = vrot.slane %v2013, 4
      %v2016 = vshll.u32 %v1857, 16
      %v2018 = vrot.slane %v2016, 5
      %v2019 = vsel %vm756, %v2014, %v2018
      %v2020 = vshrl.u32 %v1857, 16
      %v2022 = vrot.slane %v2020, 4
      %v2023 = vor.u32 %v2022, %v2018
      %v2024 = vrot.slane %v2023, 4
      %v2026 = vshll.u32 %v1858, 16
      %v2028 = vrot.slane %v2026, 5
      %v2029 = vsel %vm756, %v2024, %v2028
      %v2031 = vshrl.u32 %v1859, 16
      %v2033 = vrot.slane %v2031, 4
      %v2034 = vshll.u32 %v1859, 16
      %v2036 = vrot.slane %v2034, 5
      %v2037 = vor.u32 %v2033, %v2036
      %v2038 = vrot.slane %v2037, 4
      %v2040 = vshll.u32 %v1860, 16
      %v2042 = vrot.slane %v2040, 5
      %v2043 = vsel %vm756, %v2038, %v2042
      %v2044 = vshrl.u32 %v1860, 16
      %v2046 = vrot.slane %v2044, 4
      %v2047 = vor.u32 %v2046, %v2042
      %v2048 = vrot.slane %v2047, 4
      %v2050 = vshll.u32 %v1861, 16
      %v2052 = vrot.slane %v2050, 5
      %v2053 = vsel %vm756, %v2048, %v2052
      %2054 = vrot.lane.b32.xlu0 %v1875, 28
      %v2055 = vpop.permute.xlu0 %2054
      %2056 = vrot.lane.b32.xlu0 %v1885, 28
      %v2057 = vpop.permute.xlu0 %2056
      %2058 = vrot.lane.b32.xlu0 %v1899, 28
      %v2059 = vpop.permute.xlu0 %2058
      %2060 = vrot.lane.b32.xlu0 %v1909, 28
      %v2061 = vpop.permute.xlu0 %2060
      %2062 = vrot.lane.b32.xlu0 %v1923, 28
      %v2063 = vpop.permute.xlu0 %2062
      %2064 = vrot.lane.b32.xlu0 %v1933, 28
      %v2065 = vpop.permute.xlu0 %2064
      %2066 = vrot.lane.b32.xlu0 %v1947, 28
      %v2067 = vpop.permute.xlu0 %2066
      %2068 = vrot.lane.b32.xlu0 %v1957, 28
      %v2069 = vpop.permute.xlu0 %2068
      %2070 = vrot.lane.b32.xlu0 %v1971, 28
      %v2071 = vpop.permute.xlu0 %2070
      %2072 = vrot.lane.b32.xlu0 %v1981, 28
      %v2073 = vpop.permute.xlu0 %2072
      %2074 = vrot.lane.b32.xlu0 %v1995, 28
      %v2075 = vpop.permute.xlu0 %2074
      %2076 = vrot.lane.b32.xlu0 %v2005, 28
      %v2077 = vpop.permute.xlu0 %2076
      %2078 = vrot.lane.b32.xlu0 %v2019, 28
      %v2079 = vpop.permute.xlu0 %2078
      %2080 = vrot.lane.b32.xlu0 %v2029, 28
      %v2081 = vpop.permute.xlu0 %2080
      %2082 = vrot.lane.b32.xlu0 %v2043, 28
      %v2083 = vpop.permute.xlu0 %2082
      %2084 = vrot.lane.b32.xlu0 %v2053, 28
      %v2085 = vpop.permute.xlu0 %2084
      %vm2102 = vcmask 257248
      %2103 = vst.msk [vmem:[#allocation3] sm:$0xf] %vm2102, %v2055
      %2104 = vst.msk [vmem:[#allocation3 + $0x4] sm:$0xf] %vm2102, %v2057
      %2105 = vst.msk [vmem:[#allocation3 + $0x8] sm:$0xf] %vm2102, %v2059
      %2106 = vst.msk [vmem:[#allocation3 + $0xc] sm:$0xf] %vm2102, %v2061
      %2107 = vst.msk [vmem:[#allocation3 + $0x10] sm:$0xf] %vm2102, %v2063
      %2108 = vst.msk [vmem:[#allocation3 + $0x14] sm:$0xf] %vm2102, %v2065
      %2109 = vst.msk [vmem:[#allocation3 + $0x18] sm:$0xf] %vm2102, %v2067
      %2110 = vst.msk [vmem:[#allocation3 + $0x1c] sm:$0xf] %vm2102, %v2069
      %2111 = vst.msk [vmem:[#allocation3 + $0x20] sm:$0xf] %vm2102, %v2071
      %2112 = vst.msk [vmem:[#allocation3 + $0x24] sm:$0xf] %vm2102, %v2073
      %2113 = vst.msk [vmem:[#allocation3 + $0x28] sm:$0xf] %vm2102, %v2075
      %2114 = vst.msk [vmem:[#allocation3 + $0x2c] sm:$0xf] %vm2102, %v2077
      %2115 = vst.msk [vmem:[#allocation3 + $0x30] sm:$0xf] %vm2102, %v2079
      %2116 = vst.msk [vmem:[#allocation3 + $0x34] sm:$0xf] %vm2102, %v2081
      %2117 = vst.msk [vmem:[#allocation3 + $0x38] sm:$0xf] %vm2102, %v2083
      %2118 = vst.msk [vmem:[#allocation3 + $0x3c] sm:$0xf] %vm2102, %v2085
      %v2119 = vld [vmem:[%s1740] sm:$0xe]
      %v2120 = vld [vmem:[%s1740 + $0x4] sm:$0xf]
      %v2121 = vld [vmem:[%s1740 + $0x8] sm:$0x1]
      %v2122 = vld [vmem:[%s1740 + $0xc] sm:$0xe]
      %v2123 = vld [vmem:[%s1740 + $0x10] sm:$0xf]
      %v2124 = vld [vmem:[%s1740 + $0x14] sm:$0x1]
      %v2125 = vld [vmem:[%s1740 + $0x18] sm:$0xe]
      %v2126 = vld [vmem:[%s1740 + $0x1c] sm:$0xf]
      %v2127 = vld [vmem:[%s1740 + $0x20] sm:$0x1]
      %v2128 = vld [vmem:[%s1740 + $0x24] sm:$0xe]
      %v2129 = vld [vmem:[%s1740 + $0x28] sm:$0xf]
      %v2130 = vld [vmem:[%s1740 + $0x2c] sm:$0x1]
      %v2131 = vld [vmem:[%s1740 + $0x30] sm:$0xe]
      %v2132 = vld [vmem:[%s1740 + $0x34] sm:$0xf]
      %v2133 = vld [vmem:[%s1740 + $0x38] sm:$0x1]
      %v2134 = vld [vmem:[%s1740 + $0x3c] sm:$0xe]
      %v2135 = vld [vmem:[%s1740 + $0x40] sm:$0xf]
      %v2136 = vld [vmem:[%s1740 + $0x44] sm:$0x1]
      %v2137 = vld [vmem:[%s1740 + $0x48] sm:$0xe]
      %v2138 = vld [vmem:[%s1740 + $0x4c] sm:$0xf]
      %v2139 = vld [vmem:[%s1740 + $0x50] sm:$0x1]
      %v2140 = vld [vmem:[%s1740 + $0x54] sm:$0xe]
      %v2141 = vld [vmem:[%s1740 + $0x58] sm:$0xf]
      %v2142 = vld [vmem:[%s1740 + $0x5c] sm:$0x1]
      %v2167 = vrot.slane %v2119, 5
      %v2168 = vrot.slane %v2167, 4
      %v2169 = vrot.slane %v2120, 5
      %v2170 = vsel %vm1064, %v2168, %v2169
      %v2171 = vrot.slane %v2169, 4
      %v2172 = vrot.slane %v2121, 5
      %v2173 = vsel %vm1064, %v2171, %v2172
      %v2174 = vrot.slane %v2122, 5
      %v2175 = vrot.slane %v2174, 4
      %v2176 = vrot.slane %v2123, 5
      %v2177 = vsel %vm1064, %v2175, %v2176
      %v2178 = vrot.slane %v2176, 4
      %v2179 = vrot.slane %v2124, 5
      %v2180 = vsel %vm1064, %v2178, %v2179
      %v2181 = vrot.slane %v2125, 5
      %v2182 = vrot.slane %v2181, 4
      %v2183 = vrot.slane %v2126, 5
      %v2184 = vsel %vm1064, %v2182, %v2183
      %v2185 = vrot.slane %v2183, 4
      %v2186 = vrot.slane %v2127, 5
      %v2187 = vsel %vm1064, %v2185, %v2186
      %v2188 = vrot.slane %v2128, 5
      %v2189 = vrot.slane %v2188, 4
      %v2190 = vrot.slane %v2129, 5
      %v2191 = vsel %vm1064, %v2189, %v2190
      %v2192 = vrot.slane %v2190, 4
      %v2193 = vrot.slane %v2130, 5
      %v2194 = vsel %vm1064, %v2192, %v2193
      %v2195 = vrot.slane %v2131, 5
      %v2196 = vrot.slane %v2195, 4
      %v2197 = vrot.slane %v2132, 5
      %v2198 = vsel %vm1064, %v2196, %v2197
      %v2199 = vrot.slane %v2197, 4
      %v2200 = vrot.slane %v2133, 5
      %v2201 = vsel %vm1064, %v2199, %v2200
      %v2202 = vrot.slane %v2134, 5
      %v2203 = vrot.slane %v2202, 4
      %v2204 = vrot.slane %v2135, 5
      %v2205 = vsel %vm1064, %v2203, %v2204
      %v2206 = vrot.slane %v2204, 4
      %v2207 = vrot.slane %v2136, 5
      %v2208 = vsel %vm1064, %v2206, %v2207
      %v2209 = vrot.slane %v2137, 5
      %v2210 = vrot.slane %v2209, 4
      %v2211 = vrot.slane %v2138, 5
      %v2212 = vsel %vm1064, %v2210, %v2211
      %v2213 = vrot.slane %v2211, 4
      %v2214 = vrot.slane %v2139, 5
      %v2215 = vsel %vm1064, %v2213, %v2214
      %v2216 = vrot.slane %v2140, 5
      %v2217 = vrot.slane %v2216, 4
      %v2218 = vrot.slane %v2141, 5
      %v2219 = vsel %vm1064, %v2217, %v2218
      %v2220 = vrot.slane %v2218, 4
      %v2221 = vrot.slane %v2142, 5
      %v2222 = vsel %vm1064, %v2220, %v2221
      %2223 = vrot.lane.b32.xlu0 %v2170, 32
      %v2224 = vpop.permute.xlu0 %2223
      %2225 = vrot.lane.b32.xlu0 %v2173, 32
      %v2226 = vpop.permute.xlu0 %2225
      %2227 = vrot.lane.b32.xlu0 %v2177, 32
      %v2228 = vpop.permute.xlu0 %2227
      %2229 = vrot.lane.b32.xlu0 %v2180, 32
      %v2230 = vpop.permute.xlu0 %2229
      %2231 = vrot.lane.b32.xlu0 %v2184, 32
      %v2232 = vpop.permute.xlu0 %2231
      %2233 = vrot.lane.b32.xlu0 %v2187, 32
      %v2234 = vpop.permute.xlu0 %2233
      %2235 = vrot.lane.b32.xlu0 %v2191, 32
      %v2236 = vpop.permute.xlu0 %2235
      %2237 = vrot.lane.b32.xlu0 %v2194, 32
      %v2238 = vpop.permute.xlu0 %2237
      %2239 = vrot.lane.b32.xlu0 %v2198, 32
      %v2240 = vpop.permute.xlu0 %2239
      %2241 = vrot.lane.b32.xlu0 %v2201, 32
      %v2242 = vpop.permute.xlu0 %2241
      %2243 = vrot.lane.b32.xlu0 %v2205, 32
      %v2244 = vpop.permute.xlu0 %2243
      %2245 = vrot.lane.b32.xlu0 %v2208, 32
      %v2246 = vpop.permute.xlu0 %2245
      %2247 = vrot.lane.b32.xlu0 %v2212, 32
      %v2248 = vpop.permute.xlu0 %2247
      %2249 = vrot.lane.b32.xlu0 %v2215, 32
      %v2250 = vpop.permute.xlu0 %2249
      %2251 = vrot.lane.b32.xlu0 %v2219, 32
      %v2252 = vpop.permute.xlu0 %2251
      %2253 = vrot.lane.b32.xlu0 %v2222, 32
      %v2254 = vpop.permute.xlu0 %2253
      %vm2271 = vcmask 290048
      %2272 = vst.msk [vmem:[#allocation3] sm:$0xf] %vm2271, %v2224
      %2273 = vst.msk [vmem:[#allocation3 + $0x4] sm:$0xf] %vm2271, %v2226
      %2274 = vst.msk [vmem:[#allocation3 + $0x8] sm:$0xf] %vm2271, %v2228
      %2275 = vst.msk [vmem:[#allocation3 + $0xc] sm:$0xf] %vm2271, %v2230
      %2276 = vst.msk [vmem:[#allocation3 + $0x10] sm:$0xf] %vm2271, %v2232
      %2277 = vst.msk [vmem:[#allocation3 + $0x14] sm:$0xf] %vm2271, %v2234
      %2278 = vst.msk [vmem:[#allocation3 + $0x18] sm:$0xf] %vm2271, %v2236
      %2279 = vst.msk [vmem:[#allocation3 + $0x1c] sm:$0xf] %vm2271, %v2238
      %2280 = vst.msk [vmem:[#allocation3 + $0x20] sm:$0xf] %vm2271, %v2240
      %2281 = vst.msk [vmem:[#allocation3 + $0x24] sm:$0xf] %vm2271, %v2242
      %2282 = vst.msk [vmem:[#allocation3 + $0x28] sm:$0xf] %vm2271, %v2244
      %2283 = vst.msk [vmem:[#allocation3 + $0x2c] sm:$0xf] %vm2271, %v2246
      %2284 = vst.msk [vmem:[#allocation3 + $0x30] sm:$0xf] %vm2271, %v2248
      %2285 = vst.msk [vmem:[#allocation3 + $0x34] sm:$0xf] %vm2271, %v2250
      %2286 = vst.msk [vmem:[#allocation3 + $0x38] sm:$0xf] %vm2271, %v2252
      %2287 = vst.msk [vmem:[#allocation3 + $0x3c] sm:$0xf] %vm2271, %v2254
      %v2288 = vld [vmem:[#allocation3] sm:$0xf]
      %v2289 = vld [vmem:[#allocation3 + $0x4] sm:$0xf]
      %v2290 = vld [vmem:[#allocation3 + $0x8] sm:$0xf]
      %v2291 = vld [vmem:[#allocation3 + $0xc] sm:$0xf]
      %v2292 = vld [vmem:[#allocation3 + $0x10] sm:$0xf]
      %v2293 = vld [vmem:[#allocation3 + $0x14] sm:$0xf]
      %v2294 = vld [vmem:[#allocation3 + $0x18] sm:$0xf]
      %v2295 = vld [vmem:[#allocation3 + $0x1c] sm:$0xf]
      %v2296 = vld [vmem:[#allocation3 + $0x20] sm:$0xf]
      %v2297 = vld [vmem:[#allocation3 + $0x24] sm:$0xf]
      %v2298 = vld [vmem:[#allocation3 + $0x28] sm:$0xf]
      %v2299 = vld [vmem:[#allocation3 + $0x2c] sm:$0xf]
      %v2300 = vld [vmem:[#allocation3 + $0x30] sm:$0xf]
      %v2301 = vld [vmem:[#allocation3 + $0x34] sm:$0xf]
      %v2302 = vld [vmem:[#allocation3 + $0x38] sm:$0xf]
      %v2303 = vld [vmem:[#allocation3 + $0x3c] sm:$0xf]
      %v2304 = vld [vmem:[%s1] sm:$0xf]
      %v2305 = vld [vmem:[%s1 + $0x4] sm:$0xf]
      %v2306 = vld [vmem:[%s1 + $0x8] sm:$0xf]
      %v2307 = vld [vmem:[%s1 + $0xc] sm:$0xf]
      %v2308 = vld [vmem:[%s1 + $0x10] sm:$0x3]
      %v2325 = vunpack.c.l.b16 %v2288
      %v2326 = vunpack.c.l.b16 %v2289
      %v2327 = vunpack.c.l.b16 %v2290
      %v2328 = vunpack.c.l.b16 %v2291
      %v2329 = vunpack.c.l.b16 %v2292
      %v2330 = vunpack.c.l.b16 %v2293
      %v2331 = vunpack.c.l.b16 %v2294
      %v2332 = vunpack.c.l.b16 %v2295
      %v2333 = vunpack.c.l.b16 %v2296
      %v2334 = vunpack.c.l.b16 %v2297
      %v2335 = vunpack.c.l.b16 %v2298
      %v2336 = vunpack.c.l.b16 %v2299
      %v2337 = vunpack.c.l.b16 %v2300
      %v2338 = vunpack.c.l.b16 %v2301
      %v2339 = vunpack.c.l.b16 %v2302
      %v2340 = vunpack.c.l.b16 %v2303
      %v2341 = vpack.c.b16 %v2326, %v2325
      %v2342 = vpack.c.b16 %v2328, %v2327
      %v2343 = vpack.c.b16 %v2330, %v2329
      %v2344 = vpack.c.b16 %v2332, %v2331
      %v2345 = vpack.c.b16 %v2334, %v2333
      %v2346 = vpack.c.b16 %v2336, %v2335
      %v2347 = vpack.c.b16 %v2338, %v2337
      %v2348 = vpack.c.b16 %v2340, %v2339
      %v2354 = vunpack.c.l.b16 %v2304
      %v2355 = vunpack.c.l.b16 %v2305
      %v2356 = vunpack.c.l.b16 %v2306
      %v2357 = vunpack.c.l.b16 %v2307
      %v2358 = vunpack.c.l.b16 %v2308
      %v2359 = vpack.c.b16 %v2355, %v2354
      %v2360 = vpack.c.b16 %v2357, %v2356
      %v2361 = vpack.c.b16 %v2358, %v2358
      %vm2364 = vcmask 293888
      %v2366 = vsel %vm2364, %v2341, 0
      %v2369 = vsel %vm2364, %v2342, 0
      %v2372 = vsel %vm2364, %v2343, 0
      %v2375 = vsel %vm2364, %v2344, 0
      %v2378 = vsel %vm2364, %v2345, 0
      %v2381 = vsel %vm2364, %v2346, 0
      %v2384 = vsel %vm2364, %v2347, 0
      %v2387 = vsel %vm2364, %v2348, 0
      %vm2389 = vcmask 1041408
      %v2391 = vsel %vm2389, %v2361, 0
      %2393 = vmatpush.bf16.msra.mxu0 0
      %2394 = vmatpush.bf16.msra.mxu0 0
      %2395 = vmatpush.bf16.msra.mxu0 0
      %2396 = vmatpush.bf16.msra.mxu0 0
      %2397 = vmatpush.bf16.msra.mxu0 0
      %2398 = vmatpush.bf16.msra.mxu0 %v2391
      %2399 = vmatpush.bf16.msra.mxu0 %v2360
      %2400 = vmatpush.bf16.msra.mxu0 %v2359
      %2401 = vmatmul.bf16.gmra.mxu0 %v2366
      %v2402 = vpop.f32.mrf.mxu0
      %v2403 = vadd.f32 0.0, %v2402
      %v2404 = vpop.f32.mrf.mxu0
      %v2405 = vadd.f32 0.0, %v2404
      %2406 = vmatmul.bf16.gmra.mxu0 %v2369
      %v2407 = vpop.f32.mrf.mxu0
      %v2408 = vadd.f32 0.0, %v2407
      %v2409 = vpop.f32.mrf.mxu0
      %v2410 = vadd.f32 0.0, %v2409
      %2411 = vmatmul.bf16.gmra.mxu0 %v2372
      %v2412 = vpop.f32.mrf.mxu0
      %v2413 = vadd.f32 0.0, %v2412
      %v2414 = vpop.f32.mrf.mxu0
      %v2415 = vadd.f32 0.0, %v2414
      %2416 = vmatmul.bf16.gmra.mxu0 %v2375
      %v2417 = vpop.f32.mrf.mxu0
      %v2418 = vadd.f32 0.0, %v2417
      %v2419 = vpop.f32.mrf.mxu0
      %v2420 = vadd.f32 0.0, %v2419
      %2421 = vmatmul.bf16.gmra.mxu0 %v2378
      %v2422 = vpop.f32.mrf.mxu0
      %v2423 = vadd.f32 0.0, %v2422
      %v2424 = vpop.f32.mrf.mxu0
      %v2425 = vadd.f32 0.0, %v2424
      %2426 = vmatmul.bf16.gmra.mxu0 %v2381
      %v2427 = vpop.f32.mrf.mxu0
      %v2428 = vadd.f32 0.0, %v2427
      %v2429 = vpop.f32.mrf.mxu0
      %v2430 = vadd.f32 0.0, %v2429
      %2431 = vmatmul.bf16.gmra.mxu0 %v2384
      %v2432 = vpop.f32.mrf.mxu0
      %v2433 = vadd.f32 0.0, %v2432
      %v2434 = vpop.f32.mrf.mxu0
      %v2435 = vadd.f32 0.0, %v2434
      %2436 = vmatmul.bf16.gmra.mxu0 %v2387
      %v2437 = vpop.f32.mrf.mxu0
      %v2438 = vadd.f32 0.0, %v2437
      %v2439 = vpop.f32.mrf.mxu0
      %v2440 = vadd.f32 0.0, %v2439
      %2441 = vdwg.mxu0
      // Predicated region
      $region37: #{simclr_forward.3} parent=27 // pred_check
        %p2442 = pneg %p149
      $region38: #{simclr_forward.3} parent=27 // pred_check_branch
        %2444 = sbr.rel (%p2442) target = $region40
      $region39: #{simclr_forward.3} parent=27 // pred_region
        %v2445 = vld [vmem:[#allocation4] sm:$0x1]
        %v2446 = vadd.f32 %v2403, %v2405
        %v2447 = vadd.f32 %v2446, %v2408
        %v2448 = vadd.f32 %v2447, %v2410
        %v2449 = vadd.f32 %v2448, %v2413
        %v2450 = vadd.f32 %v2449, %v2415
        %v2451 = vadd.f32 %v2450, %v2418
        %v2452 = vadd.f32 %v2451, %v2420
        %v2453 = vadd.f32 %v2452, %v2423
        %v2454 = vadd.f32 %v2453, %v2425
        %v2455 = vadd.f32 %v2454, %v2428
        %v2456 = vadd.f32 %v2455, %v2430
        %v2457 = vadd.f32 %v2456, %v2433
        %v2458 = vadd.f32 %v2457, %v2435
        %v2459 = vadd.f32 %v2458, %v2438
        %v2460 = vadd.f32 %v2459, %v2440
        %v2461 = vrot.slane %v2460, 4
        %v2462 = vadd.f32 %v2460, %v2461
        %v2463 = vrot.slane %v2462, 2
        %v2464 = vadd.f32 %v2462, %v2463
        %v2465 = vrot.slane %v2464, 1
        %v2466 = vadd.f32 %v2464, %v2465
        %v2467 = vadd.f32 %v2445, %v2466
        %2468 = vst [vmem:[#allocation4] sm:$0x1] %v2467
        %v2469 = vld [vmem:[#allocation5] sm:$0x1]
        %v2470 = vmul.f32 %v2403, %v2403
        %v2471 = vmul.f32 %v2405, %v2405
        %v2472 = vmul.f32 %v2408, %v2408
        %v2473 = vmul.f32 %v2410, %v2410
        %v2474 = vmul.f32 %v2413, %v2413
        %v2475 = vmul.f32 %v2415, %v2415
        %v2476 = vmul.f32 %v2418, %v2418
        %v2477 = vmul.f32 %v2420, %v2420
        %v2478 = vmul.f32 %v2423, %v2423
        %v2479 = vmul.f32 %v2425, %v2425
        %v2480 = vmul.f32 %v2428, %v2428
        %v2481 = vmul.f32 %v2430, %v2430
        %v2482 = vmul.f32 %v2433, %v2433
        %v2483 = vmul.f32 %v2435, %v2435
        %v2484 = vmul.f32 %v2438, %v2438
        %v2485 = vmul.f32 %v2440, %v2440
        %v2486 = vadd.f32 %v2470, %v2471
        %v2487 = vadd.f32 %v2486, %v2472
        %v2488 = vadd.f32 %v2487, %v2473
        %v2489 = vadd.f32 %v2488, %v2474
        %v2490 = vadd.f32 %v2489, %v2475
        %v2491 = vadd.f32 %v2490, %v2476
        %v2492 = vadd.f32 %v2491, %v2477
        %v2493 = vadd.f32 %v2492, %v2478
        %v2494 = vadd.f32 %v2493, %v2479
        %v2495 = vadd.f32 %v2494, %v2480
        %v2496 = vadd.f32 %v2495, %v2481
        %v2497 = vadd.f32 %v2496, %v2482
        %v2498 = vadd.f32 %v2497, %v2483
        %v2499 = vadd.f32 %v2498, %v2484
        %v2500 = vadd.f32 %v2499, %v2485
        %v2501 = vrot.slane %v2500, 4
        %v2502 = vadd.f32 %v2500, %v2501
        %v2503 = vrot.slane %v2502, 2
        %v2504 = vadd.f32 %v2502, %v2503
        %v2505 = vrot.slane %v2504, 1
        %v2506 = vadd.f32 %v2504, %v2505
        %v2507 = vadd.f32 %v2469, %v2506
        %2508 = vst [vmem:[#allocation5] sm:$0x1] %v2507
      $region40: #{simclr_forward.3} parent=27 // pred_fallthru
        _
      %p2509 = scmp.eq.s32.totalorder %s18, 1
      // Predicated region
      $region41: #{simclr_forward.3} parent=27 // pred_check
        %p2510 = pneg %p2509
      $region42: #{simclr_forward.3} parent=27 // pred_check_branch
        %2512 = sbr.rel (%p2510) target = $region44
      $region43: #{simclr_forward.3} parent=27 // pred_region
        %v2513 = vld [vmem:[#allocation4] sm:$0x1]
        %v2514 = vmul.f32 %v2513, 0.001953125
        %v2515 = vld [vmem:[#allocation5] sm:$0x1]
        %v2516 = vmul.f32 %v2515, 0.001953125
        %v2517 = vmul.f32 %v2514, %v2514
        %v2518 = vsub.f32 %v2516, %v2517
        %v2519 = vmax.f32 %v2518, 0.0
        %v2521 = vperm.slane %v2514, 0
        %v2523 = vsub.f32 %v2403, %v2521
        %v2524 = vsub.f32 %v2405, %v2521
        %v2525 = vsub.f32 %v2408, %v2521
        %v2526 = vsub.f32 %v2410, %v2521
        %v2527 = vsub.f32 %v2413, %v2521
        %v2528 = vsub.f32 %v2415, %v2521
        %v2529 = vsub.f32 %v2418, %v2521
        %v2530 = vsub.f32 %v2420, %v2521
        %v2531 = vsub.f32 %v2423, %v2521
        %v2532 = vsub.f32 %v2425, %v2521
        %v2533 = vsub.f32 %v2428, %v2521
        %v2534 = vsub.f32 %v2430, %v2521
        %v2535 = vsub.f32 %v2433, %v2521
        %v2536 = vsub.f32 %v2435, %v2521
        %v2537 = vsub.f32 %v2438, %v2521
        %v2538 = vsub.f32 %v2440, %v2521
        %v2539 = vadd.f32 %v2519, 1e-05
        %v2540 = vrsqrt.pop %v2539
        %v2541 = vmul.f32 %v2540, %v2539
        %v2542 = vmul.f32 %v2541, %v2540
        %v2543 = vmul.f32 0.5, %v2542
        %v2544 = vsub.f32 1.5, %v2543
        %v2545 = vmul.f32 %v2540, %v2544
        %vm2546 = vweird.f32 %v2539
        %vm2547 = vweird.f32 %v2540
        %vm2548 = vmor %vm2546, %vm2547
        %v2549 = vsel %vm2548, %v2540, %v2545
        %v2551 = vperm.slane %v2549, 0
        %v2553 = vmul.f32 %v2523, %v2551
        %v2554 = vmul.f32 %v2524, %v2551
        %v2555 = vmul.f32 %v2525, %v2551
        %v2556 = vmul.f32 %v2526, %v2551
        %v2557 = vmul.f32 %v2527, %v2551
        %v2558 = vmul.f32 %v2528, %v2551
        %v2559 = vmul.f32 %v2529, %v2551
        %v2560 = vmul.f32 %v2530, %v2551
        %v2561 = vmul.f32 %v2531, %v2551
        %v2562 = vmul.f32 %v2532, %v2551
        %v2563 = vmul.f32 %v2533, %v2551
        %v2564 = vmul.f32 %v2534, %v2551
        %v2565 = vmul.f32 %v2535, %v2551
        %v2566 = vmul.f32 %v2536, %v2551
        %v2567 = vmul.f32 %v2537, %v2551
        %v2568 = vmul.f32 %v2538, %v2551
        %v2569 = vmax.f32 %v2553, 0.0
        %v2570 = vmax.f32 %v2554, 0.0
        %v2571 = vmax.f32 %v2555, 0.0
        %v2572 = vmax.f32 %v2556, 0.0
        %v2573 = vmax.f32 %v2557, 0.0
        %v2574 = vmax.f32 %v2558, 0.0
        %v2575 = vmax.f32 %v2559, 0.0
        %v2576 = vmax.f32 %v2560, 0.0
        %v2577 = vmax.f32 %v2561, 0.0
        %v2578 = vmax.f32 %v2562, 0.0
        %v2579 = vmax.f32 %v2563, 0.0
        %v2580 = vmax.f32 %v2564, 0.0
        %v2581 = vmax.f32 %v2565, 0.0
        %v2582 = vmax.f32 %v2566, 0.0
        %v2583 = vmax.f32 %v2567, 0.0
        %v2584 = vmax.f32 %v2568, 0.0
        %v2585 = vadd.f32 %v2569, %v2570
        %v2586 = vadd.f32 %v2585, %v2571
        %v2587 = vadd.f32 %v2586, %v2572
        %v2588 = vadd.f32 %v2587, %v2573
        %v2589 = vadd.f32 %v2588, %v2574
        %v2590 = vadd.f32 %v2589, %v2575
        %v2591 = vadd.f32 %v2590, %v2576
        %v2592 = vadd.f32 %v2591, %v2577
        %v2593 = vadd.f32 %v2592, %v2578
        %v2594 = vadd.f32 %v2593, %v2579
        %v2595 = vadd.f32 %v2594, %v2580
        %v2596 = vadd.f32 %v2595, %v2581
        %v2597 = vadd.f32 %v2596, %v2582
        %v2598 = vadd.f32 %v2597, %v2583
        %v2599 = vadd.f32 %v2598, %v2584
        %v2600 = vrot.slane %v2599, 4
        %v2601 = vadd.f32 %v2599, %v2600
        %v2602 = vrot.slane %v2601, 2
        %v2603 = vadd.f32 %v2601, %v2602
        %v2604 = vrot.slane %v2603, 1
        %v2605 = vadd.f32 %v2603, %v2604
        %v2606 = vmul.f32 %v2605, 0.00390625
        // Predicated region
        $region45: #{simclr_forward.3} parent=43 // pred_check
          %p2607 = pneg %p153
        $region46: #{simclr_forward.3} parent=43 // pred_check_branch
          %2609 = sbr.rel (%p2607) target = $region48
        $region47: #{simclr_forward.3} parent=43 // pred_region
          %s2610 = scalar_lea.vmem %s2, %s19
          %2611 = vst [vmem:[%s2610] sm:$0x1] %v2606
        $region48: #{simclr_forward.3} parent=43 // pred_fallthru
          _
        %p2612 = scmp.ne.s32.totalorder %s20, 0
        // Predicated region
        $region49: #{simclr_forward.3} parent=43 // pred_check
          %p2613 = pneg %p2612
        $region50: #{simclr_forward.3} parent=43 // pred_check_branch
          %2615 = sbr.rel (%p2613) target = $region52
        $region51: #{simclr_forward.3} parent=43 // pred_region
          %s2616 = scalar_lea.vmem %s2, %s19
          %v2617 = vld [vmem:[%s2616] sm:$0x1]
          %v2618 = vadd.f32 %v2617, %v2606
          %2619 = vst [vmem:[%s2616] sm:$0x1] %v2618
        $region52: #{simclr_forward.3} parent=43 // pred_fallthru
          _
      $region44: #{simclr_forward.3} parent=27 // pred_fallthru
        _
      // Predicated region
      $region53: #{simclr_forward.3} parent=27 // pred_check
        %p2620 = pneg %p92
      $region54: #{simclr_forward.3} parent=27 // pred_check_branch
        %2622 = sbr.rel (%p2620) target = $region56
      $region55: #{simclr_forward.3} parent=27 // pred_region
        _
      $region56: #{simclr_forward.3} parent=27 // pred_fallthru
        _
      // Predicated region
      $region57: #{simclr_forward.3} parent=27 // pred_check
        %p2623 = pneg %p92
      $region58: #{simclr_forward.3} parent=27 // pred_check_branch
        %2625 = sbr.rel (%p2623) target = $region60
      $region59: #{simclr_forward.3} parent=27 // pred_region
        _
      $region60: #{simclr_forward.3} parent=27 // pred_fallthru
        _
    $region28: #{simclr_forward.3} parent=5 // pred_fallthru
      _
    %p2626 = scmp.le.s32.totalorder 2, %s8
    // Predicated region
    $region61: #{simclr_forward.3} parent=5 // pred_check
      %p2627 = pneg %p2626
    $region62: #{simclr_forward.3} parent=5 // pred_check_branch
      %2629 = sbr.rel (%p2627) target = $region64
    $region63: #{simclr_forward.3} parent=5 // pred_region
      %s2630 = ssub.s32 %s8, 2
    $region64: #{simclr_forward.3} parent=5 // pred_fallthru
      _
  $region6: #{simclr_forward.3} parent=0 // loop_footer
    %s12 = sadd.s32 1, %s8
  $region7: #{simclr_forward.3} parent=0 // loop_footer_branch
    %7 = sbr.rel target = $region3
  $region8: #{simclr_forward.3} parent=0 // loop_exit
    _

</llo_original>
